<compile_context>
chip_gen: v7x
topology: tpu7x:2x2x1
jax: 0.10.0
libtpu: 0.0.40
codegen_flags: <defaults>
</compile_context>

<pallas_src>
import functools
import math

import jax
import jax.numpy as jnp
from jax import lax
from jax.experimental import pallas as pl
from jax.experimental.pallas import tpu as pltpu

EPS = 1e-5  # nn.BatchNorm2d default


def _round_up(x, m):
    return (x + m - 1) // m * m


# ---------------------------------------------------------------------------
# Kernels
# ---------------------------------------------------------------------------
def _store_y_and_stats(y_f32, y_ref, stats_ref, row_mask=None):
    """Store the conv tile in bf16 and per-tile per-channel [sum; sum_sq]."""
    y_ref[...] = y_f32.astype(y_ref.dtype)
    if row_mask is not None:  # keep padded output rows out of the batch stats
        y_f32 = jnp.where(row_mask, y_f32, 0.0)
    s1 = jnp.sum(y_f32, axis=0, keepdims=True)           # (1, Coutp)
    s2 = jnp.sum(y_f32 * y_f32, axis=0, keepdims=True)   # (1, Coutp)
    stats_ref[...] = jnp.concatenate([s1, s2], axis=0)[None]   # (1, 2, Coutp)


def _fused_conv_stats_kernel(xwin_ref, w_ref, y_ref, stats_ref, acc_ref, *,
                             kh, kw, tr, wo, ho, tiles_h, need_mask):
    """Fused im2col + conv for one tile of `tr` output rows (stride 1).

    xwin_ref: (1, tr+kh-1, Wp, Cin) bf16 halo window of the padded NHWC input.
    w_ref:    (KH*KW, Cin, Coutp)   bf16 per-tap weight matrices.
    y_ref:    (tr*wo, Coutp)        bf16 raw conv tile.
    stats_ref:(1, 2, Coutp)         f32  per-tile [sum; sum_sq].
    acc_ref:  (tr*wo, Coutp)        f32  VMEM accumulator.
    The KH*KW shifted matmuls build the im2col product on-chip instead of
    materializing a KH*KW-times larger patch matrix in HBM.
    """
    trw = tr * wo
    xw = xwin_ref[0]                                    # (hr, Wp, Cin) bf16
    for di in range(kh):
        for dj in range(kw):
            lhs = xw[di:di + tr, dj:dj + wo, :].reshape(trw, xw.shape[-1])
            part = jnp.dot(lhs, w_ref[di * kw + dj],
                           preferred_element_type=jnp.float32)
            if di == 0 and dj == 0:
                acc_ref[...] = part
            else:
                acc_ref[...] += part

    y = acc_ref[...]
    row_mask = None
    if need_mask:
        # Last row-tile of each image is partially padded; those rows' conv
        # output is not zero in general, so mask them out of the statistics.
        t = lax.rem(pl.program_id(0), tiles_h)
        valid = jnp.minimum(tr, ho - t * tr) * wo
        rows = lax.broadcasted_iota(jnp.int32, (trw, 1), 0)
        row_mask = rows < valid
    _store_y_and_stats(y, y_ref, stats_ref, row_mask)


def _im2col_conv_stats_kernel(p_ref, w_ref, y_ref, stats_ref):
    """Fallback (stride != 1, only the 7x7/s2 stem): patch tile @ weight."""
    y = jnp.dot(p_ref[...], w_ref[...], preferred_element_type=jnp.float32)
    _store_y_and_stats(y, y_ref, stats_ref)


def _bn_relu_kernel(y_ref, scale_ref, shift_ref, o_ref):
    """Fused BatchNorm affine (precomputed f32 scale/shift) + ReLU; bf16 I/O."""
    y = y_ref[...].astype(jnp.float32)
    o_ref[...] = jnp.maximum(y * scale_ref[...] + shift_ref[...], 0.0
                             ).astype(o_ref.dtype)


# ---------------------------------------------------------------------------
# Pass-1 drivers
# ---------------------------------------------------------------------------
def _conv_stats_fused(x_bf16, w_taps, cout_p, kh, kw, ph, pw, tm):
    """Stride-1 conv: halo-windowed row tiles + fused in-kernel im2col."""
    n, h, w, cin = x_bf16.shape
    ho = h + 2 * ph - kh + 1
    wo = w + 2 * pw - kw + 1
    wp = w + 2 * pw

    # Output-row tile: keep tr*wo a multiple of 16 (bf16 sublane packing);
    # target ~tm rows per grid step (feedback: >=128/256-row M tiles).
    tr_unit = 16 // math.gcd(wo, 16)
    tr = max(tr_unit, tr_unit * (tm // (tr_unit * wo)))
    tr = min(tr, _round_up(ho, tr_unit))
    tiles_h = -(-ho // tr)
    hr = tr + kh - 1                       # halo window height
    hp = tiles_h * tr + kh - 1             # padded height incl. tile rounding

    xp = jnp.pad(x_bf16, ((0, 0), (ph, hp - h - ph), (pw, pw), (0, 0)))
    # Per-tile halo windows: ~(tr+kh-1)/tr input amplification (vs 9x/25x for
    # a full im2col patch matrix).
    # TODO(synk): manual halo DMA (pl.ANY + make_async_copy) would make it 1.0x.
    wins = jnp.stack([lax.slice_in_dim(xp, t * tr, t * tr + hr, axis=1)
                      for t in range(tiles_h)], axis=1)
    wins = wins.reshape(n * tiles_h, hr, wp, cin)

    steps = n * tiles_h
    trw = tr * wo
    m_pad = steps * trw

    kernel = functools.partial(
        _fused_conv_stats_kernel, kh=kh, kw=kw, tr=tr, wo=wo, ho=ho,
        tiles_h=tiles_h, need_mask=(ho % tr != 0))

    y_flat, partial = pl.pallas_call(
        kernel,
        out_shape=(jax.ShapeDtypeStruct((m_pad, cout_p), jnp.bfloat16),
                   jax.ShapeDtypeStruct((steps, 2, cout_p), jnp.float32)),
        grid=(steps,),
        in_specs=[
            pl.BlockSpec((1, hr, wp, cin), lambda i: (i, 0, 0, 0)),
            pl.BlockSpec((kh * kw, cin, cout_p), lambda i: (0, 0, 0)),
        ],
        out_specs=(
            pl.BlockSpec((trw, cout_p), lambda i: (i, 0)),
            pl.BlockSpec((1, 2, cout_p), lambda i: (i, 0, 0)),
        ),
        scratch_shapes=[pltpu.VMEM((trw, cout_p), jnp.float32)],
        # Every step writes disjoint blocks -> megacore-shardable.
        # TODO(synk): on v7x verify the 2-TC split; use CORE_PARALLEL /
        # pl.core_map if plain "parallel" does not shard across the cores.
        compiler_params=pltpu.CompilerParams(dimension_semantics=("parallel",)),
    )(wins, w_taps)

    def unflatten(out_flat, cout):
        out = out_flat.reshape(n, tiles_h * tr, wo, cout_p)
        return out[:, :ho, :, :cout]

    return y_flat, partial, trw, n * ho * wo, unflatten


def _conv_stats_im2col(x_bf16, w_mat, cout_p, kh, kw, sh, sw, ph, pw, tm):
    """Generic-stride fallback: im2col patch matrix (only the 7x7/s2 stem)."""
    n, h, w, cin = x_bf16.shape
    xp = jnp.pad(x_bf16, ((0, 0), (ph, ph), (pw, pw), (0, 0)))
    ho = (h + 2 * ph - kh) // sh + 1
    wo = (w + 2 * pw - kw) // sw + 1
    taps = [xp[:, i:i + sh * ho:sh, j:j + sw * wo:sw, :]
            for i in range(kh) for j in range(kw)]
    patches = jnp.stack(taps, axis=3).reshape(n * ho * wo, kh * kw * cin)

    m_real, k_real = patches.shape
    kp = _round_up(k_real, 128)
    tm_eff = min(_round_up(tm, 256), _round_up(m_real, 256))
    m_pad = _round_up(m_real, tm_eff)
    steps = m_pad // tm_eff

    patches = jnp.pad(patches, ((0, m_pad - m_real), (0, kp - k_real)))
    w_mat = jnp.pad(w_mat, ((0, kp - k_real), (0, 0)))

    y_flat, partial = pl.pallas_call(
        _im2col_conv_stats_kernel,
        out_shape=(jax.ShapeDtypeStruct((m_pad, cout_p), jnp.bfloat16),
                   jax.ShapeDtypeStruct((steps, 2, cout_p), jnp.float32)),
        grid=(steps,),
        in_specs=[
            pl.BlockSpec((tm_eff, kp), lambda i: (i, 0)),
            pl.BlockSpec((kp, cout_p), lambda i: (0, 0)),
        ],
        out_specs=(
            pl.BlockSpec((tm_eff, cout_p), lambda i: (i, 0)),
            pl.BlockSpec((1, 2, cout_p), lambda i: (i, 0, 0)),
        ),
        compiler_params=pltpu.CompilerParams(dimension_semantics=("parallel",)),
    )(patches, w_mat)

    def unflatten(out_flat, cout):
        return out_flat[:m_real, :cout].reshape(n, ho, wo, cout)

    return y_flat, partial, tm_eff, m_real, unflatten


# ---------------------------------------------------------------------------
# Conv_block wrappers
# ---------------------------------------------------------------------------
def conv_block_nhwc(x_nhwc, weight, gamma, beta, *, stride=1, padding=0, tm=1024):
    """Conv2d -> BatchNorm2d (training-mode batch stats) -> ReLU, NHWC native.

    x_nhwc: (N, H, W, Cin); weight: (Cout, Cin, KH, KW) (PyTorch OIHW);
    gamma/beta: (Cout,).  Returns (N, Ho, Wo, Cout) in bfloat16 so blocks
    chain NHWC/bf16 -> NHWC/bf16 with no per-block transposes or dtype bounce.

    The conv bias is exactly cancelled by the training-mode BN mean
    subtraction, so it is not a parameter here.  (Eval-mode BN with running
    stats would instead need the bias folded into `shift`.)

    tm ~ target M-tile rows.  v5e: keep <=1024 under the 16 MiB default scoped
    VMEM; v6e/v7x: sweep up to 2048 (raise vmem_limit_bytes if enlarging the
    weight block too; v7x has only 64 MiB physical VMEM per TensorCore).
    """
    cout, cin, kh, kw = weight.shape
    sh, sw = (stride, stride) if isinstance(stride, int) else tuple(stride)
    ph, pw = (padding, padding) if isinstance(padding, int) else tuple(padding)

    x_bf16 = x_nhwc.astype(jnp.bfloat16)
    cout_p = _round_up(cout, 128)   # lane-dense MXU output, unmasked stores

    # OIHW -> (KH*KW, Cin, Coutp): per-tap matrices, tap-major / channel-minor.
    w_taps = jnp.transpose(weight, (2, 3, 1, 0)).reshape(kh * kw, cin, cout)
    w_taps = jnp.pad(w_taps, ((0, 0), (0, 0), (0, cout_p - cout))
                     ).astype(jnp.bfloat16)

    if sh == 1 and sw == 1:
        y_flat, partial, tile_rows, m_valid, unflatten = _conv_stats_fused(
            x_bf16, w_taps, cout_p, kh, kw, ph, pw, tm)
    else:
        y_flat, partial, tile_rows, m_valid, unflatten = _conv_stats_im2col(
            x_bf16, w_taps.reshape(kh * kw * cin, cout_p), cout_p,
            kh, kw, sh, sw, ph, pw, tm)

    # Tiny cross-tile reduction (KBs) + fused BN scale/shift, all in f32.
    # TODO(synk): if BN-stat drift matters at batch*H*W ~ 1e6, do this final
    # reduction in f64 or with a shifted two-pass variance.
    tot = jnp.sum(partial[:, 0, :], axis=0)
    tot_sq = jnp.sum(partial[:, 1, :], axis=0)
    mean = tot / float(m_valid)
    var = jnp.maximum(tot_sq / float(m_valid) - mean * mean, 0.0)  # biased (train)
    gamma_p = jnp.pad(gamma.astype(jnp.float32), (0, cout_p - cout))
    beta_p = jnp.pad(beta.astype(jnp.float32), (0, cout_p - cout))
    scale = gamma_p * lax.rsqrt(var + EPS)
    shift = beta_p - mean * scale

    # Pass 2: normalize + ReLU, bf16 in / bf16 out, aliased over the pass-1
    # buffer (no second m_pad x coutp HBM allocation).
    m_pad = y_flat.shape[0]
    out_flat = pl.pallas_call(
        _bn_relu_kernel,
        out_shape=jax.ShapeDtypeStruct((m_pad, cout_p), jnp.bfloat16),
        grid=(m_pad // tile_rows,),
        in_specs=[
            pl.BlockSpec((tile_rows, cout_p), lambda i: (i, 0)),
            pl.BlockSpec((1, cout_p), lambda i: (0, 0)),
            pl.BlockSpec((1, cout_p), lambda i: (0, 0)),
        ],
        out_specs=pl.BlockSpec((tile_rows, cout_p), lambda i: (i, 0)),
        input_output_aliases={0: 0},
        compiler_params=pltpu.CompilerParams(dimension_semantics=("parallel",)),
    )(y_flat, scale.reshape(1, cout_p), shift.reshape(1, cout_p))

    return unflatten(out_flat, cout)


def conv_block_nchw(x, weight, bias, gamma, beta, *, stride=1, padding=0, tm=1024):
    """PyTorch-parity wrapper (NCHW f32 in/out) for testing.  In a full
    InceptionNet the blocks should be chained via conv_block_nhwc to avoid the
    per-block boundary transposes."""
    del bias  # cancelled by training-mode BN mean subtraction (see above)
    x_nhwc = jnp.transpose(x.astype(jnp.bfloat16), (0, 2, 3, 1))  # cast first
    out = conv_block_nhwc(x_nhwc, weight, gamma, beta,
                          stride=stride, padding=padding, tm=tm)
    return jnp.transpose(out, (0, 3, 1, 2)).astype(jnp.float32)


# ---------------------------------------------------------------------------
# Pure-JAX reference (mirrors PyTorch Conv2d + BatchNorm2d(train) + ReLU)
# ---------------------------------------------------------------------------
def conv_block_ref(x, weight, bias, gamma, beta, *, stride=1, padding=0,
                   compute_dtype=jnp.float32):
    ph, pw = (padding, padding) if isinstance(padding, int) else tuple(padding)
    sh, sw = (stride, stride) if isinstance(stride, int) else tuple(stride)
    y = lax.conv_general_dilated(
        x.astype(compute_dtype), weight.astype(compute_dtype),
        window_strides=(sh, sw), padding=[(ph, ph), (pw, pw)],
        dimension_numbers=("NCHW", "OIHW", "NCHW"),
        preferred_element_type=jnp.float32)
    y = y + bias.reshape(1, -1, 1, 1).astype(jnp.float32)
    mean = jnp.mean(y, axis=(0, 2, 3), keepdims=True)
    var = jnp.mean((y - mean) ** 2, axis=(0, 2, 3), keepdims=True)
    y = (y - mean) * lax.rsqrt(var + EPS)
    y = y * gamma.reshape(1, -1, 1, 1) + beta.reshape(1, -1, 1, 1)
    return jnp.maximum(y, 0.0)


# ---------------------------------------------------------------------------
# Test
# ---------------------------------------------------------------------------
if __name__ == "__main__":
    key = jax.random.PRNGKey(0)
    # (cin, cout, kh, kw, stride, padding, hw, tm): the Conv_block flavors used
    # throughout InceptionNet (3x3 branch conv, 1x1 reduce conv, 7x7/s2 stem).
    configs = [
        (4, 8, 3, 3, 1, 1, 16, 512),     # fused path
        (4, 16, 1, 1, 1, 0, 16, 512),    # fused path, 1x1
        (3, 8, 7, 7, 2, 3, 16, 256),     # strided stem -> im2col fallback
    ]
    for cin, cout, kh, kw, stride, padding, hw, tm in configs:
        key, kx, kwt, kb, kg, kbe = jax.random.split(key, 6)
        x = jax.random.normal(kx, (2, cin, hw, hw), dtype=jnp.float32)
        weight = 0.1 * jax.random.normal(kwt, (cout, cin, kh, kw), dtype=jnp.float32)
        bias = 0.1 * jax.random.normal(kb, (cout,), dtype=jnp.float32)
        gamma = 1.0 + 0.1 * jax.random.normal(kg, (cout,), dtype=jnp.float32)
        beta = 0.1 * jax.random.normal(kbe, (cout,), dtype=jnp.float32)

        out = conv_block_nchw(x, weight, bias, gamma, beta,
                              stride=stride, padding=padding, tm=tm)
        out = jax.block_until_ready(out)

        h_out = (hw + 2 * padding - kh) // stride + 1
        assert out.shape == (2, cout, h_out, h_out), out.shape

        # Output/intermediate are bf16 now, so tolerances are bf16-scaled:
        # check against a bf16-conv reference and (looser) the full-f32 one.
        ref_bf16 = conv_block_ref(x, weight, bias, gamma, beta, stride=stride,
                                  padding=padding, compute_dtype=jnp.bfloat16)
        assert float(jnp.max(jnp.abs(out - ref_bf16))) < 5e-2

        ref_f32 = conv_block_ref(x, weight, bias, gamma, beta, stride=stride,
                                 padding=padding, compute_dtype=jnp.float32)
        assert float(jnp.max(jnp.abs(out - ref_f32))) < 8e-2
        assert float(jnp.mean(jnp.abs(out - ref_f32))) < 1e-2

    print("KERNEL_OK")
</pallas_src>

<mosaic_0001>
module attributes {stable_mosaic.version = 11 : i64} {
  func.func @_fused_conv_stats_kernel(%arg0: i32, %arg1: memref<1x18x18x4xbf16, #tpu.memory_space<vmem>>, %arg2: memref<9x4x128xbf16, #tpu.memory_space<vmem>>, %arg3: memref<256x128xbf16, #tpu.memory_space<vmem>>, %arg4: memref<1x2x128xf32, #tpu.memory_space<vmem>>, %arg5: memref<256x128xf32, #tpu.memory_space<vmem>>) attributes {dimension_semantics = [#tpu.dimension_semantics<parallel>], iteration_bounds = array<i64: 2>, scalar_prefetch = 0 : i64, scratch_operands = 1 : i64, tpu.core_type = #tpu.core_type<tc>, window_params = [{transform_indices = @transform_0, window_bounds = array<i64: 1, 18, 18, 4>}, {pipeline_mode = #tpu.pipeline_mode<synchronous>, transform_indices = @transform_1, window_bounds = array<i64: 9, 4, 128>}, {transform_indices = @transform_2, window_bounds = array<i64: 256, 128>}, {transform_indices = @transform_3, window_bounds = array<i64: 1, 2, 128>}]} {
    %c0 = arith.constant 0 : index
    %c0_0 = arith.constant 0 : index
    %c0_1 = arith.constant 0 : index
    %c0_2 = arith.constant 0 : index
    %0 = vector.load %arg1[%c0, %c0_0, %c0_1, %c0_2] : memref<1x18x18x4xbf16, #tpu.memory_space<vmem>>, vector<1x18x18x4xbf16>
    %1 = vector.shape_cast %0 : vector<1x18x18x4xbf16> to vector<18x18x4xbf16>
    %2 = vector.extract_strided_slice %1 {offsets = [0, 0, 0], sizes = [16, 16, 4], strides = [1, 1, 1]} : vector<18x18x4xbf16> to vector<16x16x4xbf16>
    %3 = vector.shape_cast %2 : vector<16x16x4xbf16> to vector<256x4xbf16>
    %c0_3 = arith.constant 0 : index
    %c0_4 = arith.constant 0 : index
    %c0_5 = arith.constant 0 : index
    %4 = vector.load %arg2[%c0_3, %c0_4, %c0_5] : memref<9x4x128xbf16, #tpu.memory_space<vmem>>, vector<1x4x128xbf16>
    %5 = vector.shape_cast %4 : vector<1x4x128xbf16> to vector<4x128xbf16>
    %cst = arith.constant dense<0.000000e+00> : vector<256x128xf32>
    %6 = tpu.matmul %3, %5, %cst {dimension_numbers = #tpu.dot_dimension_numbers<[1], [0], [0], [1], [0, 0, 1, 1], [], []>} : vector<256x4xbf16>, vector<4x128xbf16>, vector<256x128xf32> -> vector<256x128xf32>
    %c0_6 = arith.constant 0 : index
    %c0_7 = arith.constant 0 : index
    %7 = vector.load %arg5[%c0_6, %c0_7] : memref<256x128xf32, #tpu.memory_space<vmem>>, vector<256x128xf32>
    tpu.vector_store %arg5[%c0_6, %c0_7], %6 {strides = array<i32>} : memref<256x128xf32, #tpu.memory_space<vmem>>, vector<256x128xf32>,
    %8 = vector.extract_strided_slice %1 {offsets = [0, 1, 0], sizes = [16, 16, 4], strides = [1, 1, 1]} : vector<18x18x4xbf16> to vector<16x16x4xbf16>
    %9 = vector.shape_cast %8 : vector<16x16x4xbf16> to vector<256x4xbf16>
    %c1 = arith.constant 1 : index
    %c0_8 = arith.constant 0 : index
    %c0_9 = arith.constant 0 : index
    %10 = vector.load %arg2[%c1, %c0_8, %c0_9] : memref<9x4x128xbf16, #tpu.memory_space<vmem>>, vector<1x4x128xbf16>
    %11 = vector.shape_cast %10 : vector<1x4x128xbf16> to vector<4x128xbf16>
    %cst_10 = arith.constant dense<0.000000e+00> : vector<256x128xf32>
    %12 = tpu.matmul %9, %11, %cst_10 {dimension_numbers = #tpu.dot_dimension_numbers<[1], [0], [0], [1], [0, 0, 1, 1], [], []>} : vector<256x4xbf16>, vector<4x128xbf16>, vector<256x128xf32> -> vector<256x128xf32>
    %c0_11 = arith.constant 0 : index
    %c0_12 = arith.constant 0 : index
    %13 = vector.load %arg5[%c0_11, %c0_12] : memref<256x128xf32, #tpu.memory_space<vmem>>, vector<256x128xf32>
    %14 = arith.addf %13, %12 : vector<256x128xf32>
    %c0_13 = arith.constant 0 : index
    %c0_14 = arith.constant 0 : index
    %15 = vector.load %arg5[%c0_13, %c0_14] : memref<256x128xf32, #tpu.memory_space<vmem>>, vector<256x128xf32>
    tpu.vector_store %arg5[%c0_13, %c0_14], %14 {strides = array<i32>} : memref<256x128xf32, #tpu.memory_space<vmem>>, vector<256x128xf32>,
    %16 = vector.extract_strided_slice %1 {offsets = [0, 2, 0], sizes = [16, 16, 4], strides = [1, 1, 1]} : vector<18x18x4xbf16> to vector<16x16x4xbf16>
    %17 = vector.shape_cast %16 : vector<16x16x4xbf16> to vector<256x4xbf16>
    %c2 = arith.constant 2 : index
    %c0_15 = arith.constant 0 : index
    %c0_16 = arith.constant 0 : index
    %18 = vector.load %arg2[%c2, %c0_15, %c0_16] : memref<9x4x128xbf16, #tpu.memory_space<vmem>>, vector<1x4x128xbf16>
    %19 = vector.shape_cast %18 : vector<1x4x128xbf16> to vector<4x128xbf16>
    %cst_17 = arith.constant dense<0.000000e+00> : vector<256x128xf32>
    %20 = tpu.matmul %17, %19, %cst_17 {dimension_numbers = #tpu.dot_dimension_numbers<[1], [0], [0], [1], [0, 0, 1, 1], [], []>} : vector<256x4xbf16>, vector<4x128xbf16>, vector<256x128xf32> -> vector<256x128xf32>
    %c0_18 = arith.constant 0 : index
    %c0_19 = arith.constant 0 : index
    %21 = vector.load %arg5[%c0_18, %c0_19] : memref<256x128xf32, #tpu.memory_space<vmem>>, vector<256x128xf32>
    %22 = arith.addf %21, %20 : vector<256x128xf32>
    %c0_20 = arith.constant 0 : index
    %c0_21 = arith.constant 0 : index
    %23 = vector.load %arg5[%c0_20, %c0_21] : memref<256x128xf32, #tpu.memory_space<vmem>>, vector<256x128xf32>
    tpu.vector_store %arg5[%c0_20, %c0_21], %22 {strides = array<i32>} : memref<256x128xf32, #tpu.memory_space<vmem>>, vector<256x128xf32>,
    %24 = vector.extract_strided_slice %1 {offsets = [1, 0, 0], sizes = [16, 16, 4], strides = [1, 1, 1]} : vector<18x18x4xbf16> to vector<16x16x4xbf16>
    %25 = vector.shape_cast %24 : vector<16x16x4xbf16> to vector<256x4xbf16>
    %c3 = arith.constant 3 : index
    %c0_22 = arith.constant 0 : index
    %c0_23 = arith.constant 0 : index
    %26 = vector.load %arg2[%c3, %c0_22, %c0_23] : memref<9x4x128xbf16, #tpu.memory_space<vmem>>, vector<1x4x128xbf16>
    %27 = vector.shape_cast %26 : vector<1x4x128xbf16> to vector<4x128xbf16>
    %cst_24 = arith.constant dense<0.000000e+00> : vector<256x128xf32>
    %28 = tpu.matmul %25, %27, %cst_24 {dimension_numbers = #tpu.dot_dimension_numbers<[1], [0], [0], [1], [0, 0, 1, 1], [], []>} : vector<256x4xbf16>, vector<4x128xbf16>, vector<256x128xf32> -> vector<256x128xf32>
    %c0_25 = arith.constant 0 : index
    %c0_26 = arith.constant 0 : index
    %29 = vector.load %arg5[%c0_25, %c0_26] : memref<256x128xf32, #tpu.memory_space<vmem>>, vector<256x128xf32>
    %30 = arith.addf %29, %28 : vector<256x128xf32>
    %c0_27 = arith.constant 0 : index
    %c0_28 = arith.constant 0 : index
    %31 = vector.load %arg5[%c0_27, %c0_28] : memref<256x128xf32, #tpu.memory_space<vmem>>, vector<256x128xf32>
    tpu.vector_store %arg5[%c0_27, %c0_28], %30 {strides = array<i32>} : memref<256x128xf32, #tpu.memory_space<vmem>>, vector<256x128xf32>,
    %32 = vector.extract_strided_slice %1 {offsets = [1, 1, 0], sizes = [16, 16, 4], strides = [1, 1, 1]} : vector<18x18x4xbf16> to vector<16x16x4xbf16>
    %33 = vector.shape_cast %32 : vector<16x16x4xbf16> to vector<256x4xbf16>
    %c4 = arith.constant 4 : index
    %c0_29 = arith.constant 0 : index
    %c0_30 = arith.constant 0 : index
    %34 = vector.load %arg2[%c4, %c0_29, %c0_30] : memref<9x4x128xbf16, #tpu.memory_space<vmem>>, vector<1x4x128xbf16>
    %35 = vector.shape_cast %34 : vector<1x4x128xbf16> to vector<4x128xbf16>
    %cst_31 = arith.constant dense<0.000000e+00> : vector<256x128xf32>
    %36 = tpu.matmul %33, %35, %cst_31 {dimension_numbers = #tpu.dot_dimension_numbers<[1], [0], [0], [1], [0, 0, 1, 1], [], []>} : vector<256x4xbf16>, vector<4x128xbf16>, vector<256x128xf32> -> vector<256x128xf32>
    %c0_32 = arith.constant 0 : index
    %c0_33 = arith.constant 0 : index
    %37 = vector.load %arg5[%c0_32, %c0_33] : memref<256x128xf32, #tpu.memory_space<vmem>>, vector<256x128xf32>
    %38 = arith.addf %37, %36 : vector<256x128xf32>
    %c0_34 = arith.constant 0 : index
    %c0_35 = arith.constant 0 : index
    %39 = vector.load %arg5[%c0_34, %c0_35] : memref<256x128xf32, #tpu.memory_space<vmem>>, vector<256x128xf32>
    tpu.vector_store %arg5[%c0_34, %c0_35], %38 {strides = array<i32>} : memref<256x128xf32, #tpu.memory_space<vmem>>, vector<256x128xf32>,
    %40 = vector.extract_strided_slice %1 {offsets = [1, 2, 0], sizes = [16, 16, 4], strides = [1, 1, 1]} : vector<18x18x4xbf16> to vector<16x16x4xbf16>
    %41 = vector.shape_cast %40 : vector<16x16x4xbf16> to vector<256x4xbf16>
    %c5 = arith.constant 5 : index
    %c0_36 = arith.constant 0 : index
    %c0_37 = arith.constant 0 : index
    %42 = vector.load %arg2[%c5, %c0_36, %c0_37] : memref<9x4x128xbf16, #tpu.memory_space<vmem>>, vector<1x4x128xbf16>
    %43 = vector.shape_cast %42 : vector<1x4x128xbf16> to vector<4x128xbf16>
    %cst_38 = arith.constant dense<0.000000e+00> : vector<256x128xf32>
    %44 = tpu.matmul %41, %43, %cst_38 {dimension_numbers = #tpu.dot_dimension_numbers<[1], [0], [0], [1], [0, 0, 1, 1], [], []>} : vector<256x4xbf16>, vector<4x128xbf16>, vector<256x128xf32> -> vector<256x128xf32>
    %c0_39 = arith.constant 0 : index
    %c0_40 = arith.constant 0 : index
    %45 = vector.load %arg5[%c0_39, %c0_40] : memref<256x128xf32, #tpu.memory_space<vmem>>, vector<256x128xf32>
    %46 = arith.addf %45, %44 : vector<256x128xf32>
    %c0_41 = arith.constant 0 : index
    %c0_42 = arith.constant 0 : index
    %47 = vector.load %arg5[%c0_41, %c0_42] : memref<256x128xf32, #tpu.memory_space<vmem>>, vector<256x128xf32>
    tpu.vector_store %arg5[%c0_41, %c0_42], %46 {strides = array<i32>} : memref<256x128xf32, #tpu.memory_space<vmem>>, vector<256x128xf32>,
    %48 = vector.extract_strided_slice %1 {offsets = [2, 0, 0], sizes = [16, 16, 4], strides = [1, 1, 1]} : vector<18x18x4xbf16> to vector<16x16x4xbf16>
    %49 = vector.shape_cast %48 : vector<16x16x4xbf16> to vector<256x4xbf16>
    %c6 = arith.constant 6 : index
    %c0_43 = arith.constant 0 : index
    %c0_44 = arith.constant 0 : index
    %50 = vector.load %arg2[%c6, %c0_43, %c0_44] : memref<9x4x128xbf16, #tpu.memory_space<vmem>>, vector<1x4x128xbf16>
    %51 = vector.shape_cast %50 : vector<1x4x128xbf16> to vector<4x128xbf16>
    %cst_45 = arith.constant dense<0.000000e+00> : vector<256x128xf32>
    %52 = tpu.matmul %49, %51, %cst_45 {dimension_numbers = #tpu.dot_dimension_numbers<[1], [0], [0], [1], [0, 0, 1, 1], [], []>} : vector<256x4xbf16>, vector<4x128xbf16>, vector<256x128xf32> -> vector<256x128xf32>
    %c0_46 = arith.constant 0 : index
    %c0_47 = arith.constant 0 : index
    %53 = vector.load %arg5[%c0_46, %c0_47] : memref<256x128xf32, #tpu.memory_space<vmem>>, vector<256x128xf32>
    %54 = arith.addf %53, %52 : vector<256x128xf32>
    %c0_48 = arith.constant 0 : index
    %c0_49 = arith.constant 0 : index
    %55 = vector.load %arg5[%c0_48, %c0_49] : memref<256x128xf32, #tpu.memory_space<vmem>>, vector<256x128xf32>
    tpu.vector_store %arg5[%c0_48, %c0_49], %54 {strides = array<i32>} : memref<256x128xf32, #tpu.memory_space<vmem>>, vector<256x128xf32>,
    %56 = vector.extract_strided_slice %1 {offsets = [2, 1, 0], sizes = [16, 16, 4], strides = [1, 1, 1]} : vector<18x18x4xbf16> to vector<16x16x4xbf16>
    %57 = vector.shape_cast %56 : vector<16x16x4xbf16> to vector<256x4xbf16>
    %c7 = arith.constant 7 : index
    %c0_50 = arith.constant 0 : index
    %c0_51 = arith.constant 0 : index
    %58 = vector.load %arg2[%c7, %c0_50, %c0_51] : memref<9x4x128xbf16, #tpu.memory_space<vmem>>, vector<1x4x128xbf16>
    %59 = vector.shape_cast %58 : vector<1x4x128xbf16> to vector<4x128xbf16>
    %cst_52 = arith.constant dense<0.000000e+00> : vector<256x128xf32>
    %60 = tpu.matmul %57, %59, %cst_52 {dimension_numbers = #tpu.dot_dimension_numbers<[1], [0], [0], [1], [0, 0, 1, 1], [], []>} : vector<256x4xbf16>, vector<4x128xbf16>, vector<256x128xf32> -> vector<256x128xf32>
    %c0_53 = arith.constant 0 : index
    %c0_54 = arith.constant 0 : index
    %61 = vector.load %arg5[%c0_53, %c0_54] : memref<256x128xf32, #tpu.memory_space<vmem>>, vector<256x128xf32>
    %62 = arith.addf %61, %60 : vector<256x128xf32>
    %c0_55 = arith.constant 0 : index
    %c0_56 = arith.constant 0 : index
    %63 = vector.load %arg5[%c0_55, %c0_56] : memref<256x128xf32, #tpu.memory_space<vmem>>, vector<256x128xf32>
    tpu.vector_store %arg5[%c0_55, %c0_56], %62 {strides = array<i32>} : memref<256x128xf32, #tpu.memory_space<vmem>>, vector<256x128xf32>,
    %64 = vector.extract_strided_slice %1 {offsets = [2, 2, 0], sizes = [16, 16, 4], strides = [1, 1, 1]} : vector<18x18x4xbf16> to vector<16x16x4xbf16>
    %65 = vector.shape_cast %64 : vector<16x16x4xbf16> to vector<256x4xbf16>
    %c8 = arith.constant 8 : index
    %c0_57 = arith.constant 0 : index
    %c0_58 = arith.constant 0 : index
    %66 = vector.load %arg2[%c8, %c0_57, %c0_58] : memref<9x4x128xbf16, #tpu.memory_space<vmem>>, vector<1x4x128xbf16>
    %67 = vector.shape_cast %66 : vector<1x4x128xbf16> to vector<4x128xbf16>
    %cst_59 = arith.constant dense<0.000000e+00> : vector<256x128xf32>
    %68 = tpu.matmul %65, %67, %cst_59 {dimension_numbers = #tpu.dot_dimension_numbers<[1], [0], [0], [1], [0, 0, 1, 1], [], []>} : vector<256x4xbf16>, vector<4x128xbf16>, vector<256x128xf32> -> vector<256x128xf32>
    %c0_60 = arith.constant 0 : index
    %c0_61 = arith.constant 0 : index
    %69 = vector.load %arg5[%c0_60, %c0_61] : memref<256x128xf32, #tpu.memory_space<vmem>>, vector<256x128xf32>
    %70 = arith.addf %69, %68 : vector<256x128xf32>
    %c0_62 = arith.constant 0 : index
    %c0_63 = arith.constant 0 : index
    %71 = vector.load %arg5[%c0_62, %c0_63] : memref<256x128xf32, #tpu.memory_space<vmem>>, vector<256x128xf32>
    tpu.vector_store %arg5[%c0_62, %c0_63], %70 {strides = array<i32>} : memref<256x128xf32, #tpu.memory_space<vmem>>, vector<256x128xf32>,
    %c0_64 = arith.constant 0 : index
    %c0_65 = arith.constant 0 : index
    %72 = vector.load %arg5[%c0_64, %c0_65] : memref<256x128xf32, #tpu.memory_space<vmem>>, vector<256x128xf32>
    %73 = arith.truncf %72 : vector<256x128xf32> to vector<256x128xbf16>
    %c0_66 = arith.constant 0 : index
    %c0_67 = arith.constant 0 : index
    %74 = vector.load %arg3[%c0_66, %c0_67] : memref<256x128xbf16, #tpu.memory_space<vmem>>, vector<256x128xbf16>
    tpu.vector_store %arg3[%c0_66, %c0_67], %73 {strides = array<i32>} : memref<256x128xbf16, #tpu.memory_space<vmem>>, vector<256x128xbf16>,
    %cst_68 = arith.constant dense<0.000000e+00> : vector<128xf32>
    %75 = vector.multi_reduction <add>, %72, %cst_68 [0] : vector<256x128xf32> to vector<128xf32>
    %76 = vector.shape_cast %75 : vector<128xf32> to vector<1x128xf32>
    %77 = arith.mulf %72, %72 : vector<256x128xf32>
    %cst_69 = arith.constant dense<0.000000e+00> : vector<128xf32>
    %78 = vector.multi_reduction <add>, %77, %cst_69 [0] : vector<256x128xf32> to vector<128xf32>
    %79 = vector.shape_cast %78 : vector<128xf32> to vector<1x128xf32>
    %80 = tpu.concatenate %76, %79 in 0 : vector<1x128xf32>, vector<1x128xf32> -> vector<2x128xf32>
    %81 = vector.shape_cast %80 : vector<2x128xf32> to vector<1x2x128xf32>
    %c0_70 = arith.constant 0 : index
    %c0_71 = arith.constant 0 : index
    %c0_72 = arith.constant 0 : index
    %82 = vector.load %arg4[%c0_70, %c0_71, %c0_72] : memref<1x2x128xf32, #tpu.memory_space<vmem>>, vector<1x2x128xf32>
    tpu.vector_store %arg4[%c0_70, %c0_71, %c0_72], %81 {strides = array<i32>} : memref<1x2x128xf32, #tpu.memory_space<vmem>>, vector<1x2x128xf32>,
    return
  }
  func.func @transform_0(%arg0: i32) -> (i32, i32, i32, i32) {
    %c0_i32 = arith.constant 0 : i32
    %c0_i32_0 = arith.constant 0 : i32
    %c0_i32_1 = arith.constant 0 : i32
    %c0_i32_2 = arith.constant 0 : i32
    return %arg0, %c0_i32, %c0_i32_0, %c0_i32_1 : i32, i32, i32, i32
  }
  func.func @transform_1(%arg0: i32) -> (i32, i32, i32) {
    %c0_i32 = arith.constant 0 : i32
    %c0_i32_0 = arith.constant 0 : i32
    %c0_i32_1 = arith.constant 0 : i32
    %c0_i32_2 = arith.constant 0 : i32
    return %c0_i32, %c0_i32_0, %c0_i32_1 : i32, i32, i32
  }
  func.func @transform_2(%arg0: i32) -> (i32, i32) {
    %c0_i32 = arith.constant 0 : i32
    %c0_i32_0 = arith.constant 0 : i32
    return %arg0, %c0_i32 : i32, i32
  }
  func.func @transform_3(%arg0: i32) -> (i32, i32, i32) {
    %c0_i32 = arith.constant 0 : i32
    %c0_i32_0 = arith.constant 0 : i32
    %c0_i32_1 = arith.constant 0 : i32
    return %arg0, %c0_i32, %c0_i32_0 : i32, i32, i32
  }
}

</mosaic_0001>

<llo_original>
// kernel: tpu_custom_call.1
$region0: #{tpu_custom_call.1}
  #allocation0 [shape = 'u32[]', space=smem, size = 0x4, offset = 0x4, fixed_abs, tag = 'smem constant byte address 0x4 - core index']
  #allocation1 [shape = 'u32[144,128]{1,0:T(1,128)}', space=vmem, size = 0x12000, scoped, tag = 'internal scratch']
  #allocation2 [shape = 'f32[256,128]{1,0:T(8,128)}', space=vmem, size = 0x20000, scoped, tag = 'scratch operand']
  %s0 = inlined_call_operand.vmem [shape: bf16[2,18,18,4], index: 0, kind: input, shape index: {}]
  %s1 = inlined_call_operand.vmem [shape: bf16[9,4,128], index: 1, kind: input, shape index: {}]
  %s2 = inlined_call_operand.hbm [shape: bf16[512,128], index: 2, kind: output, shape index: {0}]
  %s3 = inlined_call_operand.hbm [shape: f32[2,2,128], index: 3, kind: output, shape index: {1}]
  %4 = xla_tuple %s2, %s3
  %s5 = sld [smem:[#allocation0]]
  $region49: #{tpu_custom_call.1} parent=0
    _
  %s7 = ssub.s32 1, %s5
  %s8 = scalar_select 0, %s7, %s5
  $region1: #{tpu_custom_call.1} parent=0
    #allocation3 [shape = 'u8[131072]{0}', space=vmem, size = 0x20000, scoped, tag = 'output window, operand 0']
    #allocation4 [shape = 's32[2]{0}', space=sflag, size = 0x8, scoped, tag = 'scoped memory for tpu_custom_call.1']
    #allocation5 [shape = 'u8[2048]{0}', space=vmem, size = 0x800, scoped, tag = 'output window, operand 1']
    #allocation6 [shape = 's32[2]{0}', space=sflag, size = 0x8, scoped, tag = 'scoped memory for tpu_custom_call.1']
    %9 = vsyncpa [#allocation4], 0
    %s10 = scalar_lea.sflag [#allocation4], 1
    %11 = vsyncpa %s10, 0
    %12 = vsyncpa [#allocation6], 0
    %s13 = scalar_lea.sflag [#allocation6], 1
    %14 = vsyncpa %s13, 0
    loop: start=0, step=1, limit=4
    $region2: #{tpu_custom_call.1} parent=1 // loop_pre_header
      _
    $region3: #{tpu_custom_call.1} parent=1 // loop_header
      %s16 = sphi 0, %s20
      %p17 = scmp.ge.s32.totalorder %s16, 4
      %s26 = sphi 0, %s28
      %s29 = sphi 0, %s26
      %s30 = sphi 0, %s29
      %s46 = sphi 0, %s30
      %s50 = sphi 0, %s50
      %s52 = sphi 0, %s50
      %s53 = sphi 0, %s52
      %s67 = sphi 0, %s53
      %s73 = sphi 0, %s75
      %s76 = sphi 0, %s73
      %s77 = sphi 0, %s76
      %s93 = sphi 0, %s77
      %s99 = sphi 0, %s101
      %s102 = sphi 0, %s99
      %s103 = sphi 0, %s102
      %s119 = sphi 0, %s103
    $region4: #{tpu_custom_call.1} parent=1 // loop_header_branch
      %19 = sbr.rel (%p17) target = $region8
    $region5: #{tpu_custom_call.1} parent=1 // loop_body
      %s21 = ssub.s32 %s16, 1
      %s22 = ssub.s32 %s16, 2
      %s23 = sadd.s32 %s16, 1
      %s24 = ssub.s32 %s16, %s23
      %p25 = scmp.eq.s32.totalorder %s24, 0
      %s27 = sadd.s32 %s26, 1
      %s28 = scalar_select %p25, %s26, %s27
      %p31 = pneg %p25
      %p32 = scmp.eq.s32.totalorder %s16, 1
      %p33 = por %p31, %p32
      %p34 = scmp.ne.s32.totalorder %s26, %s29
      %p35 = scmp.eq.s32.totalorder %s16, 0
      %p36 = por %p34, %p35
      %p37 = scmp.ne.s32.totalorder %s26, %s29
      %p38 = scmp.eq.s32.totalorder %s21, 1
      %p39 = por %p37, %p38
      %p40 = scmp.ne.s32.totalorder %s29, %s30
      %p41 = scmp.eq.s32.totalorder %s21, 0
      %p42 = por %p40, %p41
      %p43 = scmp.ne.s32.totalorder %s29, %s30
      %p44 = scmp.eq.s32.totalorder %s22, 1
      %p45 = por %p43, %p44
      %p47 = scmp.ne.s32.totalorder %s30, %s46
      %p48 = scmp.eq.s32.totalorder %s22, 0
      %p49 = por %p47, %p48
      %s51 = sadd.s32 %s50, 1
      %p54 = scmp.eq.s32.totalorder %s16, 1
      %p55 = scmp.ne.s32.totalorder %s50, %s52
      %p56 = scmp.eq.s32.totalorder %s16, 0
      %p57 = por %p55, %p56
      %p58 = scmp.ne.s32.totalorder %s50, %s52
      %p59 = scmp.eq.s32.totalorder %s21, 1
      %p60 = por %p58, %p59
      %p61 = scmp.ne.s32.totalorder %s52, %s53
      %p62 = scmp.eq.s32.totalorder %s21, 0
      %p63 = por %p61, %p62
      %p64 = scmp.ne.s32.totalorder %s52, %s53
      %p65 = scmp.eq.s32.totalorder %s22, 1
      %p66 = por %p64, %p65
      %p68 = scmp.ne.s32.totalorder %s53, %s67
      %p69 = scmp.eq.s32.totalorder %s22, 0
      %p70 = por %p68, %p69
      %s71 = ssub.s32 %s16, %s23
      %p72 = scmp.eq.s32.totalorder %s71, 0
      %s74 = sadd.s32 %s73, 1
      %s75 = scalar_select %p72, %s73, %s74
      %p78 = pneg %p72
      %p79 = scmp.eq.s32.totalorder %s16, 1
      %p80 = por %p78, %p79
      %p81 = scmp.ne.s32.totalorder %s73, %s76
      %p82 = scmp.eq.s32.totalorder %s16, 0
      %p83 = por %p81, %p82
      %p84 = scmp.ne.s32.totalorder %s73, %s76
      %p85 = scmp.eq.s32.totalorder %s21, 1
      %p86 = por %p84, %p85
      %p87 = scmp.ne.s32.totalorder %s76, %s77
      %p88 = scmp.eq.s32.totalorder %s21, 0
      %p89 = por %p87, %p88
      %p90 = scmp.ne.s32.totalorder %s76, %s77
      %p91 = scmp.eq.s32.totalorder %s22, 1
      %p92 = por %p90, %p91
      %p94 = scmp.ne.s32.totalorder %s77, %s93
      %p95 = scmp.eq.s32.totalorder %s22, 0
      %p96 = por %p94, %p95
      %s97 = ssub.s32 %s16, %s23
      %p98 = scmp.eq.s32.totalorder %s97, 0
      %s100 = sadd.s32 %s99, 1
      %s101 = scalar_select %p98, %s99, %s100
      %p104 = pneg %p98
      %p105 = scmp.eq.s32.totalorder %s16, 1
      %p106 = por %p104, %p105
      %p107 = scmp.ne.s32.totalorder %s99, %s102
      %p108 = scmp.eq.s32.totalorder %s16, 0
      %p109 = por %p107, %p108
      %p110 = scmp.ne.s32.totalorder %s99, %s102
      %p111 = scmp.eq.s32.totalorder %s21, 1
      %p112 = por %p110, %p111
      %p113 = scmp.ne.s32.totalorder %s102, %s103
      %p114 = scmp.eq.s32.totalorder %s21, 0
      %p115 = por %p113, %p114
      %p116 = scmp.ne.s32.totalorder %s102, %s103
      %p117 = scmp.eq.s32.totalorder %s22, 1
      %p118 = por %p116, %p117
      %p120 = scmp.ne.s32.totalorder %s103, %s119
      %p121 = scmp.eq.s32.totalorder %s22, 0
      %p122 = por %p120, %p121
      %p123 = scmp.le.s32.totalorder 1, %s16
      %p124 = scmp.lt.s32.totalorder %s16, 3
      %p125 = pnand %p123, %p124
      %p126 = pneg %p125
      // Predicated region
      $region9: #{tpu_custom_call.1} parent=5 // pred_check
        _
      $region10: #{tpu_custom_call.1} parent=5 // pred_check_branch
        %128 = sbr.rel (%p125) target = $region12
      $region11: #{tpu_custom_call.1} parent=5 // pred_region
        %s129 = ssub.s32 %s16, 1
        // Predicated region
        $region13: #{tpu_custom_call.1} parent=11 // pred_check
          %p130 = pneg %p63
        $region14: #{tpu_custom_call.1} parent=11 // pred_check_branch
          %132 = sbr.rel (%p130) target = $region16
        $region15: #{tpu_custom_call.1} parent=11 // pred_region
          _
        $region16: #{tpu_custom_call.1} parent=11 // pred_fallthru
          _
      $region12: #{tpu_custom_call.1} parent=5 // pred_fallthru
        _
      %p133 = scmp.lt.s32.totalorder %s16, 2
      // Predicated region
      $region17: #{tpu_custom_call.1} parent=5 // pred_check
        %p134 = pneg %p133
      $region18: #{tpu_custom_call.1} parent=5 // pred_check_branch
        %136 = sbr.rel (%p134) target = $region20
      $region19: #{tpu_custom_call.1} parent=5 // pred_region
        // Predicated region
        $region21: #{tpu_custom_call.1} parent=19 // pred_check
          %p137 = pneg %p36
        $region22: #{tpu_custom_call.1} parent=19 // pred_check_branch
          %139 = sbr.rel (%p137) target = $region24
        $region23: #{tpu_custom_call.1} parent=19 // pred_region
          %p140 = scmp.lt.s32.totalorder %s16, 1
          %s141 = scalar_select %p140, %s16, 1
          %s142 = smul.addr %s141, 54
          %s143 = smul.addr %s142, 4
          %s144 = scalar_lea.vmem %s0, %s143
        $region24: #{tpu_custom_call.1} parent=19 // pred_fallthru
          _
      $region20: #{tpu_custom_call.1} parent=5 // pred_fallthru
        _
      %p145 = scmp.le.s32.totalorder 1, %s16
      %p146 = scmp.lt.s32.totalorder %s16, 3
      %p147 = pnand %p145, %p146
      %p148 = pneg %p147
      // Predicated region
      $region25: #{tpu_custom_call.1} parent=5 // pred_check
        _
      $region26: #{tpu_custom_call.1} parent=5 // pred_check_branch
        %150 = sbr.rel (%p147) target = $region28
      $region27: #{tpu_custom_call.1} parent=5 // pred_region
        %s151 = ssub.s32 %s16, 1
        %p152 = scmp.lt.s32.totalorder %s21, 1
        %s153 = scalar_select %p152, %s21, 1
        %s154 = smul.addr %s153, 54
        %s155 = smul.addr %s154, 4
        %s156 = scalar_lea.vmem %s0, %s155
        %p157 = pneg %p42
        %p158 = pneg %p39
        %p159 = pneg %p63
        %p160 = pneg %p60
        %p161 = pneg %p89
        %p162 = pneg %p86
        %s163 = sand.u32 %s76, 1
        %s164 = scalar_lea.sflag [#allocation4], %s163
        %s165 = sand.u32 %s76, 1
        %s166 = smul.addr %s165, 128
        %s167 = scalar_lea.vmem [#allocation3], %s166
        %p168 = pneg %p115
        %p169 = pneg %p112
        %s170 = sand.u32 %s102, 1
        %s171 = scalar_lea.sflag [#allocation6], %s170
        %s172 = sand.u32 %s102, 1
        %s173 = smul.addr %s172, 2
        %s174 = scalar_lea.vmem [#allocation5], %s173
        %p175 = scmp.lt.s32.totalorder %s21, 1
        %s176 = scalar_select %p175, %s21, 1
        %s177 = smul.addr %s176, 54
        %s178 = smul.addr %s177, 4
        %s179 = scalar_lea.vmem %s0, %s178
        %s180 = smul.u32 32, %s21
        %v182 = vld [vmem:[%s179] sm:$0xf]
        %v183 = vld [vmem:[%s179 + $0x4] sm:$0xf]
        %v184 = vld [vmem:[%s179 + $0x8] sm:$0x1]
        %v185 = vld [vmem:[%s179 + $0xc] sm:$0xf]
        %v186 = vld [vmem:[%s179 + $0x10] sm:$0xf]
        %v187 = vld [vmem:[%s179 + $0x14] sm:$0x1]
        %v188 = vld [vmem:[%s179 + $0x18] sm:$0xf]
        %v189 = vld [vmem:[%s179 + $0x1c] sm:$0xf]
        %v190 = vld [vmem:[%s179 + $0x20] sm:$0x1]
        %v191 = vld [vmem:[%s179 + $0x24] sm:$0xf]
        %v192 = vld [vmem:[%s179 + $0x28] sm:$0xf]
        %v193 = vld [vmem:[%s179 + $0x2c] sm:$0x1]
        %v194 = vld [vmem:[%s179 + $0x30] sm:$0xf]
        %v195 = vld [vmem:[%s179 + $0x34] sm:$0xf]
        %v196 = vld [vmem:[%s179 + $0x38] sm:$0x1]
        %v197 = vld [vmem:[%s179 + $0x3c] sm:$0xf]
        %v198 = vld [vmem:[%s179 + $0x40] sm:$0xf]
        %v199 = vld [vmem:[%s179 + $0x44] sm:$0x1]
        %v200 = vld [vmem:[%s179 + $0x48] sm:$0xf]
        %v201 = vld [vmem:[%s179 + $0x4c] sm:$0xf]
        %v202 = vld [vmem:[%s179 + $0x50] sm:$0x1]
        %v203 = vld [vmem:[%s179 + $0x54] sm:$0xf]
        %v204 = vld [vmem:[%s179 + $0x58] sm:$0xf]
        %v205 = vld [vmem:[%s179 + $0x5c] sm:$0x1]
        %v206 = vld [vmem:[%s179 + $0x60] sm:$0xf]
        %v207 = vld [vmem:[%s179 + $0x64] sm:$0xf]
        %v208 = vld [vmem:[%s179 + $0x68] sm:$0x1]
        %v209 = vld [vmem:[%s179 + $0x6c] sm:$0xf]
        %v210 = vld [vmem:[%s179 + $0x70] sm:$0xf]
        %v211 = vld [vmem:[%s179 + $0x74] sm:$0x1]
        %v212 = vld [vmem:[%s179 + $0x78] sm:$0xf]
        %v213 = vld [vmem:[%s179 + $0x7c] sm:$0xf]
        %v214 = vld [vmem:[%s179 + $0x80] sm:$0x1]
        %v215 = vld [vmem:[%s179 + $0x84] sm:$0xf]
        %v216 = vld [vmem:[%s179 + $0x88] sm:$0xf]
        %v217 = vld [vmem:[%s179 + $0x8c] sm:$0x1]
        %v218 = vld [vmem:[%s179 + $0x90] sm:$0xf]
        %v219 = vld [vmem:[%s179 + $0x94] sm:$0xf]
        %v220 = vld [vmem:[%s179 + $0x98] sm:$0x1]
        %v221 = vld [vmem:[%s179 + $0x9c] sm:$0xf]
        %v222 = vld [vmem:[%s179 + $0xa0] sm:$0xf]
        %v223 = vld [vmem:[%s179 + $0xa4] sm:$0x1]
        %v224 = vld [vmem:[%s179 + $0xa8] sm:$0xf]
        %v225 = vld [vmem:[%s179 + $0xac] sm:$0xf]
        %v226 = vld [vmem:[%s179 + $0xb0] sm:$0x1]
        %v227 = vld [vmem:[%s179 + $0xb4] sm:$0xf]
        %v228 = vld [vmem:[%s179 + $0xb8] sm:$0xf]
        %v229 = vld [vmem:[%s179 + $0xbc] sm:$0x1]
        %v230 = vld [vmem:[%s179 + $0xc0] sm:$0xf]
        %v231 = vld [vmem:[%s179 + $0xc4] sm:$0xf]
        %v232 = vld [vmem:[%s179 + $0xc8] sm:$0x1]
        %v233 = vld [vmem:[%s179 + $0xcc] sm:$0xf]
        %v234 = vld [vmem:[%s179 + $0xd0] sm:$0xf]
        %v235 = vld [vmem:[%s179 + $0xd4] sm:$0x1]
        %v236 = vld [vmem:[%s1] sm:$0x3]
        %v269 = vunpack.c.l.b16 %v182
        %v270 = vunpack.c.l.b16 %v183
        %v271 = vunpack.c.l.b16 %v185
        %v272 = vunpack.c.l.b16 %v186
        %v273 = vunpack.c.l.b16 %v188
        %v274 = vunpack.c.l.b16 %v189
        %v275 = vunpack.c.l.b16 %v191
        %v276 = vunpack.c.l.b16 %v192
        %v277 = vunpack.c.l.b16 %v194
        %v278 = vunpack.c.l.b16 %v195
        %v279 = vunpack.c.l.b16 %v197
        %v280 = vunpack.c.l.b16 %v198
        %v281 = vunpack.c.l.b16 %v200
        %v282 = vunpack.c.l.b16 %v201
        %v283 = vunpack.c.l.b16 %v203
        %v284 = vunpack.c.l.b16 %v204
        %v285 = vunpack.c.l.b16 %v206
        %v286 = vunpack.c.l.b16 %v207
        %v287 = vunpack.c.l.b16 %v209
        %v288 = vunpack.c.l.b16 %v210
        %v289 = vunpack.c.l.b16 %v212
        %v290 = vunpack.c.l.b16 %v213
        %v291 = vunpack.c.l.b16 %v215
        %v292 = vunpack.c.l.b16 %v216
        %v293 = vunpack.c.l.b16 %v218
        %v294 = vunpack.c.l.b16 %v219
        %v295 = vunpack.c.l.b16 %v221
        %v296 = vunpack.c.l.b16 %v222
        %v297 = vunpack.c.l.b16 %v224
        %v298 = vunpack.c.l.b16 %v225
        %v299 = vunpack.c.l.b16 %v227
        %v300 = vunpack.c.l.b16 %v228
        %v301 = vpack.c.b16 %v270, %v269
        %v302 = vpack.c.b16 %v272, %v271
        %v303 = vpack.c.b16 %v274, %v273
        %v304 = vpack.c.b16 %v276, %v275
        %v305 = vpack.c.b16 %v278, %v277
        %v306 = vpack.c.b16 %v280, %v279
        %v307 = vpack.c.b16 %v282, %v281
        %v308 = vpack.c.b16 %v284, %v283
        %v309 = vpack.c.b16 %v286, %v285
        %v310 = vpack.c.b16 %v288, %v287
        %v311 = vpack.c.b16 %v290, %v289
        %v312 = vpack.c.b16 %v292, %v291
        %v313 = vpack.c.b16 %v294, %v293
        %v314 = vpack.c.b16 %v296, %v295
        %v315 = vpack.c.b16 %v298, %v297
        %v316 = vpack.c.b16 %v300, %v299
        %vm317 = vcmask 31744
        %v319 = vsel %vm317, %v301, 0
        %v322 = vsel %vm317, %v302, 0
        %v325 = vsel %vm317, %v303, 0
        %v328 = vsel %vm317, %v304, 0
        %v331 = vsel %vm317, %v305, 0
        %v334 = vsel %vm317, %v306, 0
        %v337 = vsel %vm317, %v307, 0
        %v340 = vsel %vm317, %v308, 0
        %v343 = vsel %vm317, %v309, 0
        %v346 = vsel %vm317, %v310, 0
        %v349 = vsel %vm317, %v311, 0
        %v352 = vsel %vm317, %v312, 0
        %v355 = vsel %vm317, %v313, 0
        %v358 = vsel %vm317, %v314, 0
        %v361 = vsel %vm317, %v315, 0
        %v364 = vsel %vm317, %v316, 0
        %vm366 = vcmask 1041408
        %v368 = vsel %vm366, %v236, 0
        %370 = vmatprep.subr.bf16.mxu0 0
        %371 = vmatpush1.bf16.msra.mxu0 %v368
        %372 = vmatprep.subr.bf16.mxu0 0
        %373 = vmatpush1.bf16.msra.mxu0 0
        %374 = vmatprep.subr.bf16.mxu0 0
        %375 = vmatpush1.bf16.msra.mxu0 0
        %376 = vmatprep.subr.bf16.mxu0 0
        %377 = vmatpush1.bf16.msra.mxu0 0
        %378 = vmatprep.subr.bf16.mxu0 0
        %379 = vmatpush1.bf16.msra.mxu0 0
        %380 = vmatprep.subr.bf16.mxu0 0
        %381 = vmatpush1.bf16.msra.mxu0 0
        %382 = vmatprep.subr.bf16.mxu0 0
        %383 = vmatpush1.bf16.msra.mxu0 0
        %384 = vmatprep.subr.bf16.mxu0 0
        %385 = vmatpush1.bf16.msra.mxu0 0
        %386 = vmatprep.subr.bf16.mxu0 0
        %387 = vmatpush1.bf16.msra.mxu0 0
        %388 = vmatprep.subr.bf16.mxu0 0
        %389 = vmatpush1.bf16.msra.mxu0 0
        %390 = vmatprep.subr.bf16.mxu0 0
        %391 = vmatpush1.bf16.msra.mxu0 0
        %392 = vmatprep.subr.bf16.mxu0 0
        %393 = vmatpush1.bf16.msra.mxu0 0
        %394 = vmatprep.subr.bf16.mxu0 0
        %395 = vmatpush1.bf16.msra.mxu0 0
        %396 = vmatprep.subr.bf16.mxu0 0
        %397 = vmatpush1.bf16.msra.mxu0 0
        %398 = vmatprep.subr.bf16.mxu0 0
        %399 = vmatpush1.bf16.msra.mxu0 0
        %400 = vmatprep.subr.bf16.mxu0 0
        %401 = vmatpush1.bf16.msra.mxu0 0
        %402 = vmatprep.mubr.bf16.mxu0 0
        %403 = vmatmul.mubr.bf16.gmra.mrb[0].mxu0 %v319
        %v404 = vpop.f32.mrb[0].mxu0
        %v405 = vadd.f32 0.0, %v404
        %v406 = vpop.f32.mrb[0].mxu0
        %v407 = vpop.f32.mrb[0].mxu0
        %v408 = vadd.f32 0.0, %v407
        %v409 = vpop.f32.mrb[0].mxu0
        %410 = vmatprep.mubr.bf16.mxu0 0
        %411 = vmatmul.mubr.bf16.gmra.mrb[0].mxu0 %v322
        %v412 = vpop.f32.mrb[0].mxu0
        %v413 = vadd.f32 0.0, %v412
        %v414 = vpop.f32.mrb[0].mxu0
        %v415 = vpop.f32.mrb[0].mxu0
        %v416 = vadd.f32 0.0, %v415
        %v417 = vpop.f32.mrb[0].mxu0
        %418 = vmatprep.mubr.bf16.mxu0 0
        %419 = vmatmul.mubr.bf16.gmra.mrb[0].mxu0 %v325
        %v420 = vpop.f32.mrb[0].mxu0
        %v421 = vadd.f32 0.0, %v420
        %v422 = vpop.f32.mrb[0].mxu0
        %v423 = vpop.f32.mrb[0].mxu0
        %v424 = vadd.f32 0.0, %v423
        %v425 = vpop.f32.mrb[0].mxu0
        %426 = vmatprep.mubr.bf16.mxu0 0
        %427 = vmatmul.mubr.bf16.gmra.mrb[0].mxu0 %v328
        %v428 = vpop.f32.mrb[0].mxu0
        %v429 = vadd.f32 0.0, %v428
        %v430 = vpop.f32.mrb[0].mxu0
        %v431 = vpop.f32.mrb[0].mxu0
        %v432 = vadd.f32 0.0, %v431
        %v433 = vpop.f32.mrb[0].mxu0
        %434 = vmatprep.mubr.bf16.mxu0 0
        %435 = vmatmul.mubr.bf16.gmra.mrb[0].mxu0 %v331
        %v436 = vpop.f32.mrb[0].mxu0
        %v437 = vadd.f32 0.0, %v436
        %v438 = vpop.f32.mrb[0].mxu0
        %v439 = vpop.f32.mrb[0].mxu0
        %v440 = vadd.f32 0.0, %v439
        %v441 = vpop.f32.mrb[0].mxu0
        %442 = vmatprep.mubr.bf16.mxu0 0
        %443 = vmatmul.mubr.bf16.gmra.mrb[0].mxu0 %v334
        %v444 = vpop.f32.mrb[0].mxu0
        %v445 = vadd.f32 0.0, %v444
        %v446 = vpop.f32.mrb[0].mxu0
        %v447 = vpop.f32.mrb[0].mxu0
        %v448 = vadd.f32 0.0, %v447
        %v449 = vpop.f32.mrb[0].mxu0
        %450 = vmatprep.mubr.bf16.mxu0 0
        %451 = vmatmul.mubr.bf16.gmra.mrb[0].mxu0 %v337
        %v452 = vpop.f32.mrb[0].mxu0
        %v453 = vadd.f32 0.0, %v452
        %v454 = vpop.f32.mrb[0].mxu0
        %v455 = vpop.f32.mrb[0].mxu0
        %v456 = vadd.f32 0.0, %v455
        %v457 = vpop.f32.mrb[0].mxu0
        %458 = vmatprep.mubr.bf16.mxu0 0
        %459 = vmatmul.mubr.bf16.gmra.mrb[0].mxu0 %v340
        %v460 = vpop.f32.mrb[0].mxu0
        %v461 = vadd.f32 0.0, %v460
        %v462 = vpop.f32.mrb[0].mxu0
        %v463 = vpop.f32.mrb[0].mxu0
        %v464 = vadd.f32 0.0, %v463
        %v465 = vpop.f32.mrb[0].mxu0
        %466 = vmatprep.mubr.bf16.mxu0 0
        %467 = vmatmul.mubr.bf16.gmra.mrb[0].mxu0 %v343
        %v468 = vpop.f32.mrb[0].mxu0
        %v469 = vadd.f32 0.0, %v468
        %v470 = vpop.f32.mrb[0].mxu0
        %v471 = vpop.f32.mrb[0].mxu0
        %v472 = vadd.f32 0.0, %v471
        %v473 = vpop.f32.mrb[0].mxu0
        %474 = vmatprep.mubr.bf16.mxu0 0
        %475 = vmatmul.mubr.bf16.gmra.mrb[0].mxu0 %v346
        %v476 = vpop.f32.mrb[0].mxu0
        %v477 = vadd.f32 0.0, %v476
        %v478 = vpop.f32.mrb[0].mxu0
        %v479 = vpop.f32.mrb[0].mxu0
        %v480 = vadd.f32 0.0, %v479
        %v481 = vpop.f32.mrb[0].mxu0
        %482 = vmatprep.mubr.bf16.mxu0 0
        %483 = vmatmul.mubr.bf16.gmra.mrb[0].mxu0 %v349
        %v484 = vpop.f32.mrb[0].mxu0
        %v485 = vadd.f32 0.0, %v484
        %v486 = vpop.f32.mrb[0].mxu0
        %v487 = vpop.f32.mrb[0].mxu0
        %v488 = vadd.f32 0.0, %v487
        %v489 = vpop.f32.mrb[0].mxu0
        %490 = vmatprep.mubr.bf16.mxu0 0
        %491 = vmatmul.mubr.bf16.gmra.mrb[0].mxu0 %v352
        %v492 = vpop.f32.mrb[0].mxu0
        %v493 = vadd.f32 0.0, %v492
        %v494 = vpop.f32.mrb[0].mxu0
        %v495 = vpop.f32.mrb[0].mxu0
        %v496 = vadd.f32 0.0, %v495
        %v497 = vpop.f32.mrb[0].mxu0
        %498 = vmatprep.mubr.bf16.mxu0 0
        %499 = vmatmul.mubr.bf16.gmra.mrb[0].mxu0 %v355
        %v500 = vpop.f32.mrb[0].mxu0
        %v501 = vadd.f32 0.0, %v500
        %v502 = vpop.f32.mrb[0].mxu0
        %v503 = vpop.f32.mrb[0].mxu0
        %v504 = vadd.f32 0.0, %v503
        %v505 = vpop.f32.mrb[0].mxu0
        %506 = vmatprep.mubr.bf16.mxu0 0
        %507 = vmatmul.mubr.bf16.gmra.mrb[0].mxu0 %v358
        %v508 = vpop.f32.mrb[0].mxu0
        %v509 = vadd.f32 0.0, %v508
        %v510 = vpop.f32.mrb[0].mxu0
        %v511 = vpop.f32.mrb[0].mxu0
        %v512 = vadd.f32 0.0, %v511
        %v513 = vpop.f32.mrb[0].mxu0
        %514 = vmatprep.mubr.bf16.mxu0 0
        %515 = vmatmul.mubr.bf16.gmra.mrb[0].mxu0 %v361
        %v516 = vpop.f32.mrb[0].mxu0
        %v517 = vadd.f32 0.0, %v516
        %v518 = vpop.f32.mrb[0].mxu0
        %v519 = vpop.f32.mrb[0].mxu0
        %v520 = vadd.f32 0.0, %v519
        %v521 = vpop.f32.mrb[0].mxu0
        %522 = vmatprep.mubr.bf16.mxu0 0
        %523 = vmatmul.mubr.bf16.gmra.mrb[0].mxu0 %v364
        %v524 = vpop.f32.mrb[0].mxu0
        %v525 = vadd.f32 0.0, %v524
        %v526 = vpop.f32.mrb[0].mxu0
        %v527 = vpop.f32.mrb[0].mxu0
        %v528 = vadd.f32 0.0, %v527
        %v529 = vpop.f32.mrb[0].mxu0
        %530 = vdwg.mxu0
        %531 = vst [vmem:[#allocation2] sm:$0xff] %v405
        %532 = vst [vmem:[#allocation2 + $0x8] sm:$0xff] %v408
        %533 = vst [vmem:[#allocation2 + $0x10] sm:$0xff] %v413
        %534 = vst [vmem:[#allocation2 + $0x18] sm:$0xff] %v416
        %535 = vst [vmem:[#allocation2 + $0x20] sm:$0xff] %v421
        %536 = vst [vmem:[#allocation2 + $0x28] sm:$0xff] %v424
        %537 = vst [vmem:[#allocation2 + $0x30] sm:$0xff] %v429
        %538 = vst [vmem:[#allocation2 + $0x38] sm:$0xff] %v432
        %539 = vst [vmem:[#allocation2 + $0x40] sm:$0xff] %v437
        %540 = vst [vmem:[#allocation2 + $0x48] sm:$0xff] %v440
        %541 = vst [vmem:[#allocation2 + $0x50] sm:$0xff] %v445
        %542 = vst [vmem:[#allocation2 + $0x58] sm:$0xff] %v448
        %543 = vst [vmem:[#allocation2 + $0x60] sm:$0xff] %v453
        %544 = vst [vmem:[#allocation2 + $0x68] sm:$0xff] %v456
        %545 = vst [vmem:[#allocation2 + $0x70] sm:$0xff] %v461
        %546 = vst [vmem:[#allocation2 + $0x78] sm:$0xff] %v464
        %547 = vst [vmem:[#allocation2 + $0x80] sm:$0xff] %v469
        %548 = vst [vmem:[#allocation2 + $0x88] sm:$0xff] %v472
        %549 = vst [vmem:[#allocation2 + $0x90] sm:$0xff] %v477
        %550 = vst [vmem:[#allocation2 + $0x98] sm:$0xff] %v480
        %551 = vst [vmem:[#allocation2 + $0xa0] sm:$0xff] %v485
        %552 = vst [vmem:[#allocation2 + $0xa8] sm:$0xff] %v488
        %553 = vst [vmem:[#allocation2 + $0xb0] sm:$0xff] %v493
        %554 = vst [vmem:[#allocation2 + $0xb8] sm:$0xff] %v496
        %555 = vst [vmem:[#allocation2 + $0xc0] sm:$0xff] %v501
        %556 = vst [vmem:[#allocation2 + $0xc8] sm:$0xff] %v504
        %557 = vst [vmem:[#allocation2 + $0xd0] sm:$0xff] %v509
        %558 = vst [vmem:[#allocation2 + $0xd8] sm:$0xff] %v512
        %559 = vst [vmem:[#allocation2 + $0xe0] sm:$0xff] %v517
        %560 = vst [vmem:[#allocation2 + $0xe8] sm:$0xff] %v520
        %561 = vst [vmem:[#allocation2 + $0xf0] sm:$0xff] %v525
        %562 = vst [vmem:[#allocation2 + $0xf8] sm:$0xff] %v528
        %vm563 = vsmask.f32 3328
        %vm564 = vsmask.f32 7440
        %vm565 = vmor %vm563, %vm564
        %v567 = vshrl.u32 %v182, 16
        %v569 = vrot.slane %v567, 4
        %v570 = vshll.u32 %v182, 16
        %v572 = vrot.slane %v570, 5
        %v573 = vor.u32 %v569, %v572
        %v574 = vrot.slane %v573, 4
        %v576 = vshll.u32 %v183, 16
        %v578 = vrot.slane %v576, 5
        %v579 = vsel %vm565, %v574, %v578
        %v580 = vshrl.u32 %v183, 16
        %v582 = vrot.slane %v580, 4
        %v583 = vor.u32 %v582, %v578
        %v584 = vrot.slane %v583, 4
        %v586 = vshll.u32 %v184, 16
        %v588 = vrot.slane %v586, 5
        %v589 = vsel %vm565, %v584, %v588
        %v591 = vshrl.u32 %v185, 16
        %v593 = vrot.slane %v591, 4
        %v594 = vshll.u32 %v185, 16
        %v596 = vrot.slane %v594, 5
        %v597 = vor.u32 %v593, %v596
        %v598 = vrot.slane %v597, 4
        %v600 = vshll.u32 %v186, 16
        %v602 = vrot.slane %v600, 5
        %v603 = vsel %vm565, %v598, %v602
        %v604 = vshrl.u32 %v186, 16
        %v606 = vrot.slane %v604, 4
        %v607 = vor.u32 %v606, %v602
        %v608 = vrot.slane %v607, 4
        %v610 = vshll.u32 %v187, 16
        %v612 = vrot.slane %v610, 5
        %v613 = vsel %vm565, %v608, %v612
        %v615 = vshrl.u32 %v188, 16
        %v617 = vrot.slane %v615, 4
        %v618 = vshll.u32 %v188, 16
        %v620 = vrot.slane %v618, 5
        %v621 = vor.u32 %v617, %v620
        %v622 = vrot.slane %v621, 4
        %v624 = vshll.u32 %v189, 16
        %v626 = vrot.slane %v624, 5
        %v627 = vsel %vm565, %v622, %v626
        %v628 = vshrl.u32 %v189, 16
        %v630 = vrot.slane %v628, 4
        %v631 = vor.u32 %v630, %v626
        %v632 = vrot.slane %v631, 4
        %v634 = vshll.u32 %v190, 16
        %v636 = vrot.slane %v634, 5
        %v637 = vsel %vm565, %v632, %v636
        %v639 = vshrl.u32 %v191, 16
        %v641 = vrot.slane %v639, 4
        %v642 = vshll.u32 %v191, 16
        %v644 = vrot.slane %v642, 5
        %v645 = vor.u32 %v641, %v644
        %v646 = vrot.slane %v645, 4
        %v648 = vshll.u32 %v192, 16
        %v650 = vrot.slane %v648, 5
        %v651 = vsel %vm565, %v646, %v650
        %v652 = vshrl.u32 %v192, 16
        %v654 = vrot.slane %v652, 4
        %v655 = vor.u32 %v654, %v650
        %v656 = vrot.slane %v655, 4
        %v658 = vshll.u32 %v193, 16
        %v660 = vrot.slane %v658, 5
        %v661 = vsel %vm565, %v656, %v660
        %v663 = vshrl.u32 %v194, 16
        %v665 = vrot.slane %v663, 4
        %v666 = vshll.u32 %v194, 16
        %v668 = vrot.slane %v666, 5
        %v669 = vor.u32 %v665, %v668
        %v670 = vrot.slane %v669, 4
        %v672 = vshll.u32 %v195, 16
        %v674 = vrot.slane %v672, 5
        %v675 = vsel %vm565, %v670, %v674
        %v676 = vshrl.u32 %v195, 16
        %v678 = vrot.slane %v676, 4
        %v679 = vor.u32 %v678, %v674
        %v680 = vrot.slane %v679, 4
        %v682 = vshll.u32 %v196, 16
        %v684 = vrot.slane %v682, 5
        %v685 = vsel %vm565, %v680, %v684
        %v687 = vshrl.u32 %v197, 16
        %v689 = vrot.slane %v687, 4
        %v690 = vshll.u32 %v197, 16
        %v692 = vrot.slane %v690, 5
        %v693 = vor.u32 %v689, %v692
        %v694 = vrot.slane %v693, 4
        %v696 = vshll.u32 %v198, 16
        %v698 = vrot.slane %v696, 5
        %v699 = vsel %vm565, %v694, %v698
        %v700 = vshrl.u32 %v198, 16
        %v702 = vrot.slane %v700, 4
        %v703 = vor.u32 %v702, %v698
        %v704 = vrot.slane %v703, 4
        %v706 = vshll.u32 %v199, 16
        %v708 = vrot.slane %v706, 5
        %v709 = vsel %vm565, %v704, %v708
        %v711 = vshrl.u32 %v200, 16
        %v713 = vrot.slane %v711, 4
        %v714 = vshll.u32 %v200, 16
        %v716 = vrot.slane %v714, 5
        %v717 = vor.u32 %v713, %v716
        %v718 = vrot.slane %v717, 4
        %v720 = vshll.u32 %v201, 16
        %v722 = vrot.slane %v720, 5
        %v723 = vsel %vm565, %v718, %v722
        %v724 = vshrl.u32 %v201, 16
        %v726 = vrot.slane %v724, 4
        %v727 = vor.u32 %v726, %v722
        %v728 = vrot.slane %v727, 4
        %v730 = vshll.u32 %v202, 16
        %v732 = vrot.slane %v730, 5
        %v733 = vsel %vm565, %v728, %v732
        %v735 = vshrl.u32 %v203, 16
        %v737 = vrot.slane %v735, 4
        %v738 = vshll.u32 %v203, 16
        %v740 = vrot.slane %v738, 5
        %v741 = vor.u32 %v737, %v740
        %v742 = vrot.slane %v741, 4
        %v744 = vshll.u32 %v204, 16
        %v746 = vrot.slane %v744, 5
        %v747 = vsel %vm565, %v742, %v746
        %v748 = vshrl.u32 %v204, 16
        %v750 = vrot.slane %v748, 4
        %v751 = vor.u32 %v750, %v746
        %v752 = vrot.slane %v751, 4
        %v754 = vshll.u32 %v205, 16
        %v756 = vrot.slane %v754, 5
        %v757 = vsel %vm565, %v752, %v756
        %v759 = vshrl.u32 %v206, 16
        %v761 = vrot.slane %v759, 4
        %v762 = vshll.u32 %v206, 16
        %v764 = vrot.slane %v762, 5
        %v765 = vor.u32 %v761, %v764
        %v766 = vrot.slane %v765, 4
        %v768 = vshll.u32 %v207, 16
        %v770 = vrot.slane %v768, 5
        %v771 = vsel %vm565, %v766, %v770
        %v772 = vshrl.u32 %v207, 16
        %v774 = vrot.slane %v772, 4
        %v775 = vor.u32 %v774, %v770
        %v776 = vrot.slane %v775, 4
        %v778 = vshll.u32 %v208, 16
        %v780 = vrot.slane %v778, 5
        %v781 = vsel %vm565, %v776, %v780
        %v783 = vshrl.u32 %v209, 16
        %v785 = vrot.slane %v783, 4
        %v786 = vshll.u32 %v209, 16
        %v788 = vrot.slane %v786, 5
        %v789 = vor.u32 %v785, %v788
        %v790 = vrot.slane %v789, 4
        %v792 = vshll.u32 %v210, 16
        %v794 = vrot.slane %v792, 5
        %v795 = vsel %vm565, %v790, %v794
        %v796 = vshrl.u32 %v210, 16
        %v798 = vrot.slane %v796, 4
        %v799 = vor.u32 %v798, %v794
        %v800 = vrot.slane %v799, 4
        %v802 = vshll.u32 %v211, 16
        %v804 = vrot.slane %v802, 5
        %v805 = vsel %vm565, %v800, %v804
        %v807 = vshrl.u32 %v212, 16
        %v809 = vrot.slane %v807, 4
        %v810 = vshll.u32 %v212, 16
        %v812 = vrot.slane %v810, 5
        %v813 = vor.u32 %v809, %v812
        %v814 = vrot.slane %v813, 4
        %v816 = vshll.u32 %v213, 16
        %v818 = vrot.slane %v816, 5
        %v819 = vsel %vm565, %v814, %v818
        %v820 = vshrl.u32 %v213, 16
        %v822 = vrot.slane %v820, 4
        %v823 = vor.u32 %v822, %v818
        %v824 = vrot.slane %v823, 4
        %v826 = vshll.u32 %v214, 16
        %v828 = vrot.slane %v826, 5
        %v829 = vsel %vm565, %v824, %v828
        %v831 = vshrl.u32 %v215, 16
        %v833 = vrot.slane %v831, 4
        %v834 = vshll.u32 %v215, 16
        %v836 = vrot.slane %v834, 5
        %v837 = vor.u32 %v833, %v836
        %v838 = vrot.slane %v837, 4
        %v840 = vshll.u32 %v216, 16
        %v842 = vrot.slane %v840, 5
        %v843 = vsel %vm565, %v838, %v842
        %v844 = vshrl.u32 %v216, 16
        %v846 = vrot.slane %v844, 4
        %v847 = vor.u32 %v846, %v842
        %v848 = vrot.slane %v847, 4
        %v850 = vshll.u32 %v217, 16
        %v852 = vrot.slane %v850, 5
        %v853 = vsel %vm565, %v848, %v852
        %v855 = vshrl.u32 %v218, 16
        %v857 = vrot.slane %v855, 4
        %v858 = vshll.u32 %v218, 16
        %v860 = vrot.slane %v858, 5
        %v861 = vor.u32 %v857, %v860
        %v862 = vrot.slane %v861, 4
        %v864 = vshll.u32 %v219, 16
        %v866 = vrot.slane %v864, 5
        %v867 = vsel %vm565, %v862, %v866
        %v868 = vshrl.u32 %v219, 16
        %v870 = vrot.slane %v868, 4
        %v871 = vor.u32 %v870, %v866
        %v872 = vrot.slane %v871, 4
        %v874 = vshll.u32 %v220, 16
        %v876 = vrot.slane %v874, 5
        %v877 = vsel %vm565, %v872, %v876
        %v879 = vshrl.u32 %v221, 16
        %v881 = vrot.slane %v879, 4
        %v882 = vshll.u32 %v221, 16
        %v884 = vrot.slane %v882, 5
        %v885 = vor.u32 %v881, %v884
        %v886 = vrot.slane %v885, 4
        %v888 = vshll.u32 %v222, 16
        %v890 = vrot.slane %v888, 5
        %v891 = vsel %vm565, %v886, %v890
        %v892 = vshrl.u32 %v222, 16
        %v894 = vrot.slane %v892, 4
        %v895 = vor.u32 %v894, %v890
        %v896 = vrot.slane %v895, 4
        %v898 = vshll.u32 %v223, 16
        %v900 = vrot.slane %v898, 5
        %v901 = vsel %vm565, %v896, %v900
        %v903 = vshrl.u32 %v224, 16
        %v905 = vrot.slane %v903, 4
        %v906 = vshll.u32 %v224, 16
        %v908 = vrot.slane %v906, 5
        %v909 = vor.u32 %v905, %v908
        %v910 = vrot.slane %v909, 4
        %v912 = vshll.u32 %v225, 16
        %v914 = vrot.slane %v912, 5
        %v915 = vsel %vm565, %v910, %v914
        %v916 = vshrl.u32 %v225, 16
        %v918 = vrot.slane %v916, 4
        %v919 = vor.u32 %v918, %v914
        %v920 = vrot.slane %v919, 4
        %v922 = vshll.u32 %v226, 16
        %v924 = vrot.slane %v922, 5
        %v925 = vsel %vm565, %v920, %v924
        %v927 = vshrl.u32 %v227, 16
        %v929 = vrot.slane %v927, 4
        %v930 = vshll.u32 %v227, 16
        %v932 = vrot.slane %v930, 5
        %v933 = vor.u32 %v929, %v932
        %v934 = vrot.slane %v933, 4
        %v936 = vshll.u32 %v228, 16
        %v938 = vrot.slane %v936, 5
        %v939 = vsel %vm565, %v934, %v938
        %v940 = vshrl.u32 %v228, 16
        %v942 = vrot.slane %v940, 4
        %v943 = vor.u32 %v942, %v938
        %v944 = vrot.slane %v943, 4
        %v946 = vshll.u32 %v229, 16
        %v948 = vrot.slane %v946, 5
        %v949 = vsel %vm565, %v944, %v948
        %s950 = scalar_lea.vmem %s1, 2
        %v951 = vld [vmem:[%s950] sm:$0x3]
        %v952 = vunpack.c.l.b16 %v579
        %v953 = vunpack.c.l.b16 %v589
        %v954 = vunpack.c.l.b16 %v603
        %v955 = vunpack.c.l.b16 %v613
        %v956 = vunpack.c.l.b16 %v627
        %v957 = vunpack.c.l.b16 %v637
        %v958 = vunpack.c.l.b16 %v651
        %v959 = vunpack.c.l.b16 %v661
        %v960 = vunpack.c.l.b16 %v675
        %v961 = vunpack.c.l.b16 %v685
        %v962 = vunpack.c.l.b16 %v699
        %v963 = vunpack.c.l.b16 %v709
        %v964 = vunpack.c.l.b16 %v723
        %v965 = vunpack.c.l.b16 %v733
        %v966 = vunpack.c.l.b16 %v747
        %v967 = vunpack.c.l.b16 %v757
        %v968 = vunpack.c.l.b16 %v771
        %v969 = vunpack.c.l.b16 %v781
        %v970 = vunpack.c.l.b16 %v795
        %v971 = vunpack.c.l.b16 %v805
        %v972 = vunpack.c.l.b16 %v819
        %v973 = vunpack.c.l.b16 %v829
        %v974 = vunpack.c.l.b16 %v843
        %v975 = vunpack.c.l.b16 %v853
        %v976 = vunpack.c.l.b16 %v867
        %v977 = vunpack.c.l.b16 %v877
        %v978 = vunpack.c.l.b16 %v891
        %v979 = vunpack.c.l.b16 %v901
        %v980 = vunpack.c.l.b16 %v915
        %v981 = vunpack.c.l.b16 %v925
        %v982 = vunpack.c.l.b16 %v939
        %v983 = vunpack.c.l.b16 %v949
        %v984 = vpack.c.b16 %v953, %v952
        %v985 = vpack.c.b16 %v955, %v954
        %v986 = vpack.c.b16 %v957, %v956
        %v987 = vpack.c.b16 %v959, %v958
        %v988 = vpack.c.b16 %v961, %v960
        %v989 = vpack.c.b16 %v963, %v962
        %v990 = vpack.c.b16 %v965, %v964
        %v991 = vpack.c.b16 %v967, %v966
        %v992 = vpack.c.b16 %v969, %v968
        %v993 = vpack.c.b16 %v971, %v970
        %v994 = vpack.c.b16 %v973, %v972
        %v995 = vpack.c.b16 %v975, %v974
        %v996 = vpack.c.b16 %v977, %v976
        %v997 = vpack.c.b16 %v979, %v978
        %v998 = vpack.c.b16 %v981, %v980
        %v999 = vpack.c.b16 %v983, %v982
        %v1001 = vsel %vm317, %v984, 0
        %v1004 = vsel %vm317, %v985, 0
        %v1007 = vsel %vm317, %v986, 0
        %v1010 = vsel %vm317, %v987, 0
        %v1013 = vsel %vm317, %v988, 0
        %v1016 = vsel %vm317, %v989, 0
        %v1019 = vsel %vm317, %v990, 0
        %v1022 = vsel %vm317, %v991, 0
        %v1025 = vsel %vm317, %v992, 0
        %v1028 = vsel %vm317, %v993, 0
        %v1031 = vsel %vm317, %v994, 0
        %v1034 = vsel %vm317, %v995, 0
        %v1037 = vsel %vm317, %v996, 0
        %v1040 = vsel %vm317, %v997, 0
        %v1043 = vsel %vm317, %v998, 0
        %v1046 = vsel %vm317, %v999, 0
        %v1049 = vsel %vm366, %v951, 0
        %1051 = vmatprep.subr.bf16.mxu0 0
        %1052 = vmatpush1.bf16.msra.mxu0 %v1049
        %1053 = vmatprep.subr.bf16.mxu0 0
        %1054 = vmatpush1.bf16.msra.mxu0 0
        %1055 = vmatprep.subr.bf16.mxu0 0
        %1056 = vmatpush1.bf16.msra.mxu0 0
        %1057 = vmatprep.subr.bf16.mxu0 0
        %1058 = vmatpush1.bf16.msra.mxu0 0
        %1059 = vmatprep.subr.bf16.mxu0 0
        %1060 = vmatpush1.bf16.msra.mxu0 0
        %1061 = vmatprep.subr.bf16.mxu0 0
        %1062 = vmatpush1.bf16.msra.mxu0 0
        %1063 = vmatprep.subr.bf16.mxu0 0
        %1064 = vmatpush1.bf16.msra.mxu0 0
        %1065 = vmatprep.subr.bf16.mxu0 0
        %1066 = vmatpush1.bf16.msra.mxu0 0
        %1067 = vmatprep.subr.bf16.mxu0 0
        %1068 = vmatpush1.bf16.msra.mxu0 0
        %1069 = vmatprep.subr.bf16.mxu0 0
        %1070 = vmatpush1.bf16.msra.mxu0 0
        %1071 = vmatprep.subr.bf16.mxu0 0
        %1072 = vmatpush1.bf16.msra.mxu0 0
        %1073 = vmatprep.subr.bf16.mxu0 0
        %1074 = vmatpush1.bf16.msra.mxu0 0
        %1075 = vmatprep.subr.bf16.mxu0 0
        %1076 = vmatpush1.bf16.msra.mxu0 0
        %1077 = vmatprep.subr.bf16.mxu0 0
        %1078 = vmatpush1.bf16.msra.mxu0 0
        %1079 = vmatprep.subr.bf16.mxu0 0
        %1080 = vmatpush1.bf16.msra.mxu0 0
        %1081 = vmatprep.subr.bf16.mxu0 0
        %1082 = vmatpush1.bf16.msra.mxu0 0
        %1083 = vmatprep.mubr.bf16.mxu0 0
        %1084 = vmatmul.mubr.bf16.gmra.mrb[0].mxu0 %v1001
        %v1085 = vpop.f32.mrb[0].mxu0
        %v1086 = vadd.f32 0.0, %v1085
        %v1087 = vpop.f32.mrb[0].mxu0
        %v1088 = vpop.f32.mrb[0].mxu0
        %v1089 = vadd.f32 0.0, %v1088
        %v1090 = vpop.f32.mrb[0].mxu0
        %1091 = vmatprep.mubr.bf16.mxu0 0
        %1092 = vmatmul.mubr.bf16.gmra.mrb[0].mxu0 %v1004
        %v1093 = vpop.f32.mrb[0].mxu0
        %v1094 = vadd.f32 0.0, %v1093
        %v1095 = vpop.f32.mrb[0].mxu0
        %v1096 = vpop.f32.mrb[0].mxu0
        %v1097 = vadd.f32 0.0, %v1096
        %v1098 = vpop.f32.mrb[0].mxu0
        %1099 = vmatprep.mubr.bf16.mxu0 0
        %1100 = vmatmul.mubr.bf16.gmra.mrb[0].mxu0 %v1007
        %v1101 = vpop.f32.mrb[0].mxu0
        %v1102 = vadd.f32 0.0, %v1101
        %v1103 = vpop.f32.mrb[0].mxu0
        %v1104 = vpop.f32.mrb[0].mxu0
        %v1105 = vadd.f32 0.0, %v1104
        %v1106 = vpop.f32.mrb[0].mxu0
        %1107 = vmatprep.mubr.bf16.mxu0 0
        %1108 = vmatmul.mubr.bf16.gmra.mrb[0].mxu0 %v1010
        %v1109 = vpop.f32.mrb[0].mxu0
        %v1110 = vadd.f32 0.0, %v1109
        %v1111 = vpop.f32.mrb[0].mxu0
        %v1112 = vpop.f32.mrb[0].mxu0
        %v1113 = vadd.f32 0.0, %v1112
        %v1114 = vpop.f32.mrb[0].mxu0
        %1115 = vmatprep.mubr.bf16.mxu0 0
        %1116 = vmatmul.mubr.bf16.gmra.mrb[0].mxu0 %v1013
        %v1117 = vpop.f32.mrb[0].mxu0
        %v1118 = vadd.f32 0.0, %v1117
        %v1119 = vpop.f32.mrb[0].mxu0
        %v1120 = vpop.f32.mrb[0].mxu0
        %v1121 = vadd.f32 0.0, %v1120
        %v1122 = vpop.f32.mrb[0].mxu0
        %1123 = vmatprep.mubr.bf16.mxu0 0
        %1124 = vmatmul.mubr.bf16.gmra.mrb[0].mxu0 %v1016
        %v1125 = vpop.f32.mrb[0].mxu0
        %v1126 = vadd.f32 0.0, %v1125
        %v1127 = vpop.f32.mrb[0].mxu0
        %v1128 = vpop.f32.mrb[0].mxu0
        %v1129 = vadd.f32 0.0, %v1128
        %v1130 = vpop.f32.mrb[0].mxu0
        %1131 = vmatprep.mubr.bf16.mxu0 0
        %1132 = vmatmul.mubr.bf16.gmra.mrb[0].mxu0 %v1019
        %v1133 = vpop.f32.mrb[0].mxu0
        %v1134 = vadd.f32 0.0, %v1133
        %v1135 = vpop.f32.mrb[0].mxu0
        %v1136 = vpop.f32.mrb[0].mxu0
        %v1137 = vadd.f32 0.0, %v1136
        %v1138 = vpop.f32.mrb[0].mxu0
        %1139 = vmatprep.mubr.bf16.mxu0 0
        %1140 = vmatmul.mubr.bf16.gmra.mrb[0].mxu0 %v1022
        %v1141 = vpop.f32.mrb[0].mxu0
        %v1142 = vadd.f32 0.0, %v1141
        %v1143 = vpop.f32.mrb[0].mxu0
        %v1144 = vpop.f32.mrb[0].mxu0
        %v1145 = vadd.f32 0.0, %v1144
        %v1146 = vpop.f32.mrb[0].mxu0
        %1147 = vmatprep.mubr.bf16.mxu0 0
        %1148 = vmatmul.mubr.bf16.gmra.mrb[0].mxu0 %v1025
        %v1149 = vpop.f32.mrb[0].mxu0
        %v1150 = vadd.f32 0.0, %v1149
        %v1151 = vpop.f32.mrb[0].mxu0
        %v1152 = vpop.f32.mrb[0].mxu0
        %v1153 = vadd.f32 0.0, %v1152
        %v1154 = vpop.f32.mrb[0].mxu0
        %1155 = vmatprep.mubr.bf16.mxu0 0
        %1156 = vmatmul.mubr.bf16.gmra.mrb[0].mxu0 %v1028
        %v1157 = vpop.f32.mrb[0].mxu0
        %v1158 = vadd.f32 0.0, %v1157
        %v1159 = vpop.f32.mrb[0].mxu0
        %v1160 = vpop.f32.mrb[0].mxu0
        %v1161 = vadd.f32 0.0, %v1160
        %v1162 = vpop.f32.mrb[0].mxu0
        %1163 = vmatprep.mubr.bf16.mxu0 0
        %1164 = vmatmul.mubr.bf16.gmra.mrb[0].mxu0 %v1031
        %v1165 = vpop.f32.mrb[0].mxu0
        %v1166 = vadd.f32 0.0, %v1165
        %v1167 = vpop.f32.mrb[0].mxu0
        %v1168 = vpop.f32.mrb[0].mxu0
        %v1169 = vadd.f32 0.0, %v1168
        %v1170 = vpop.f32.mrb[0].mxu0
        %1171 = vmatprep.mubr.bf16.mxu0 0
        %1172 = vmatmul.mubr.bf16.gmra.mrb[0].mxu0 %v1034
        %v1173 = vpop.f32.mrb[0].mxu0
        %v1174 = vadd.f32 0.0, %v1173
        %v1175 = vpop.f32.mrb[0].mxu0
        %v1176 = vpop.f32.mrb[0].mxu0
        %v1177 = vadd.f32 0.0, %v1176
        %v1178 = vpop.f32.mrb[0].mxu0
        %1179 = vmatprep.mubr.bf16.mxu0 0
        %1180 = vmatmul.mubr.bf16.gmra.mrb[0].mxu0 %v1037
        %v1181 = vpop.f32.mrb[0].mxu0
        %v1182 = vadd.f32 0.0, %v1181
        %v1183 = vpop.f32.mrb[0].mxu0
        %v1184 = vpop.f32.mrb[0].mxu0
        %v1185 = vadd.f32 0.0, %v1184
        %v1186 = vpop.f32.mrb[0].mxu0
        %1187 = vmatprep.mubr.bf16.mxu0 0
        %1188 = vmatmul.mubr.bf16.gmra.mrb[0].mxu0 %v1040
        %v1189 = vpop.f32.mrb[0].mxu0
        %v1190 = vadd.f32 0.0, %v1189
        %v1191 = vpop.f32.mrb[0].mxu0
        %v1192 = vpop.f32.mrb[0].mxu0
        %v1193 = vadd.f32 0.0, %v1192
        %v1194 = vpop.f32.mrb[0].mxu0
        %1195 = vmatprep.mubr.bf16.mxu0 0
        %1196 = vmatmul.mubr.bf16.gmra.mrb[0].mxu0 %v1043
        %v1197 = vpop.f32.mrb[0].mxu0
        %v1198 = vadd.f32 0.0, %v1197
        %v1199 = vpop.f32.mrb[0].mxu0
        %v1200 = vpop.f32.mrb[0].mxu0
        %v1201 = vadd.f32 0.0, %v1200
        %v1202 = vpop.f32.mrb[0].mxu0
        %1203 = vmatprep.mubr.bf16.mxu0 0
        %1204 = vmatmul.mubr.bf16.gmra.mrb[0].mxu0 %v1046
        %v1205 = vpop.f32.mrb[0].mxu0
        %v1206 = vadd.f32 0.0, %v1205
        %v1207 = vpop.f32.mrb[0].mxu0
        %v1208 = vpop.f32.mrb[0].mxu0
        %v1209 = vadd.f32 0.0, %v1208
        %v1210 = vpop.f32.mrb[0].mxu0
        %1211 = vdwg.mxu0
        %v1212 = vld [vmem:[#allocation2] sm:$0xff]
        %v1213 = vld [vmem:[#allocation2 + $0x8] sm:$0xff]
        %v1214 = vld [vmem:[#allocation2 + $0x10] sm:$0xff]
        %v1215 = vld [vmem:[#allocation2 + $0x18] sm:$0xff]
        %v1216 = vld [vmem:[#allocation2 + $0x20] sm:$0xff]
        %v1217 = vld [vmem:[#allocation2 + $0x28] sm:$0xff]
        %v1218 = vld [vmem:[#allocation2 + $0x30] sm:$0xff]
        %v1219 = vld [vmem:[#allocation2 + $0x38] sm:$0xff]
        %v1220 = vld [vmem:[#allocation2 + $0x40] sm:$0xff]
        %v1221 = vld [vmem:[#allocation2 + $0x48] sm:$0xff]
        %v1222 = vld [vmem:[#allocation2 + $0x50] sm:$0xff]
        %v1223 = vld [vmem:[#allocation2 + $0x58] sm:$0xff]
        %v1224 = vld [vmem:[#allocation2 + $0x60] sm:$0xff]
        %v1225 = vld [vmem:[#allocation2 + $0x68] sm:$0xff]
        %v1226 = vld [vmem:[#allocation2 + $0x70] sm:$0xff]
        %v1227 = vld [vmem:[#allocation2 + $0x78] sm:$0xff]
        %v1228 = vld [vmem:[#allocation2 + $0x80] sm:$0xff]
        %v1229 = vld [vmem:[#allocation2 + $0x88] sm:$0xff]
        %v1230 = vld [vmem:[#allocation2 + $0x90] sm:$0xff]
        %v1231 = vld [vmem:[#allocation2 + $0x98] sm:$0xff]
        %v1232 = vld [vmem:[#allocation2 + $0xa0] sm:$0xff]
        %v1233 = vld [vmem:[#allocation2 + $0xa8] sm:$0xff]
        %v1234 = vld [vmem:[#allocation2 + $0xb0] sm:$0xff]
        %v1235 = vld [vmem:[#allocation2 + $0xb8] sm:$0xff]
        %v1236 = vld [vmem:[#allocation2 + $0xc0] sm:$0xff]
        %v1237 = vld [vmem:[#allocation2 + $0xc8] sm:$0xff]
        %v1238 = vld [vmem:[#allocation2 + $0xd0] sm:$0xff]
        %v1239 = vld [vmem:[#allocation2 + $0xd8] sm:$0xff]
        %v1240 = vld [vmem:[#allocation2 + $0xe0] sm:$0xff]
        %v1241 = vld [vmem:[#allocation2 + $0xe8] sm:$0xff]
        %v1242 = vld [vmem:[#allocation2 + $0xf0] sm:$0xff]
        %v1243 = vld [vmem:[#allocation2 + $0xf8] sm:$0xff]
        %v1244 = vadd.f32 %v1212, %v1086
        %v1245 = vadd.f32 %v1213, %v1089
        %v1246 = vadd.f32 %v1214, %v1094
        %v1247 = vadd.f32 %v1215, %v1097
        %v1248 = vadd.f32 %v1216, %v1102
        %v1249 = vadd.f32 %v1217, %v1105
        %v1250 = vadd.f32 %v1218, %v1110
        %v1251 = vadd.f32 %v1219, %v1113
        %v1252 = vadd.f32 %v1220, %v1118
        %v1253 = vadd.f32 %v1221, %v1121
        %v1254 = vadd.f32 %v1222, %v1126
        %v1255 = vadd.f32 %v1223, %v1129
        %v1256 = vadd.f32 %v1224, %v1134
        %v1257 = vadd.f32 %v1225, %v1137
        %v1258 = vadd.f32 %v1226, %v1142
        %v1259 = vadd.f32 %v1227, %v1145
        %v1260 = vadd.f32 %v1228, %v1150
        %v1261 = vadd.f32 %v1229, %v1153
        %v1262 = vadd.f32 %v1230, %v1158
        %v1263 = vadd.f32 %v1231, %v1161
        %v1264 = vadd.f32 %v1232, %v1166
        %v1265 = vadd.f32 %v1233, %v1169
        %v1266 = vadd.f32 %v1234, %v1174
        %v1267 = vadd.f32 %v1235, %v1177
        %v1268 = vadd.f32 %v1236, %v1182
        %v1269 = vadd.f32 %v1237, %v1185
        %v1270 = vadd.f32 %v1238, %v1190
        %v1271 = vadd.f32 %v1239, %v1193
        %v1272 = vadd.f32 %v1240, %v1198
        %v1273 = vadd.f32 %v1241, %v1201
        %v1274 = vadd.f32 %v1242, %v1206
        %v1275 = vadd.f32 %v1243, %v1209
        %1276 = vst [vmem:[#allocation2] sm:$0xff] %v1244
        %1277 = vst [vmem:[#allocation2 + $0x8] sm:$0xff] %v1245
        %1278 = vst [vmem:[#allocation2 + $0x10] sm:$0xff] %v1246
        %1279 = vst [vmem:[#allocation2 + $0x18] sm:$0xff] %v1247
        %1280 = vst [vmem:[#allocation2 + $0x20] sm:$0xff] %v1248
        %1281 = vst [vmem:[#allocation2 + $0x28] sm:$0xff] %v1249
        %1282 = vst [vmem:[#allocation2 + $0x30] sm:$0xff] %v1250
        %1283 = vst [vmem:[#allocation2 + $0x38] sm:$0xff] %v1251
        %1284 = vst [vmem:[#allocation2 + $0x40] sm:$0xff] %v1252
        %1285 = vst [vmem:[#allocation2 + $0x48] sm:$0xff] %v1253
        %1286 = vst [vmem:[#allocation2 + $0x50] sm:$0xff] %v1254
        %1287 = vst [vmem:[#allocation2 + $0x58] sm:$0xff] %v1255
        %1288 = vst [vmem:[#allocation2 + $0x60] sm:$0xff] %v1256
        %1289 = vst [vmem:[#allocation2 + $0x68] sm:$0xff] %v1257
        %1290 = vst [vmem:[#allocation2 + $0x70] sm:$0xff] %v1258
        %1291 = vst [vmem:[#allocation2 + $0x78] sm:$0xff] %v1259
        %1292 = vst [vmem:[#allocation2 + $0x80] sm:$0xff] %v1260
        %1293 = vst [vmem:[#allocation2 + $0x88] sm:$0xff] %v1261
        %1294 = vst [vmem:[#allocation2 + $0x90] sm:$0xff] %v1262
        %1295 = vst [vmem:[#allocation2 + $0x98] sm:$0xff] %v1263
        %1296 = vst [vmem:[#allocation2 + $0xa0] sm:$0xff] %v1264
        %1297 = vst [vmem:[#allocation2 + $0xa8] sm:$0xff] %v1265
        %1298 = vst [vmem:[#allocation2 + $0xb0] sm:$0xff] %v1266
        %1299 = vst [vmem:[#allocation2 + $0xb8] sm:$0xff] %v1267
        %1300 = vst [vmem:[#allocation2 + $0xc0] sm:$0xff] %v1268
        %1301 = vst [vmem:[#allocation2 + $0xc8] sm:$0xff] %v1269
        %1302 = vst [vmem:[#allocation2 + $0xd0] sm:$0xff] %v1270
        %1303 = vst [vmem:[#allocation2 + $0xd8] sm:$0xff] %v1271
        %1304 = vst [vmem:[#allocation2 + $0xe0] sm:$0xff] %v1272
        %1305 = vst [vmem:[#allocation2 + $0xe8] sm:$0xff] %v1273
        %1306 = vst [vmem:[#allocation2 + $0xf0] sm:$0xff] %v1274
        %1307 = vst [vmem:[#allocation2 + $0xf8] sm:$0xff] %v1275
        %vm1324 = vcmask 1042432
        %vm1325 = vcmask 1046532
        %vm1326 = vmor %vm1324, %vm1325
        %v1327 = vrot.slane %v182, 5
        %v1328 = vrot.slane %v1327, 4
        %v1329 = vrot.slane %v183, 5
        %v1330 = vsel %vm1326, %v1328, %v1329
        %v1331 = vrot.slane %v1329, 4
        %v1332 = vrot.slane %v184, 5
        %v1333 = vsel %vm1326, %v1331, %v1332
        %v1334 = vrot.slane %v185, 5
        %v1335 = vrot.slane %v1334, 4
        %v1336 = vrot.slane %v186, 5
        %v1337 = vsel %vm1326, %v1335, %v1336
        %v1338 = vrot.slane %v1336, 4
        %v1339 = vrot.slane %v187, 5
        %v1340 = vsel %vm1326, %v1338, %v1339
        %v1341 = vrot.slane %v188, 5
        %v1342 = vrot.slane %v1341, 4
        %v1343 = vrot.slane %v189, 5
        %v1344 = vsel %vm1326, %v1342, %v1343
        %v1345 = vrot.slane %v1343, 4
        %v1346 = vrot.slane %v190, 5
        %v1347 = vsel %vm1326, %v1345, %v1346
        %v1348 = vrot.slane %v191, 5
        %v1349 = vrot.slane %v1348, 4
        %v1350 = vrot.slane %v192, 5
        %v1351 = vsel %vm1326, %v1349, %v1350
        %v1352 = vrot.slane %v1350, 4
        %v1353 = vrot.slane %v193, 5
        %v1354 = vsel %vm1326, %v1352, %v1353
        %v1355 = vrot.slane %v194, 5
        %v1356 = vrot.slane %v1355, 4
        %v1357 = vrot.slane %v195, 5
        %v1358 = vsel %vm1326, %v1356, %v1357
        %v1359 = vrot.slane %v1357, 4
        %v1360 = vrot.slane %v196, 5
        %v1361 = vsel %vm1326, %v1359, %v1360
        %v1362 = vrot.slane %v197, 5
        %v1363 = vrot.slane %v1362, 4
        %v1364 = vrot.slane %v198, 5
        %v1365 = vsel %vm1326, %v1363, %v1364
        %v1366 = vrot.slane %v1364, 4
        %v1367 = vrot.slane %v199, 5
        %v1368 = vsel %vm1326, %v1366, %v1367
        %v1369 = vrot.slane %v200, 5
        %v1370 = vrot.slane %v1369, 4
        %v1371 = vrot.slane %v201, 5
        %v1372 = vsel %vm1326, %v1370, %v1371
        %v1373 = vrot.slane %v1371, 4
        %v1374 = vrot.slane %v202, 5
        %v1375 = vsel %vm1326, %v1373, %v1374
        %v1376 = vrot.slane %v203, 5
        %v1377 = vrot.slane %v1376, 4
        %v1378 = vrot.slane %v204, 5
        %v1379 = vsel %vm1326, %v1377, %v1378
        %v1380 = vrot.slane %v1378, 4
        %v1381 = vrot.slane %v205, 5
        %v1382 = vsel %vm1326, %v1380, %v1381
        %v1383 = vrot.slane %v206, 5
        %v1384 = vrot.slane %v1383, 4
        %v1385 = vrot.slane %v207, 5
        %v1386 = vsel %vm1326, %v1384, %v1385
        %v1387 = vrot.slane %v1385, 4
        %v1388 = vrot.slane %v208, 5
        %v1389 = vsel %vm1326, %v1387, %v1388
        %v1390 = vrot.slane %v209, 5
        %v1391 = vrot.slane %v1390, 4
        %v1392 = vrot.slane %v210, 5
        %v1393 = vsel %vm1326, %v1391, %v1392
        %v1394 = vrot.slane %v1392, 4
        %v1395 = vrot.slane %v211, 5
        %v1396 = vsel %vm1326, %v1394, %v1395
        %v1397 = vrot.slane %v212, 5
        %v1398 = vrot.slane %v1397, 4
        %v1399 = vrot.slane %v213, 5
        %v1400 = vsel %vm1326, %v1398, %v1399
        %v1401 = vrot.slane %v1399, 4
        %v1402 = vrot.slane %v214, 5
        %v1403 = vsel %vm1326, %v1401, %v1402
        %v1404 = vrot.slane %v215, 5
        %v1405 = vrot.slane %v1404, 4
        %v1406 = vrot.slane %v216, 5
        %v1407 = vsel %vm1326, %v1405, %v1406
        %v1408 = vrot.slane %v1406, 4
        %v1409 = vrot.slane %v217, 5
        %v1410 = vsel %vm1326, %v1408, %v1409
        %v1411 = vrot.slane %v218, 5
        %v1412 = vrot.slane %v1411, 4
        %v1413 = vrot.slane %v219, 5
        %v1414 = vsel %vm1326, %v1412, %v1413
        %v1415 = vrot.slane %v1413, 4
        %v1416 = vrot.slane %v220, 5
        %v1417 = vsel %vm1326, %v1415, %v1416
        %v1418 = vrot.slane %v221, 5
        %v1419 = vrot.slane %v1418, 4
        %v1420 = vrot.slane %v222, 5
        %v1421 = vsel %vm1326, %v1419, %v1420
        %v1422 = vrot.slane %v1420, 4
        %v1423 = vrot.slane %v223, 5
        %v1424 = vsel %vm1326, %v1422, %v1423
        %v1425 = vrot.slane %v224, 5
        %v1426 = vrot.slane %v1425, 4
        %v1427 = vrot.slane %v225, 5
        %v1428 = vsel %vm1326, %v1426, %v1427
        %v1429 = vrot.slane %v1427, 4
        %v1430 = vrot.slane %v226, 5
        %v1431 = vsel %vm1326, %v1429, %v1430
        %v1432 = vrot.slane %v227, 5
        %v1433 = vrot.slane %v1432, 4
        %v1434 = vrot.slane %v228, 5
        %v1435 = vsel %vm1326, %v1433, %v1434
        %v1436 = vrot.slane %v1434, 4
        %v1437 = vrot.slane %v229, 5
        %v1438 = vsel %vm1326, %v1436, %v1437
        %s1439 = scalar_lea.vmem %s1, 4
        %v1440 = vld [vmem:[%s1439] sm:$0x3]
        %v1441 = vunpack.c.l.b16 %v1330
        %v1442 = vunpack.c.l.b16 %v1333
        %v1443 = vunpack.c.l.b16 %v1337
        %v1444 = vunpack.c.l.b16 %v1340
        %v1445 = vunpack.c.l.b16 %v1344
        %v1446 = vunpack.c.l.b16 %v1347
        %v1447 = vunpack.c.l.b16 %v1351
        %v1448 = vunpack.c.l.b16 %v1354
        %v1449 = vunpack.c.l.b16 %v1358
        %v1450 = vunpack.c.l.b16 %v1361
        %v1451 = vunpack.c.l.b16 %v1365
        %v1452 = vunpack.c.l.b16 %v1368
        %v1453 = vunpack.c.l.b16 %v1372
        %v1454 = vunpack.c.l.b16 %v1375
        %v1455 = vunpack.c.l.b16 %v1379
        %v1456 = vunpack.c.l.b16 %v1382
        %v1457 = vunpack.c.l.b16 %v1386
        %v1458 = vunpack.c.l.b16 %v1389
        %v1459 = vunpack.c.l.b16 %v1393
        %v1460 = vunpack.c.l.b16 %v1396
        %v1461 = vunpack.c.l.b16 %v1400
        %v1462 = vunpack.c.l.b16 %v1403
        %v1463 = vunpack.c.l.b16 %v1407
        %v1464 = vunpack.c.l.b16 %v1410
        %v1465 = vunpack.c.l.b16 %v1414
        %v1466 = vunpack.c.l.b16 %v1417
        %v1467 = vunpack.c.l.b16 %v1421
        %v1468 = vunpack.c.l.b16 %v1424
        %v1469 = vunpack.c.l.b16 %v1428
        %v1470 = vunpack.c.l.b16 %v1431
        %v1471 = vunpack.c.l.b16 %v1435
        %v1472 = vunpack.c.l.b16 %v1438
        %v1473 = vpack.c.b16 %v1442, %v1441
        %v1474 = vpack.c.b16 %v1444, %v1443
        %v1475 = vpack.c.b16 %v1446, %v1445
        %v1476 = vpack.c.b16 %v1448, %v1447
        %v1477 = vpack.c.b16 %v1450, %v1449
        %v1478 = vpack.c.b16 %v1452, %v1451
        %v1479 = vpack.c.b16 %v1454, %v1453
        %v1480 = vpack.c.b16 %v1456, %v1455
        %v1481 = vpack.c.b16 %v1458, %v1457
        %v1482 = vpack.c.b16 %v1460, %v1459
        %v1483 = vpack.c.b16 %v1462, %v1461
        %v1484 = vpack.c.b16 %v1464, %v1463
        %v1485 = vpack.c.b16 %v1466, %v1465
        %v1486 = vpack.c.b16 %v1468, %v1467
        %v1487 = vpack.c.b16 %v1470, %v1469
        %v1488 = vpack.c.b16 %v1472, %v1471
        %v1490 = vsel %vm317, %v1473, 0
        %v1493 = vsel %vm317, %v1474, 0
        %v1496 = vsel %vm317, %v1475, 0
        %v1499 = vsel %vm317, %v1476, 0
        %v1502 = vsel %vm317, %v1477, 0
        %v1505 = vsel %vm317, %v1478, 0
        %v1508 = vsel %vm317, %v1479, 0
        %v1511 = vsel %vm317, %v1480, 0
        %v1514 = vsel %vm317, %v1481, 0
        %v1517 = vsel %vm317, %v1482, 0
        %v1520 = vsel %vm317, %v1483, 0
        %v1523 = vsel %vm317, %v1484, 0
        %v1526 = vsel %vm317, %v1485, 0
        %v1529 = vsel %vm317, %v1486, 0
        %v1532 = vsel %vm317, %v1487, 0
        %v1535 = vsel %vm317, %v1488, 0
        %v1538 = vsel %vm366, %v1440, 0
        %1540 = vmatprep.subr.bf16.mxu0 0
        %1541 = vmatpush1.bf16.msra.mxu0 %v1538
        %1542 = vmatprep.subr.bf16.mxu0 0
        %1543 = vmatpush1.bf16.msra.mxu0 0
        %1544 = vmatprep.subr.bf16.mxu0 0
        %1545 = vmatpush1.bf16.msra.mxu0 0
        %1546 = vmatprep.subr.bf16.mxu0 0
        %1547 = vmatpush1.bf16.msra.mxu0 0
        %1548 = vmatprep.subr.bf16.mxu0 0
        %1549 = vmatpush1.bf16.msra.mxu0 0
        %1550 = vmatprep.subr.bf16.mxu0 0
        %1551 = vmatpush1.bf16.msra.mxu0 0
        %1552 = vmatprep.subr.bf16.mxu0 0
        %1553 = vmatpush1.bf16.msra.mxu0 0
        %1554 = vmatprep.subr.bf16.mxu0 0
        %1555 = vmatpush1.bf16.msra.mxu0 0
        %1556 = vmatprep.subr.bf16.mxu0 0
        %1557 = vmatpush1.bf16.msra.mxu0 0
        %1558 = vmatprep.subr.bf16.mxu0 0
        %1559 = vmatpush1.bf16.msra.mxu0 0
        %1560 = vmatprep.subr.bf16.mxu0 0
        %1561 = vmatpush1.bf16.msra.mxu0 0
        %1562 = vmatprep.subr.bf16.mxu0 0
        %1563 = vmatpush1.bf16.msra.mxu0 0
        %1564 = vmatprep.subr.bf16.mxu0 0
        %1565 = vmatpush1.bf16.msra.mxu0 0
        %1566 = vmatprep.subr.bf16.mxu0 0
        %1567 = vmatpush1.bf16.msra.mxu0 0
        %1568 = vmatprep.subr.bf16.mxu0 0
        %1569 = vmatpush1.bf16.msra.mxu0 0
        %1570 = vmatprep.subr.bf16.mxu0 0
        %1571 = vmatpush1.bf16.msra.mxu0 0
        %1572 = vmatprep.mubr.bf16.mxu0 0
        %1573 = vmatmul.mubr.bf16.gmra.mrb[0].mxu0 %v1490
        %v1574 = vpop.f32.mrb[0].mxu0
        %v1575 = vadd.f32 0.0, %v1574
        %v1576 = vpop.f32.mrb[0].mxu0
        %v1577 = vpop.f32.mrb[0].mxu0
        %v1578 = vadd.f32 0.0, %v1577
        %v1579 = vpop.f32.mrb[0].mxu0
        %1580 = vmatprep.mubr.bf16.mxu0 0
        %1581 = vmatmul.mubr.bf16.gmra.mrb[0].mxu0 %v1493
        %v1582 = vpop.f32.mrb[0].mxu0
        %v1583 = vadd.f32 0.0, %v1582
        %v1584 = vpop.f32.mrb[0].mxu0
        %v1585 = vpop.f32.mrb[0].mxu0
        %v1586 = vadd.f32 0.0, %v1585
        %v1587 = vpop.f32.mrb[0].mxu0
        %1588 = vmatprep.mubr.bf16.mxu0 0
        %1589 = vmatmul.mubr.bf16.gmra.mrb[0].mxu0 %v1496
        %v1590 = vpop.f32.mrb[0].mxu0
        %v1591 = vadd.f32 0.0, %v1590
        %v1592 = vpop.f32.mrb[0].mxu0
        %v1593 = vpop.f32.mrb[0].mxu0
        %v1594 = vadd.f32 0.0, %v1593
        %v1595 = vpop.f32.mrb[0].mxu0
        %1596 = vmatprep.mubr.bf16.mxu0 0
        %1597 = vmatmul.mubr.bf16.gmra.mrb[0].mxu0 %v1499
        %v1598 = vpop.f32.mrb[0].mxu0
        %v1599 = vadd.f32 0.0, %v1598
        %v1600 = vpop.f32.mrb[0].mxu0
        %v1601 = vpop.f32.mrb[0].mxu0
        %v1602 = vadd.f32 0.0, %v1601
        %v1603 = vpop.f32.mrb[0].mxu0
        %1604 = vmatprep.mubr.bf16.mxu0 0
        %1605 = vmatmul.mubr.bf16.gmra.mrb[0].mxu0 %v1502
        %v1606 = vpop.f32.mrb[0].mxu0
        %v1607 = vadd.f32 0.0, %v1606
        %v1608 = vpop.f32.mrb[0].mxu0
        %v1609 = vpop.f32.mrb[0].mxu0
        %v1610 = vadd.f32 0.0, %v1609
        %v1611 = vpop.f32.mrb[0].mxu0
        %1612 = vmatprep.mubr.bf16.mxu0 0
        %1613 = vmatmul.mubr.bf16.gmra.mrb[0].mxu0 %v1505
        %v1614 = vpop.f32.mrb[0].mxu0
        %v1615 = vadd.f32 0.0, %v1614
        %v1616 = vpop.f32.mrb[0].mxu0
        %v1617 = vpop.f32.mrb[0].mxu0
        %v1618 = vadd.f32 0.0, %v1617
        %v1619 = vpop.f32.mrb[0].mxu0
        %1620 = vmatprep.mubr.bf16.mxu0 0
        %1621 = vmatmul.mubr.bf16.gmra.mrb[0].mxu0 %v1508
        %v1622 = vpop.f32.mrb[0].mxu0
        %v1623 = vadd.f32 0.0, %v1622
        %v1624 = vpop.f32.mrb[0].mxu0
        %v1625 = vpop.f32.mrb[0].mxu0
        %v1626 = vadd.f32 0.0, %v1625
        %v1627 = vpop.f32.mrb[0].mxu0
        %1628 = vmatprep.mubr.bf16.mxu0 0
        %1629 = vmatmul.mubr.bf16.gmra.mrb[0].mxu0 %v1511
        %v1630 = vpop.f32.mrb[0].mxu0
        %v1631 = vadd.f32 0.0, %v1630
        %v1632 = vpop.f32.mrb[0].mxu0
        %v1633 = vpop.f32.mrb[0].mxu0
        %v1634 = vadd.f32 0.0, %v1633
        %v1635 = vpop.f32.mrb[0].mxu0
        %1636 = vmatprep.mubr.bf16.mxu0 0
        %1637 = vmatmul.mubr.bf16.gmra.mrb[0].mxu0 %v1514
        %v1638 = vpop.f32.mrb[0].mxu0
        %v1639 = vadd.f32 0.0, %v1638
        %v1640 = vpop.f32.mrb[0].mxu0
        %v1641 = vpop.f32.mrb[0].mxu0
        %v1642 = vadd.f32 0.0, %v1641
        %v1643 = vpop.f32.mrb[0].mxu0
        %1644 = vmatprep.mubr.bf16.mxu0 0
        %1645 = vmatmul.mubr.bf16.gmra.mrb[0].mxu0 %v1517
        %v1646 = vpop.f32.mrb[0].mxu0
        %v1647 = vadd.f32 0.0, %v1646
        %v1648 = vpop.f32.mrb[0].mxu0
        %v1649 = vpop.f32.mrb[0].mxu0
        %v1650 = vadd.f32 0.0, %v1649
        %v1651 = vpop.f32.mrb[0].mxu0
        %1652 = vmatprep.mubr.bf16.mxu0 0
        %1653 = vmatmul.mubr.bf16.gmra.mrb[0].mxu0 %v1520
        %v1654 = vpop.f32.mrb[0].mxu0
        %v1655 = vadd.f32 0.0, %v1654
        %v1656 = vpop.f32.mrb[0].mxu0
        %v1657 = vpop.f32.mrb[0].mxu0
        %v1658 = vadd.f32 0.0, %v1657
        %v1659 = vpop.f32.mrb[0].mxu0
        %1660 = vmatprep.mubr.bf16.mxu0 0
        %1661 = vmatmul.mubr.bf16.gmra.mrb[0].mxu0 %v1523
        %v1662 = vpop.f32.mrb[0].mxu0
        %v1663 = vadd.f32 0.0, %v1662
        %v1664 = vpop.f32.mrb[0].mxu0
        %v1665 = vpop.f32.mrb[0].mxu0
        %v1666 = vadd.f32 0.0, %v1665
        %v1667 = vpop.f32.mrb[0].mxu0
        %1668 = vmatprep.mubr.bf16.mxu0 0
        %1669 = vmatmul.mubr.bf16.gmra.mrb[0].mxu0 %v1526
        %v1670 = vpop.f32.mrb[0].mxu0
        %v1671 = vadd.f32 0.0, %v1670
        %v1672 = vpop.f32.mrb[0].mxu0
        %v1673 = vpop.f32.mrb[0].mxu0
        %v1674 = vadd.f32 0.0, %v1673
        %v1675 = vpop.f32.mrb[0].mxu0
        %1676 = vmatprep.mubr.bf16.mxu0 0
        %1677 = vmatmul.mubr.bf16.gmra.mrb[0].mxu0 %v1529
        %v1678 = vpop.f32.mrb[0].mxu0
        %v1679 = vadd.f32 0.0, %v1678
        %v1680 = vpop.f32.mrb[0].mxu0
        %v1681 = vpop.f32.mrb[0].mxu0
        %v1682 = vadd.f32 0.0, %v1681
        %v1683 = vpop.f32.mrb[0].mxu0
        %1684 = vmatprep.mubr.bf16.mxu0 0
        %1685 = vmatmul.mubr.bf16.gmra.mrb[0].mxu0 %v1532
        %v1686 = vpop.f32.mrb[0].mxu0
        %v1687 = vadd.f32 0.0, %v1686
        %v1688 = vpop.f32.mrb[0].mxu0
        %v1689 = vpop.f32.mrb[0].mxu0
        %v1690 = vadd.f32 0.0, %v1689
        %v1691 = vpop.f32.mrb[0].mxu0
        %1692 = vmatprep.mubr.bf16.mxu0 0
        %1693 = vmatmul.mubr.bf16.gmra.mrb[0].mxu0 %v1535
        %v1694 = vpop.f32.mrb[0].mxu0
        %v1695 = vadd.f32 0.0, %v1694
        %v1696 = vpop.f32.mrb[0].mxu0
        %v1697 = vpop.f32.mrb[0].mxu0
        %v1698 = vadd.f32 0.0, %v1697
        %v1699 = vpop.f32.mrb[0].mxu0
        %1700 = vdwg.mxu0
        %v1701 = vld [vmem:[#allocation2] sm:$0xff]
        %v1702 = vld [vmem:[#allocation2 + $0x8] sm:$0xff]
        %v1703 = vld [vmem:[#allocation2 + $0x10] sm:$0xff]
        %v1704 = vld [vmem:[#allocation2 + $0x18] sm:$0xff]
        %v1705 = vld [vmem:[#allocation2 + $0x20] sm:$0xff]
        %v1706 = vld [vmem:[#allocation2 + $0x28] sm:$0xff]
        %v1707 = vld [vmem:[#allocation2 + $0x30] sm:$0xff]
        %v1708 = vld [vmem:[#allocation2 + $0x38] sm:$0xff]
        %v1709 = vld [vmem:[#allocation2 + $0x40] sm:$0xff]
        %v1710 = vld [vmem:[#allocation2 + $0x48] sm:$0xff]
        %v1711 = vld [vmem:[#allocation2 + $0x50] sm:$0xff]
        %v1712 = vld [vmem:[#allocation2 + $0x58] sm:$0xff]
        %v1713 = vld [vmem:[#allocation2 + $0x60] sm:$0xff]
        %v1714 = vld [vmem:[#allocation2 + $0x68] sm:$0xff]
        %v1715 = vld [vmem:[#allocation2 + $0x70] sm:$0xff]
        %v1716 = vld [vmem:[#allocation2 + $0x78] sm:$0xff]
        %v1717 = vld [vmem:[#allocation2 + $0x80] sm:$0xff]
        %v1718 = vld [vmem:[#allocation2 + $0x88] sm:$0xff]
        %v1719 = vld [vmem:[#allocation2 + $0x90] sm:$0xff]
        %v1720 = vld [vmem:[#allocation2 + $0x98] sm:$0xff]
        %v1721 = vld [vmem:[#allocation2 + $0xa0] sm:$0xff]
        %v1722 = vld [vmem:[#allocation2 + $0xa8] sm:$0xff]
        %v1723 = vld [vmem:[#allocation2 + $0xb0] sm:$0xff]
        %v1724 = vld [vmem:[#allocation2 + $0xb8] sm:$0xff]
        %v1725 = vld [vmem:[#allocation2 + $0xc0] sm:$0xff]
        %v1726 = vld [vmem:[#allocation2 + $0xc8] sm:$0xff]
        %v1727 = vld [vmem:[#allocation2 + $0xd0] sm:$0xff]
        %v1728 = vld [vmem:[#allocation2 + $0xd8] sm:$0xff]
        %v1729 = vld [vmem:[#allocation2 + $0xe0] sm:$0xff]
        %v1730 = vld [vmem:[#allocation2 + $0xe8] sm:$0xff]
        %v1731 = vld [vmem:[#allocation2 + $0xf0] sm:$0xff]
        %v1732 = vld [vmem:[#allocation2 + $0xf8] sm:$0xff]
        %v1733 = vadd.f32 %v1701, %v1575
        %v1734 = vadd.f32 %v1702, %v1578
        %v1735 = vadd.f32 %v1703, %v1583
        %v1736 = vadd.f32 %v1704, %v1586
        %v1737 = vadd.f32 %v1705, %v1591
        %v1738 = vadd.f32 %v1706, %v1594
        %v1739 = vadd.f32 %v1707, %v1599
        %v1740 = vadd.f32 %v1708, %v1602
        %v1741 = vadd.f32 %v1709, %v1607
        %v1742 = vadd.f32 %v1710, %v1610
        %v1743 = vadd.f32 %v1711, %v1615
        %v1744 = vadd.f32 %v1712, %v1618
        %v1745 = vadd.f32 %v1713, %v1623
        %v1746 = vadd.f32 %v1714, %v1626
        %v1747 = vadd.f32 %v1715, %v1631
        %v1748 = vadd.f32 %v1716, %v1634
        %v1749 = vadd.f32 %v1717, %v1639
        %v1750 = vadd.f32 %v1718, %v1642
        %v1751 = vadd.f32 %v1719, %v1647
        %v1752 = vadd.f32 %v1720, %v1650
        %v1753 = vadd.f32 %v1721, %v1655
        %v1754 = vadd.f32 %v1722, %v1658
        %v1755 = vadd.f32 %v1723, %v1663
        %v1756 = vadd.f32 %v1724, %v1666
        %v1757 = vadd.f32 %v1725, %v1671
        %v1758 = vadd.f32 %v1726, %v1674
        %v1759 = vadd.f32 %v1727, %v1679
        %v1760 = vadd.f32 %v1728, %v1682
        %v1761 = vadd.f32 %v1729, %v1687
        %v1762 = vadd.f32 %v1730, %v1690
        %v1763 = vadd.f32 %v1731, %v1695
        %v1764 = vadd.f32 %v1732, %v1698
        %1765 = vst [vmem:[#allocation2] sm:$0xff] %v1733
        %1766 = vst [vmem:[#allocation2 + $0x8] sm:$0xff] %v1734
        %1767 = vst [vmem:[#allocation2 + $0x10] sm:$0xff] %v1735
        %1768 = vst [vmem:[#allocation2 + $0x18] sm:$0xff] %v1736
        %1769 = vst [vmem:[#allocation2 + $0x20] sm:$0xff] %v1737
        %1770 = vst [vmem:[#allocation2 + $0x28] sm:$0xff] %v1738
        %1771 = vst [vmem:[#allocation2 + $0x30] sm:$0xff] %v1739
        %1772 = vst [vmem:[#allocation2 + $0x38] sm:$0xff] %v1740
        %1773 = vst [vmem:[#allocation2 + $0x40] sm:$0xff] %v1741
        %1774 = vst [vmem:[#allocation2 + $0x48] sm:$0xff] %v1742
        %1775 = vst [vmem:[#allocation2 + $0x50] sm:$0xff] %v1743
        %1776 = vst [vmem:[#allocation2 + $0x58] sm:$0xff] %v1744
        %1777 = vst [vmem:[#allocation2 + $0x60] sm:$0xff] %v1745
        %1778 = vst [vmem:[#allocation2 + $0x68] sm:$0xff] %v1746
        %1779 = vst [vmem:[#allocation2 + $0x70] sm:$0xff] %v1747
        %1780 = vst [vmem:[#allocation2 + $0x78] sm:$0xff] %v1748
        %1781 = vst [vmem:[#allocation2 + $0x80] sm:$0xff] %v1749
        %1782 = vst [vmem:[#allocation2 + $0x88] sm:$0xff] %v1750
        %1783 = vst [vmem:[#allocation2 + $0x90] sm:$0xff] %v1751
        %1784 = vst [vmem:[#allocation2 + $0x98] sm:$0xff] %v1752
        %1785 = vst [vmem:[#allocation2 + $0xa0] sm:$0xff] %v1753
        %1786 = vst [vmem:[#allocation2 + $0xa8] sm:$0xff] %v1754
        %1787 = vst [vmem:[#allocation2 + $0xb0] sm:$0xff] %v1755
        %1788 = vst [vmem:[#allocation2 + $0xb8] sm:$0xff] %v1756
        %1789 = vst [vmem:[#allocation2 + $0xc0] sm:$0xff] %v1757
        %1790 = vst [vmem:[#allocation2 + $0xc8] sm:$0xff] %v1758
        %1791 = vst [vmem:[#allocation2 + $0xd0] sm:$0xff] %v1759
        %1792 = vst [vmem:[#allocation2 + $0xd8] sm:$0xff] %v1760
        %1793 = vst [vmem:[#allocation2 + $0xe0] sm:$0xff] %v1761
        %1794 = vst [vmem:[#allocation2 + $0xe8] sm:$0xff] %v1762
        %1795 = vst [vmem:[#allocation2 + $0xf0] sm:$0xff] %v1763
        %1796 = vst [vmem:[#allocation2 + $0xf8] sm:$0xff] %v1764
        %s1797 = scalar_lea.vmem %s1, 6
        %v1798 = vld [vmem:[%s1797] sm:$0x3]
        %v1801 = vunpack.c.l.b16 %v230
        %v1802 = vunpack.c.l.b16 %v231
        %v1803 = vpack.c.b16 %v1802, %v1801
        %v1805 = vsel %vm317, %v1803, 0
        %v1808 = vsel %vm366, %v1798, 0
        %1810 = vmatprep.subr.bf16.mxu0 0
        %1811 = vmatpush1.bf16.msra.mxu0 %v1808
        %1812 = vmatprep.subr.bf16.mxu0 0
        %1813 = vmatpush1.bf16.msra.mxu0 0
        %1814 = vmatprep.subr.bf16.mxu0 0
        %1815 = vmatpush1.bf16.msra.mxu0 0
        %1816 = vmatprep.subr.bf16.mxu0 0
        %1817 = vmatpush1.bf16.msra.mxu0 0
        %1818 = vmatprep.subr.bf16.mxu0 0
        %1819 = vmatpush1.bf16.msra.mxu0 0
        %1820 = vmatprep.subr.bf16.mxu0 0
        %1821 = vmatpush1.bf16.msra.mxu0 0
        %1822 = vmatprep.subr.bf16.mxu0 0
        %1823 = vmatpush1.bf16.msra.mxu0 0
        %1824 = vmatprep.subr.bf16.mxu0 0
        %1825 = vmatpush1.bf16.msra.mxu0 0
        %1826 = vmatprep.subr.bf16.mxu0 0
        %1827 = vmatpush1.bf16.msra.mxu0 0
        %1828 = vmatprep.subr.bf16.mxu0 0
        %1829 = vmatpush1.bf16.msra.mxu0 0
        %1830 = vmatprep.subr.bf16.mxu0 0
        %1831 = vmatpush1.bf16.msra.mxu0 0
        %1832 = vmatprep.subr.bf16.mxu0 0
        %1833 = vmatpush1.bf16.msra.mxu0 0
        %1834 = vmatprep.subr.bf16.mxu0 0
        %1835 = vmatpush1.bf16.msra.mxu0 0
        %1836 = vmatprep.subr.bf16.mxu0 0
        %1837 = vmatpush1.bf16.msra.mxu0 0
        %1838 = vmatprep.subr.bf16.mxu0 0
        %1839 = vmatpush1.bf16.msra.mxu0 0
        %1840 = vmatprep.subr.bf16.mxu0 0
        %1841 = vmatpush1.bf16.msra.mxu0 0
        %1842 = vmatprep.mubr.bf16.mxu0 0
        %1843 = vmatmul.mubr.bf16.gmra.mrb[0].mxu0 %v322
        %v1844 = vpop.f32.mrb[0].mxu0
        %v1845 = vadd.f32 0.0, %v1844
        %v1846 = vpop.f32.mrb[0].mxu0
        %v1847 = vpop.f32.mrb[0].mxu0
        %v1848 = vadd.f32 0.0, %v1847
        %v1849 = vpop.f32.mrb[0].mxu0
        %1850 = vmatprep.mubr.bf16.mxu0 0
        %1851 = vmatmul.mubr.bf16.gmra.mrb[0].mxu0 %v325
        %v1852 = vpop.f32.mrb[0].mxu0
        %v1853 = vadd.f32 0.0, %v1852
        %v1854 = vpop.f32.mrb[0].mxu0
        %v1855 = vpop.f32.mrb[0].mxu0
        %v1856 = vadd.f32 0.0, %v1855
        %v1857 = vpop.f32.mrb[0].mxu0
        %1858 = vmatprep.mubr.bf16.mxu0 0
        %1859 = vmatmul.mubr.bf16.gmra.mrb[0].mxu0 %v328
        %v1860 = vpop.f32.mrb[0].mxu0
        %v1861 = vadd.f32 0.0, %v1860
        %v1862 = vpop.f32.mrb[0].mxu0
        %v1863 = vpop.f32.mrb[0].mxu0
        %v1864 = vadd.f32 0.0, %v1863
        %v1865 = vpop.f32.mrb[0].mxu0
        %1866 = vmatprep.mubr.bf16.mxu0 0
        %1867 = vmatmul.mubr.bf16.gmra.mrb[0].mxu0 %v331
        %v1868 = vpop.f32.mrb[0].mxu0
        %v1869 = vadd.f32 0.0, %v1868
        %v1870 = vpop.f32.mrb[0].mxu0
        %v1871 = vpop.f32.mrb[0].mxu0
        %v1872 = vadd.f32 0.0, %v1871
        %v1873 = vpop.f32.mrb[0].mxu0
        %1874 = vmatprep.mubr.bf16.mxu0 0
        %1875 = vmatmul.mubr.bf16.gmra.mrb[0].mxu0 %v334
        %v1876 = vpop.f32.mrb[0].mxu0
        %v1877 = vadd.f32 0.0, %v1876
        %v1878 = vpop.f32.mrb[0].mxu0
        %v1879 = vpop.f32.mrb[0].mxu0
        %v1880 = vadd.f32 0.0, %v1879
        %v1881 = vpop.f32.mrb[0].mxu0
        %1882 = vmatprep.mubr.bf16.mxu0 0
        %1883 = vmatmul.mubr.bf16.gmra.mrb[0].mxu0 %v337
        %v1884 = vpop.f32.mrb[0].mxu0
        %v1885 = vadd.f32 0.0, %v1884
        %v1886 = vpop.f32.mrb[0].mxu0
        %v1887 = vpop.f32.mrb[0].mxu0
        %v1888 = vadd.f32 0.0, %v1887
        %v1889 = vpop.f32.mrb[0].mxu0
        %1890 = vmatprep.mubr.bf16.mxu0 0
        %1891 = vmatmul.mubr.bf16.gmra.mrb[0].mxu0 %v340
        %v1892 = vpop.f32.mrb[0].mxu0
        %v1893 = vadd.f32 0.0, %v1892
        %v1894 = vpop.f32.mrb[0].mxu0
        %v1895 = vpop.f32.mrb[0].mxu0
        %v1896 = vadd.f32 0.0, %v1895
        %v1897 = vpop.f32.mrb[0].mxu0
        %1898 = vmatprep.mubr.bf16.mxu0 0
        %1899 = vmatmul.mubr.bf16.gmra.mrb[0].mxu0 %v343
        %v1900 = vpop.f32.mrb[0].mxu0
        %v1901 = vadd.f32 0.0, %v1900
        %v1902 = vpop.f32.mrb[0].mxu0
        %v1903 = vpop.f32.mrb[0].mxu0
        %v1904 = vadd.f32 0.0, %v1903
        %v1905 = vpop.f32.mrb[0].mxu0
        %1906 = vmatprep.mubr.bf16.mxu0 0
        %1907 = vmatmul.mubr.bf16.gmra.mrb[0].mxu0 %v346
        %v1908 = vpop.f32.mrb[0].mxu0
        %v1909 = vadd.f32 0.0, %v1908
        %v1910 = vpop.f32.mrb[0].mxu0
        %v1911 = vpop.f32.mrb[0].mxu0
        %v1912 = vadd.f32 0.0, %v1911
        %v1913 = vpop.f32.mrb[0].mxu0
        %1914 = vmatprep.mubr.bf16.mxu0 0
        %1915 = vmatmul.mubr.bf16.gmra.mrb[0].mxu0 %v349
        %v1916 = vpop.f32.mrb[0].mxu0
        %v1917 = vadd.f32 0.0, %v1916
        %v1918 = vpop.f32.mrb[0].mxu0
        %v1919 = vpop.f32.mrb[0].mxu0
        %v1920 = vadd.f32 0.0, %v1919
        %v1921 = vpop.f32.mrb[0].mxu0
        %1922 = vmatprep.mubr.bf16.mxu0 0
        %1923 = vmatmul.mubr.bf16.gmra.mrb[0].mxu0 %v352
        %v1924 = vpop.f32.mrb[0].mxu0
        %v1925 = vadd.f32 0.0, %v1924
        %v1926 = vpop.f32.mrb[0].mxu0
        %v1927 = vpop.f32.mrb[0].mxu0
        %v1928 = vadd.f32 0.0, %v1927
        %v1929 = vpop.f32.mrb[0].mxu0
        %1930 = vmatprep.mubr.bf16.mxu0 0
        %1931 = vmatmul.mubr.bf16.gmra.mrb[0].mxu0 %v355
        %v1932 = vpop.f32.mrb[0].mxu0
        %v1933 = vadd.f32 0.0, %v1932
        %v1934 = vpop.f32.mrb[0].mxu0
        %v1935 = vpop.f32.mrb[0].mxu0
        %v1936 = vadd.f32 0.0, %v1935
        %v1937 = vpop.f32.mrb[0].mxu0
        %1938 = vmatprep.mubr.bf16.mxu0 0
        %1939 = vmatmul.mubr.bf16.gmra.mrb[0].mxu0 %v358
        %v1940 = vpop.f32.mrb[0].mxu0
        %v1941 = vadd.f32 0.0, %v1940
        %v1942 = vpop.f32.mrb[0].mxu0
        %v1943 = vpop.f32.mrb[0].mxu0
        %v1944 = vadd.f32 0.0, %v1943
        %v1945 = vpop.f32.mrb[0].mxu0
        %1946 = vmatprep.mubr.bf16.mxu0 0
        %1947 = vmatmul.mubr.bf16.gmra.mrb[0].mxu0 %v361
        %v1948 = vpop.f32.mrb[0].mxu0
        %v1949 = vadd.f32 0.0, %v1948
        %v1950 = vpop.f32.mrb[0].mxu0
        %v1951 = vpop.f32.mrb[0].mxu0
        %v1952 = vadd.f32 0.0, %v1951
        %v1953 = vpop.f32.mrb[0].mxu0
        %1954 = vmatprep.mubr.bf16.mxu0 0
        %1955 = vmatmul.mubr.bf16.gmra.mrb[0].mxu0 %v364
        %v1956 = vpop.f32.mrb[0].mxu0
        %v1957 = vadd.f32 0.0, %v1956
        %v1958 = vpop.f32.mrb[0].mxu0
        %v1959 = vpop.f32.mrb[0].mxu0
        %v1960 = vadd.f32 0.0, %v1959
        %v1961 = vpop.f32.mrb[0].mxu0
        %1962 = vmatprep.mubr.bf16.mxu0 0
        %1963 = vmatmul.mubr.bf16.gmra.mrb[0].mxu0 %v1805
        %v1964 = vpop.f32.mrb[0].mxu0
        %v1965 = vadd.f32 0.0, %v1964
        %v1966 = vpop.f32.mrb[0].mxu0
        %v1967 = vpop.f32.mrb[0].mxu0
        %v1968 = vadd.f32 0.0, %v1967
        %v1969 = vpop.f32.mrb[0].mxu0
        %1970 = vdwg.mxu0
        %v1971 = vld [vmem:[#allocation2] sm:$0xff]
        %v1972 = vld [vmem:[#allocation2 + $0x8] sm:$0xff]
        %v1973 = vld [vmem:[#allocation2 + $0x10] sm:$0xff]
        %v1974 = vld [vmem:[#allocation2 + $0x18] sm:$0xff]
        %v1975 = vld [vmem:[#allocation2 + $0x20] sm:$0xff]
        %v1976 = vld [vmem:[#allocation2 + $0x28] sm:$0xff]
        %v1977 = vld [vmem:[#allocation2 + $0x30] sm:$0xff]
        %v1978 = vld [vmem:[#allocation2 + $0x38] sm:$0xff]
        %v1979 = vld [vmem:[#allocation2 + $0x40] sm:$0xff]
        %v1980 = vld [vmem:[#allocation2 + $0x48] sm:$0xff]
        %v1981 = vld [vmem:[#allocation2 + $0x50] sm:$0xff]
        %v1982 = vld [vmem:[#allocation2 + $0x58] sm:$0xff]
        %v1983 = vld [vmem:[#allocation2 + $0x60] sm:$0xff]
        %v1984 = vld [vmem:[#allocation2 + $0x68] sm:$0xff]
        %v1985 = vld [vmem:[#allocation2 + $0x70] sm:$0xff]
        %v1986 = vld [vmem:[#allocation2 + $0x78] sm:$0xff]
        %v1987 = vld [vmem:[#allocation2 + $0x80] sm:$0xff]
        %v1988 = vld [vmem:[#allocation2 + $0x88] sm:$0xff]
        %v1989 = vld [vmem:[#allocation2 + $0x90] sm:$0xff]
        %v1990 = vld [vmem:[#allocation2 + $0x98] sm:$0xff]
        %v1991 = vld [vmem:[#allocation2 + $0xa0] sm:$0xff]
        %v1992 = vld [vmem:[#allocation2 + $0xa8] sm:$0xff]
        %v1993 = vld [vmem:[#allocation2 + $0xb0] sm:$0xff]
        %v1994 = vld [vmem:[#allocation2 + $0xb8] sm:$0xff]
        %v1995 = vld [vmem:[#allocation2 + $0xc0] sm:$0xff]
        %v1996 = vld [vmem:[#allocation2 + $0xc8] sm:$0xff]
        %v1997 = vld [vmem:[#allocation2 + $0xd0] sm:$0xff]
        %v1998 = vld [vmem:[#allocation2 + $0xd8] sm:$0xff]
        %v1999 = vld [vmem:[#allocation2 + $0xe0] sm:$0xff]
        %v2000 = vld [vmem:[#allocation2 + $0xe8] sm:$0xff]
        %v2001 = vld [vmem:[#allocation2 + $0xf0] sm:$0xff]
        %v2002 = vld [vmem:[#allocation2 + $0xf8] sm:$0xff]
        %v2003 = vadd.f32 %v1971, %v1845
        %v2004 = vadd.f32 %v1972, %v1848
        %v2005 = vadd.f32 %v1973, %v1853
        %v2006 = vadd.f32 %v1974, %v1856
        %v2007 = vadd.f32 %v1975, %v1861
        %v2008 = vadd.f32 %v1976, %v1864
        %v2009 = vadd.f32 %v1977, %v1869
        %v2010 = vadd.f32 %v1978, %v1872
        %v2011 = vadd.f32 %v1979, %v1877
        %v2012 = vadd.f32 %v1980, %v1880
        %v2013 = vadd.f32 %v1981, %v1885
        %v2014 = vadd.f32 %v1982, %v1888
        %v2015 = vadd.f32 %v1983, %v1893
        %v2016 = vadd.f32 %v1984, %v1896
        %v2017 = vadd.f32 %v1985, %v1901
        %v2018 = vadd.f32 %v1986, %v1904
        %v2019 = vadd.f32 %v1987, %v1909
        %v2020 = vadd.f32 %v1988, %v1912
        %v2021 = vadd.f32 %v1989, %v1917
        %v2022 = vadd.f32 %v1990, %v1920
        %v2023 = vadd.f32 %v1991, %v1925
        %v2024 = vadd.f32 %v1992, %v1928
        %v2025 = vadd.f32 %v1993, %v1933
        %v2026 = vadd.f32 %v1994, %v1936
        %v2027 = vadd.f32 %v1995, %v1941
        %v2028 = vadd.f32 %v1996, %v1944
        %v2029 = vadd.f32 %v1997, %v1949
        %v2030 = vadd.f32 %v1998, %v1952
        %v2031 = vadd.f32 %v1999, %v1957
        %v2032 = vadd.f32 %v2000, %v1960
        %v2033 = vadd.f32 %v2001, %v1965
        %v2034 = vadd.f32 %v2002, %v1968
        %2035 = vst [vmem:[#allocation2] sm:$0xff] %v2003
        %2036 = vst [vmem:[#allocation2 + $0x8] sm:$0xff] %v2004
        %2037 = vst [vmem:[#allocation2 + $0x10] sm:$0xff] %v2005
        %2038 = vst [vmem:[#allocation2 + $0x18] sm:$0xff] %v2006
        %2039 = vst [vmem:[#allocation2 + $0x20] sm:$0xff] %v2007
        %2040 = vst [vmem:[#allocation2 + $0x28] sm:$0xff] %v2008
        %2041 = vst [vmem:[#allocation2 + $0x30] sm:$0xff] %v2009
        %2042 = vst [vmem:[#allocation2 + $0x38] sm:$0xff] %v2010
        %2043 = vst [vmem:[#allocation2 + $0x40] sm:$0xff] %v2011
        %2044 = vst [vmem:[#allocation2 + $0x48] sm:$0xff] %v2012
        %2045 = vst [vmem:[#allocation2 + $0x50] sm:$0xff] %v2013
        %2046 = vst [vmem:[#allocation2 + $0x58] sm:$0xff] %v2014
        %2047 = vst [vmem:[#allocation2 + $0x60] sm:$0xff] %v2015
        %2048 = vst [vmem:[#allocation2 + $0x68] sm:$0xff] %v2016
        %2049 = vst [vmem:[#allocation2 + $0x70] sm:$0xff] %v2017
        %2050 = vst [vmem:[#allocation2 + $0x78] sm:$0xff] %v2018
        %2051 = vst [vmem:[#allocation2 + $0x80] sm:$0xff] %v2019
        %2052 = vst [vmem:[#allocation2 + $0x88] sm:$0xff] %v2020
        %2053 = vst [vmem:[#allocation2 + $0x90] sm:$0xff] %v2021
        %2054 = vst [vmem:[#allocation2 + $0x98] sm:$0xff] %v2022
        %2055 = vst [vmem:[#allocation2 + $0xa0] sm:$0xff] %v2023
        %2056 = vst [vmem:[#allocation2 + $0xa8] sm:$0xff] %v2024
        %2057 = vst [vmem:[#allocation2 + $0xb0] sm:$0xff] %v2025
        %2058 = vst [vmem:[#allocation2 + $0xb8] sm:$0xff] %v2026
        %2059 = vst [vmem:[#allocation2 + $0xc0] sm:$0xff] %v2027
        %2060 = vst [vmem:[#allocation2 + $0xc8] sm:$0xff] %v2028
        %2061 = vst [vmem:[#allocation2 + $0xd0] sm:$0xff] %v2029
        %2062 = vst [vmem:[#allocation2 + $0xd8] sm:$0xff] %v2030
        %2063 = vst [vmem:[#allocation2 + $0xe0] sm:$0xff] %v2031
        %2064 = vst [vmem:[#allocation2 + $0xe8] sm:$0xff] %v2032
        %2065 = vst [vmem:[#allocation2 + $0xf0] sm:$0xff] %v2033
        %2066 = vst [vmem:[#allocation2 + $0xf8] sm:$0xff] %v2034
        %v2068 = vshrl.u32 %v230, 16
        %v2070 = vrot.slane %v2068, 4
        %v2071 = vshll.u32 %v230, 16
        %v2073 = vrot.slane %v2071, 5
        %v2074 = vor.u32 %v2070, %v2073
        %v2075 = vrot.slane %v2074, 4
        %v2077 = vshll.u32 %v231, 16
        %v2079 = vrot.slane %v2077, 5
        %v2080 = vsel %vm565, %v2075, %v2079
        %v2081 = vshrl.u32 %v231, 16
        %v2083 = vrot.slane %v2081, 4
        %v2084 = vor.u32 %v2083, %v2079
        %v2085 = vrot.slane %v2084, 4
        %v2087 = vshll.u32 %v232, 16
        %v2089 = vrot.slane %v2087, 5
        %v2090 = vsel %vm565, %v2085, %v2089
        %s2091 = scalar_lea.vmem %s1, 8
        %v2092 = vld [vmem:[%s2091] sm:$0x3]
        %v2093 = vunpack.c.l.b16 %v2080
        %v2094 = vunpack.c.l.b16 %v2090
        %v2095 = vpack.c.b16 %v2094, %v2093
        %v2097 = vsel %vm317, %v2095, 0
        %v2100 = vsel %vm366, %v2092, 0
        %2102 = vmatprep.subr.bf16.mxu0 0
        %2103 = vmatpush1.bf16.msra.mxu0 %v2100
        %2104 = vmatprep.subr.bf16.mxu0 0
        %2105 = vmatpush1.bf16.msra.mxu0 0
        %2106 = vmatprep.subr.bf16.mxu0 0
        %2107 = vmatpush1.bf16.msra.mxu0 0
        %2108 = vmatprep.subr.bf16.mxu0 0
        %2109 = vmatpush1.bf16.msra.mxu0 0
        %2110 = vmatprep.subr.bf16.mxu0 0
        %2111 = vmatpush1.bf16.msra.mxu0 0
        %2112 = vmatprep.subr.bf16.mxu0 0
        %2113 = vmatpush1.bf16.msra.mxu0 0
        %2114 = vmatprep.subr.bf16.mxu0 0
        %2115 = vmatpush1.bf16.msra.mxu0 0
        %2116 = vmatprep.subr.bf16.mxu0 0
        %2117 = vmatpush1.bf16.msra.mxu0 0
        %2118 = vmatprep.subr.bf16.mxu0 0
        %2119 = vmatpush1.bf16.msra.mxu0 0
        %2120 = vmatprep.subr.bf16.mxu0 0
        %2121 = vmatpush1.bf16.msra.mxu0 0
        %2122 = vmatprep.subr.bf16.mxu0 0
        %2123 = vmatpush1.bf16.msra.mxu0 0
        %2124 = vmatprep.subr.bf16.mxu0 0
        %2125 = vmatpush1.bf16.msra.mxu0 0
        %2126 = vmatprep.subr.bf16.mxu0 0
        %2127 = vmatpush1.bf16.msra.mxu0 0
        %2128 = vmatprep.subr.bf16.mxu0 0
        %2129 = vmatpush1.bf16.msra.mxu0 0
        %2130 = vmatprep.subr.bf16.mxu0 0
        %2131 = vmatpush1.bf16.msra.mxu0 0
        %2132 = vmatprep.subr.bf16.mxu0 0
        %2133 = vmatpush1.bf16.msra.mxu0 0
        %2134 = vmatprep.mubr.bf16.mxu0 0
        %2135 = vmatmul.mubr.bf16.gmra.mrb[0].mxu0 %v1004
        %v2136 = vpop.f32.mrb[0].mxu0
        %v2137 = vadd.f32 0.0, %v2136
        %v2138 = vpop.f32.mrb[0].mxu0
        %v2139 = vpop.f32.mrb[0].mxu0
        %v2140 = vadd.f32 0.0, %v2139
        %v2141 = vpop.f32.mrb[0].mxu0
        %2142 = vmatprep.mubr.bf16.mxu0 0
        %2143 = vmatmul.mubr.bf16.gmra.mrb[0].mxu0 %v1007
        %v2144 = vpop.f32.mrb[0].mxu0
        %v2145 = vadd.f32 0.0, %v2144
        %v2146 = vpop.f32.mrb[0].mxu0
        %v2147 = vpop.f32.mrb[0].mxu0
        %v2148 = vadd.f32 0.0, %v2147
        %v2149 = vpop.f32.mrb[0].mxu0
        %2150 = vmatprep.mubr.bf16.mxu0 0
        %2151 = vmatmul.mubr.bf16.gmra.mrb[0].mxu0 %v1010
        %v2152 = vpop.f32.mrb[0].mxu0
        %v2153 = vadd.f32 0.0, %v2152
        %v2154 = vpop.f32.mrb[0].mxu0
        %v2155 = vpop.f32.mrb[0].mxu0
        %v2156 = vadd.f32 0.0, %v2155
        %v2157 = vpop.f32.mrb[0].mxu0
        %2158 = vmatprep.mubr.bf16.mxu0 0
        %2159 = vmatmul.mubr.bf16.gmra.mrb[0].mxu0 %v1013
        %v2160 = vpop.f32.mrb[0].mxu0
        %v2161 = vadd.f32 0.0, %v2160
        %v2162 = vpop.f32.mrb[0].mxu0
        %v2163 = vpop.f32.mrb[0].mxu0
        %v2164 = vadd.f32 0.0, %v2163
        %v2165 = vpop.f32.mrb[0].mxu0
        %2166 = vmatprep.mubr.bf16.mxu0 0
        %2167 = vmatmul.mubr.bf16.gmra.mrb[0].mxu0 %v1016
        %v2168 = vpop.f32.mrb[0].mxu0
        %v2169 = vadd.f32 0.0, %v2168
        %v2170 = vpop.f32.mrb[0].mxu0
        %v2171 = vpop.f32.mrb[0].mxu0
        %v2172 = vadd.f32 0.0, %v2171
        %v2173 = vpop.f32.mrb[0].mxu0
        %2174 = vmatprep.mubr.bf16.mxu0 0
        %2175 = vmatmul.mubr.bf16.gmra.mrb[0].mxu0 %v1019
        %v2176 = vpop.f32.mrb[0].mxu0
        %v2177 = vadd.f32 0.0, %v2176
        %v2178 = vpop.f32.mrb[0].mxu0
        %v2179 = vpop.f32.mrb[0].mxu0
        %v2180 = vadd.f32 0.0, %v2179
        %v2181 = vpop.f32.mrb[0].mxu0
        %2182 = vmatprep.mubr.bf16.mxu0 0
        %2183 = vmatmul.mubr.bf16.gmra.mrb[0].mxu0 %v1022
        %v2184 = vpop.f32.mrb[0].mxu0
        %v2185 = vadd.f32 0.0, %v2184
        %v2186 = vpop.f32.mrb[0].mxu0
        %v2187 = vpop.f32.mrb[0].mxu0
        %v2188 = vadd.f32 0.0, %v2187
        %v2189 = vpop.f32.mrb[0].mxu0
        %2190 = vmatprep.mubr.bf16.mxu0 0
        %2191 = vmatmul.mubr.bf16.gmra.mrb[0].mxu0 %v1025
        %v2192 = vpop.f32.mrb[0].mxu0
        %v2193 = vadd.f32 0.0, %v2192
        %v2194 = vpop.f32.mrb[0].mxu0
        %v2195 = vpop.f32.mrb[0].mxu0
        %v2196 = vadd.f32 0.0, %v2195
        %v2197 = vpop.f32.mrb[0].mxu0
        %2198 = vmatprep.mubr.bf16.mxu0 0
        %2199 = vmatmul.mubr.bf16.gmra.mrb[0].mxu0 %v1028
        %v2200 = vpop.f32.mrb[0].mxu0
        %v2201 = vadd.f32 0.0, %v2200
        %v2202 = vpop.f32.mrb[0].mxu0
        %v2203 = vpop.f32.mrb[0].mxu0
        %v2204 = vadd.f32 0.0, %v2203
        %v2205 = vpop.f32.mrb[0].mxu0
        %2206 = vmatprep.mubr.bf16.mxu0 0
        %2207 = vmatmul.mubr.bf16.gmra.mrb[0].mxu0 %v1031
        %v2208 = vpop.f32.mrb[0].mxu0
        %v2209 = vadd.f32 0.0, %v2208
        %v2210 = vpop.f32.mrb[0].mxu0
        %v2211 = vpop.f32.mrb[0].mxu0
        %v2212 = vadd.f32 0.0, %v2211
        %v2213 = vpop.f32.mrb[0].mxu0
        %2214 = vmatprep.mubr.bf16.mxu0 0
        %2215 = vmatmul.mubr.bf16.gmra.mrb[0].mxu0 %v1034
        %v2216 = vpop.f32.mrb[0].mxu0
        %v2217 = vadd.f32 0.0, %v2216
        %v2218 = vpop.f32.mrb[0].mxu0
        %v2219 = vpop.f32.mrb[0].mxu0
        %v2220 = vadd.f32 0.0, %v2219
        %v2221 = vpop.f32.mrb[0].mxu0
        %2222 = vmatprep.mubr.bf16.mxu0 0
        %2223 = vmatmul.mubr.bf16.gmra.mrb[0].mxu0 %v1037
        %v2224 = vpop.f32.mrb[0].mxu0
        %v2225 = vadd.f32 0.0, %v2224
        %v2226 = vpop.f32.mrb[0].mxu0
        %v2227 = vpop.f32.mrb[0].mxu0
        %v2228 = vadd.f32 0.0, %v2227
        %v2229 = vpop.f32.mrb[0].mxu0
        %2230 = vmatprep.mubr.bf16.mxu0 0
        %2231 = vmatmul.mubr.bf16.gmra.mrb[0].mxu0 %v1040
        %v2232 = vpop.f32.mrb[0].mxu0
        %v2233 = vadd.f32 0.0, %v2232
        %v2234 = vpop.f32.mrb[0].mxu0
        %v2235 = vpop.f32.mrb[0].mxu0
        %v2236 = vadd.f32 0.0, %v2235
        %v2237 = vpop.f32.mrb[0].mxu0
        %2238 = vmatprep.mubr.bf16.mxu0 0
        %2239 = vmatmul.mubr.bf16.gmra.mrb[0].mxu0 %v1043
        %v2240 = vpop.f32.mrb[0].mxu0
        %v2241 = vadd.f32 0.0, %v2240
        %v2242 = vpop.f32.mrb[0].mxu0
        %v2243 = vpop.f32.mrb[0].mxu0
        %v2244 = vadd.f32 0.0, %v2243
        %v2245 = vpop.f32.mrb[0].mxu0
        %2246 = vmatprep.mubr.bf16.mxu0 0
        %2247 = vmatmul.mubr.bf16.gmra.mrb[0].mxu0 %v1046
        %v2248 = vpop.f32.mrb[0].mxu0
        %v2249 = vadd.f32 0.0, %v2248
        %v2250 = vpop.f32.mrb[0].mxu0
        %v2251 = vpop.f32.mrb[0].mxu0
        %v2252 = vadd.f32 0.0, %v2251
        %v2253 = vpop.f32.mrb[0].mxu0
        %2254 = vmatprep.mubr.bf16.mxu0 0
        %2255 = vmatmul.mubr.bf16.gmra.mrb[0].mxu0 %v2097
        %v2256 = vpop.f32.mrb[0].mxu0
        %v2257 = vadd.f32 0.0, %v2256
        %v2258 = vpop.f32.mrb[0].mxu0
        %v2259 = vpop.f32.mrb[0].mxu0
        %v2260 = vadd.f32 0.0, %v2259
        %v2261 = vpop.f32.mrb[0].mxu0
        %2262 = vdwg.mxu0
        %v2263 = vld [vmem:[#allocation2] sm:$0xff]
        %v2264 = vld [vmem:[#allocation2 + $0x8] sm:$0xff]
        %v2265 = vld [vmem:[#allocation2 + $0x10] sm:$0xff]
        %v2266 = vld [vmem:[#allocation2 + $0x18] sm:$0xff]
        %v2267 = vld [vmem:[#allocation2 + $0x20] sm:$0xff]
        %v2268 = vld [vmem:[#allocation2 + $0x28] sm:$0xff]
        %v2269 = vld [vmem:[#allocation2 + $0x30] sm:$0xff]
        %v2270 = vld [vmem:[#allocation2 + $0x38] sm:$0xff]
        %v2271 = vld [vmem:[#allocation2 + $0x40] sm:$0xff]
        %v2272 = vld [vmem:[#allocation2 + $0x48] sm:$0xff]
        %v2273 = vld [vmem:[#allocation2 + $0x50] sm:$0xff]
        %v2274 = vld [vmem:[#allocation2 + $0x58] sm:$0xff]
        %v2275 = vld [vmem:[#allocation2 + $0x60] sm:$0xff]
        %v2276 = vld [vmem:[#allocation2 + $0x68] sm:$0xff]
        %v2277 = vld [vmem:[#allocation2 + $0x70] sm:$0xff]
        %v2278 = vld [vmem:[#allocation2 + $0x78] sm:$0xff]
        %v2279 = vld [vmem:[#allocation2 + $0x80] sm:$0xff]
        %v2280 = vld [vmem:[#allocation2 + $0x88] sm:$0xff]
        %v2281 = vld [vmem:[#allocation2 + $0x90] sm:$0xff]
        %v2282 = vld [vmem:[#allocation2 + $0x98] sm:$0xff]
        %v2283 = vld [vmem:[#allocation2 + $0xa0] sm:$0xff]
        %v2284 = vld [vmem:[#allocation2 + $0xa8] sm:$0xff]
        %v2285 = vld [vmem:[#allocation2 + $0xb0] sm:$0xff]
        %v2286 = vld [vmem:[#allocation2 + $0xb8] sm:$0xff]
        %v2287 = vld [vmem:[#allocation2 + $0xc0] sm:$0xff]
        %v2288 = vld [vmem:[#allocation2 + $0xc8] sm:$0xff]
        %v2289 = vld [vmem:[#allocation2 + $0xd0] sm:$0xff]
        %v2290 = vld [vmem:[#allocation2 + $0xd8] sm:$0xff]
        %v2291 = vld [vmem:[#allocation2 + $0xe0] sm:$0xff]
        %v2292 = vld [vmem:[#allocation2 + $0xe8] sm:$0xff]
        %v2293 = vld [vmem:[#allocation2 + $0xf0] sm:$0xff]
        %v2294 = vld [vmem:[#allocation2 + $0xf8] sm:$0xff]
        %v2295 = vadd.f32 %v2263, %v2137
        %v2296 = vadd.f32 %v2264, %v2140
        %v2297 = vadd.f32 %v2265, %v2145
        %v2298 = vadd.f32 %v2266, %v2148
        %v2299 = vadd.f32 %v2267, %v2153
        %v2300 = vadd.f32 %v2268, %v2156
        %v2301 = vadd.f32 %v2269, %v2161
        %v2302 = vadd.f32 %v2270, %v2164
        %v2303 = vadd.f32 %v2271, %v2169
        %v2304 = vadd.f32 %v2272, %v2172
        %v2305 = vadd.f32 %v2273, %v2177
        %v2306 = vadd.f32 %v2274, %v2180
        %v2307 = vadd.f32 %v2275, %v2185
        %v2308 = vadd.f32 %v2276, %v2188
        %v2309 = vadd.f32 %v2277, %v2193
        %v2310 = vadd.f32 %v2278, %v2196
        %v2311 = vadd.f32 %v2279, %v2201
        %v2312 = vadd.f32 %v2280, %v2204
        %v2313 = vadd.f32 %v2281, %v2209
        %v2314 = vadd.f32 %v2282, %v2212
        %v2315 = vadd.f32 %v2283, %v2217
        %v2316 = vadd.f32 %v2284, %v2220
        %v2317 = vadd.f32 %v2285, %v2225
        %v2318 = vadd.f32 %v2286, %v2228
        %v2319 = vadd.f32 %v2287, %v2233
        %v2320 = vadd.f32 %v2288, %v2236
        %v2321 = vadd.f32 %v2289, %v2241
        %v2322 = vadd.f32 %v2290, %v2244
        %v2323 = vadd.f32 %v2291, %v2249
        %v2324 = vadd.f32 %v2292, %v2252
        %v2325 = vadd.f32 %v2293, %v2257
        %v2326 = vadd.f32 %v2294, %v2260
        %2327 = vst [vmem:[#allocation2] sm:$0xff] %v2295
        %2328 = vst [vmem:[#allocation2 + $0x8] sm:$0xff] %v2296
        %2329 = vst [vmem:[#allocation2 + $0x10] sm:$0xff] %v2297
        %2330 = vst [vmem:[#allocation2 + $0x18] sm:$0xff] %v2298
        %2331 = vst [vmem:[#allocation2 + $0x20] sm:$0xff] %v2299
        %2332 = vst [vmem:[#allocation2 + $0x28] sm:$0xff] %v2300
        %2333 = vst [vmem:[#allocation2 + $0x30] sm:$0xff] %v2301
        %2334 = vst [vmem:[#allocation2 + $0x38] sm:$0xff] %v2302
        %2335 = vst [vmem:[#allocation2 + $0x40] sm:$0xff] %v2303
        %2336 = vst [vmem:[#allocation2 + $0x48] sm:$0xff] %v2304
        %2337 = vst [vmem:[#allocation2 + $0x50] sm:$0xff] %v2305
        %2338 = vst [vmem:[#allocation2 + $0x58] sm:$0xff] %v2306
        %2339 = vst [vmem:[#allocation2 + $0x60] sm:$0xff] %v2307
        %2340 = vst [vmem:[#allocation2 + $0x68] sm:$0xff] %v2308
        %2341 = vst [vmem:[#allocation2 + $0x70] sm:$0xff] %v2309
        %2342 = vst [vmem:[#allocation2 + $0x78] sm:$0xff] %v2310
        %2343 = vst [vmem:[#allocation2 + $0x80] sm:$0xff] %v2311
        %2344 = vst [vmem:[#allocation2 + $0x88] sm:$0xff] %v2312
        %2345 = vst [vmem:[#allocation2 + $0x90] sm:$0xff] %v2313
        %2346 = vst [vmem:[#allocation2 + $0x98] sm:$0xff] %v2314
        %2347 = vst [vmem:[#allocation2 + $0xa0] sm:$0xff] %v2315
        %2348 = vst [vmem:[#allocation2 + $0xa8] sm:$0xff] %v2316
        %2349 = vst [vmem:[#allocation2 + $0xb0] sm:$0xff] %v2317
        %2350 = vst [vmem:[#allocation2 + $0xb8] sm:$0xff] %v2318
        %2351 = vst [vmem:[#allocation2 + $0xc0] sm:$0xff] %v2319
        %2352 = vst [vmem:[#allocation2 + $0xc8] sm:$0xff] %v2320
        %2353 = vst [vmem:[#allocation2 + $0xd0] sm:$0xff] %v2321
        %2354 = vst [vmem:[#allocation2 + $0xd8] sm:$0xff] %v2322
        %2355 = vst [vmem:[#allocation2 + $0xe0] sm:$0xff] %v2323
        %2356 = vst [vmem:[#allocation2 + $0xe8] sm:$0xff] %v2324
        %2357 = vst [vmem:[#allocation2 + $0xf0] sm:$0xff] %v2325
        %2358 = vst [vmem:[#allocation2 + $0xf8] sm:$0xff] %v2326
        %v2360 = vrot.slane %v230, 5
        %v2361 = vrot.slane %v2360, 4
        %v2362 = vrot.slane %v231, 5
        %v2363 = vsel %vm1326, %v2361, %v2362
        %v2364 = vrot.slane %v2362, 4
        %v2365 = vrot.slane %v232, 5
        %v2366 = vsel %vm1326, %v2364, %v2365
        %s2367 = scalar_lea.vmem %s1, 10
        %v2368 = vld [vmem:[%s2367] sm:$0x3]
        %v2369 = vunpack.c.l.b16 %v2363
        %v2370 = vunpack.c.l.b16 %v2366
        %v2371 = vpack.c.b16 %v2370, %v2369
        %v2373 = vsel %vm317, %v2371, 0
        %v2376 = vsel %vm366, %v2368, 0
        %2378 = vmatprep.subr.bf16.mxu0 0
        %2379 = vmatpush1.bf16.msra.mxu0 %v2376
        %2380 = vmatprep.subr.bf16.mxu0 0
        %2381 = vmatpush1.bf16.msra.mxu0 0
        %2382 = vmatprep.subr.bf16.mxu0 0
        %2383 = vmatpush1.bf16.msra.mxu0 0
        %2384 = vmatprep.subr.bf16.mxu0 0
        %2385 = vmatpush1.bf16.msra.mxu0 0
        %2386 = vmatprep.subr.bf16.mxu0 0
        %2387 = vmatpush1.bf16.msra.mxu0 0
        %2388 = vmatprep.subr.bf16.mxu0 0
        %2389 = vmatpush1.bf16.msra.mxu0 0
        %2390 = vmatprep.subr.bf16.mxu0 0
        %2391 = vmatpush1.bf16.msra.mxu0 0
        %2392 = vmatprep.subr.bf16.mxu0 0
        %2393 = vmatpush1.bf16.msra.mxu0 0
        %2394 = vmatprep.subr.bf16.mxu0 0
        %2395 = vmatpush1.bf16.msra.mxu0 0
        %2396 = vmatprep.subr.bf16.mxu0 0
        %2397 = vmatpush1.bf16.msra.mxu0 0
        %2398 = vmatprep.subr.bf16.mxu0 0
        %2399 = vmatpush1.bf16.msra.mxu0 0
        %2400 = vmatprep.subr.bf16.mxu0 0
        %2401 = vmatpush1.bf16.msra.mxu0 0
        %2402 = vmatprep.subr.bf16.mxu0 0
        %2403 = vmatpush1.bf16.msra.mxu0 0
        %2404 = vmatprep.subr.bf16.mxu0 0
        %2405 = vmatpush1.bf16.msra.mxu0 0
        %2406 = vmatprep.subr.bf16.mxu0 0
        %2407 = vmatpush1.bf16.msra.mxu0 0
        %2408 = vmatprep.subr.bf16.mxu0 0
        %2409 = vmatpush1.bf16.msra.mxu0 0
        %2410 = vmatprep.mubr.bf16.mxu0 0
        %2411 = vmatmul.mubr.bf16.gmra.mrb[0].mxu0 %v1493
        %v2412 = vpop.f32.mrb[0].mxu0
        %v2413 = vadd.f32 0.0, %v2412
        %v2414 = vpop.f32.mrb[0].mxu0
        %v2415 = vpop.f32.mrb[0].mxu0
        %v2416 = vadd.f32 0.0, %v2415
        %v2417 = vpop.f32.mrb[0].mxu0
        %2418 = vmatprep.mubr.bf16.mxu0 0
        %2419 = vmatmul.mubr.bf16.gmra.mrb[0].mxu0 %v1496
        %v2420 = vpop.f32.mrb[0].mxu0
        %v2421 = vadd.f32 0.0, %v2420
        %v2422 = vpop.f32.mrb[0].mxu0
        %v2423 = vpop.f32.mrb[0].mxu0
        %v2424 = vadd.f32 0.0, %v2423
        %v2425 = vpop.f32.mrb[0].mxu0
        %2426 = vmatprep.mubr.bf16.mxu0 0
        %2427 = vmatmul.mubr.bf16.gmra.mrb[0].mxu0 %v1499
        %v2428 = vpop.f32.mrb[0].mxu0
        %v2429 = vadd.f32 0.0, %v2428
        %v2430 = vpop.f32.mrb[0].mxu0
        %v2431 = vpop.f32.mrb[0].mxu0
        %v2432 = vadd.f32 0.0, %v2431
        %v2433 = vpop.f32.mrb[0].mxu0
        %2434 = vmatprep.mubr.bf16.mxu0 0
        %2435 = vmatmul.mubr.bf16.gmra.mrb[0].mxu0 %v1502
        %v2436 = vpop.f32.mrb[0].mxu0
        %v2437 = vadd.f32 0.0, %v2436
        %v2438 = vpop.f32.mrb[0].mxu0
        %v2439 = vpop.f32.mrb[0].mxu0
        %v2440 = vadd.f32 0.0, %v2439
        %v2441 = vpop.f32.mrb[0].mxu0
        %2442 = vmatprep.mubr.bf16.mxu0 0
        %2443 = vmatmul.mubr.bf16.gmra.mrb[0].mxu0 %v1505
        %v2444 = vpop.f32.mrb[0].mxu0
        %v2445 = vadd.f32 0.0, %v2444
        %v2446 = vpop.f32.mrb[0].mxu0
        %v2447 = vpop.f32.mrb[0].mxu0
        %v2448 = vadd.f32 0.0, %v2447
        %v2449 = vpop.f32.mrb[0].mxu0
        %2450 = vmatprep.mubr.bf16.mxu0 0
        %2451 = vmatmul.mubr.bf16.gmra.mrb[0].mxu0 %v1508
        %v2452 = vpop.f32.mrb[0].mxu0
        %v2453 = vadd.f32 0.0, %v2452
        %v2454 = vpop.f32.mrb[0].mxu0
        %v2455 = vpop.f32.mrb[0].mxu0
        %v2456 = vadd.f32 0.0, %v2455
        %v2457 = vpop.f32.mrb[0].mxu0
        %2458 = vmatprep.mubr.bf16.mxu0 0
        %2459 = vmatmul.mubr.bf16.gmra.mrb[0].mxu0 %v1511
        %v2460 = vpop.f32.mrb[0].mxu0
        %v2461 = vadd.f32 0.0, %v2460
        %v2462 = vpop.f32.mrb[0].mxu0
        %v2463 = vpop.f32.mrb[0].mxu0
        %v2464 = vadd.f32 0.0, %v2463
        %v2465 = vpop.f32.mrb[0].mxu0
        %2466 = vmatprep.mubr.bf16.mxu0 0
        %2467 = vmatmul.mubr.bf16.gmra.mrb[0].mxu0 %v1514
        %v2468 = vpop.f32.mrb[0].mxu0
        %v2469 = vadd.f32 0.0, %v2468
        %v2470 = vpop.f32.mrb[0].mxu0
        %v2471 = vpop.f32.mrb[0].mxu0
        %v2472 = vadd.f32 0.0, %v2471
        %v2473 = vpop.f32.mrb[0].mxu0
        %2474 = vmatprep.mubr.bf16.mxu0 0
        %2475 = vmatmul.mubr.bf16.gmra.mrb[0].mxu0 %v1517
        %v2476 = vpop.f32.mrb[0].mxu0
        %v2477 = vadd.f32 0.0, %v2476
        %v2478 = vpop.f32.mrb[0].mxu0
        %v2479 = vpop.f32.mrb[0].mxu0
        %v2480 = vadd.f32 0.0, %v2479
        %v2481 = vpop.f32.mrb[0].mxu0
        %2482 = vmatprep.mubr.bf16.mxu0 0
        %2483 = vmatmul.mubr.bf16.gmra.mrb[0].mxu0 %v1520
        %v2484 = vpop.f32.mrb[0].mxu0
        %v2485 = vadd.f32 0.0, %v2484
        %v2486 = vpop.f32.mrb[0].mxu0
        %v2487 = vpop.f32.mrb[0].mxu0
        %v2488 = vadd.f32 0.0, %v2487
        %v2489 = vpop.f32.mrb[0].mxu0
        %2490 = vmatprep.mubr.bf16.mxu0 0
        %2491 = vmatmul.mubr.bf16.gmra.mrb[0].mxu0 %v1523
        %v2492 = vpop.f32.mrb[0].mxu0
        %v2493 = vadd.f32 0.0, %v2492
        %v2494 = vpop.f32.mrb[0].mxu0
        %v2495 = vpop.f32.mrb[0].mxu0
        %v2496 = vadd.f32 0.0, %v2495
        %v2497 = vpop.f32.mrb[0].mxu0
        %2498 = vmatprep.mubr.bf16.mxu0 0
        %2499 = vmatmul.mubr.bf16.gmra.mrb[0].mxu0 %v1526
        %v2500 = vpop.f32.mrb[0].mxu0
        %v2501 = vadd.f32 0.0, %v2500
        %v2502 = vpop.f32.mrb[0].mxu0
        %v2503 = vpop.f32.mrb[0].mxu0
        %v2504 = vadd.f32 0.0, %v2503
        %v2505 = vpop.f32.mrb[0].mxu0
        %2506 = vmatprep.mubr.bf16.mxu0 0
        %2507 = vmatmul.mubr.bf16.gmra.mrb[0].mxu0 %v1529
        %v2508 = vpop.f32.mrb[0].mxu0
        %v2509 = vadd.f32 0.0, %v2508
        %v2510 = vpop.f32.mrb[0].mxu0
        %v2511 = vpop.f32.mrb[0].mxu0
        %v2512 = vadd.f32 0.0, %v2511
        %v2513 = vpop.f32.mrb[0].mxu0
        %2514 = vmatprep.mubr.bf16.mxu0 0
        %2515 = vmatmul.mubr.bf16.gmra.mrb[0].mxu0 %v1532
        %v2516 = vpop.f32.mrb[0].mxu0
        %v2517 = vadd.f32 0.0, %v2516
        %v2518 = vpop.f32.mrb[0].mxu0
        %v2519 = vpop.f32.mrb[0].mxu0
        %v2520 = vadd.f32 0.0, %v2519
        %v2521 = vpop.f32.mrb[0].mxu0
        %2522 = vmatprep.mubr.bf16.mxu0 0
        %2523 = vmatmul.mubr.bf16.gmra.mrb[0].mxu0 %v1535
        %v2524 = vpop.f32.mrb[0].mxu0
        %v2525 = vadd.f32 0.0, %v2524
        %v2526 = vpop.f32.mrb[0].mxu0
        %v2527 = vpop.f32.mrb[0].mxu0
        %v2528 = vadd.f32 0.0, %v2527
        %v2529 = vpop.f32.mrb[0].mxu0
        %2530 = vmatprep.mubr.bf16.mxu0 0
        %2531 = vmatmul.mubr.bf16.gmra.mrb[0].mxu0 %v2373
        %v2532 = vpop.f32.mrb[0].mxu0
        %v2533 = vadd.f32 0.0, %v2532
        %v2534 = vpop.f32.mrb[0].mxu0
        %v2535 = vpop.f32.mrb[0].mxu0
        %v2536 = vadd.f32 0.0, %v2535
        %v2537 = vpop.f32.mrb[0].mxu0
        %2538 = vdwg.mxu0
        %v2539 = vld [vmem:[#allocation2] sm:$0xff]
        %v2540 = vld [vmem:[#allocation2 + $0x8] sm:$0xff]
        %v2541 = vld [vmem:[#allocation2 + $0x10] sm:$0xff]
        %v2542 = vld [vmem:[#allocation2 + $0x18] sm:$0xff]
        %v2543 = vld [vmem:[#allocation2 + $0x20] sm:$0xff]
        %v2544 = vld [vmem:[#allocation2 + $0x28] sm:$0xff]
        %v2545 = vld [vmem:[#allocation2 + $0x30] sm:$0xff]
        %v2546 = vld [vmem:[#allocation2 + $0x38] sm:$0xff]
        %v2547 = vld [vmem:[#allocation2 + $0x40] sm:$0xff]
        %v2548 = vld [vmem:[#allocation2 + $0x48] sm:$0xff]
        %v2549 = vld [vmem:[#allocation2 + $0x50] sm:$0xff]
        %v2550 = vld [vmem:[#allocation2 + $0x58] sm:$0xff]
        %v2551 = vld [vmem:[#allocation2 + $0x60] sm:$0xff]
        %v2552 = vld [vmem:[#allocation2 + $0x68] sm:$0xff]
        %v2553 = vld [vmem:[#allocation2 + $0x70] sm:$0xff]
        %v2554 = vld [vmem:[#allocation2 + $0x78] sm:$0xff]
        %v2555 = vld [vmem:[#allocation2 + $0x80] sm:$0xff]
        %v2556 = vld [vmem:[#allocation2 + $0x88] sm:$0xff]
        %v2557 = vld [vmem:[#allocation2 + $0x90] sm:$0xff]
        %v2558 = vld [vmem:[#allocation2 + $0x98] sm:$0xff]
        %v2559 = vld [vmem:[#allocation2 + $0xa0] sm:$0xff]
        %v2560 = vld [vmem:[#allocation2 + $0xa8] sm:$0xff]
        %v2561 = vld [vmem:[#allocation2 + $0xb0] sm:$0xff]
        %v2562 = vld [vmem:[#allocation2 + $0xb8] sm:$0xff]
        %v2563 = vld [vmem:[#allocation2 + $0xc0] sm:$0xff]
        %v2564 = vld [vmem:[#allocation2 + $0xc8] sm:$0xff]
        %v2565 = vld [vmem:[#allocation2 + $0xd0] sm:$0xff]
        %v2566 = vld [vmem:[#allocation2 + $0xd8] sm:$0xff]
        %v2567 = vld [vmem:[#allocation2 + $0xe0] sm:$0xff]
        %v2568 = vld [vmem:[#allocation2 + $0xe8] sm:$0xff]
        %v2569 = vld [vmem:[#allocation2 + $0xf0] sm:$0xff]
        %v2570 = vld [vmem:[#allocation2 + $0xf8] sm:$0xff]
        %v2571 = vadd.f32 %v2539, %v2413
        %v2572 = vadd.f32 %v2540, %v2416
        %v2573 = vadd.f32 %v2541, %v2421
        %v2574 = vadd.f32 %v2542, %v2424
        %v2575 = vadd.f32 %v2543, %v2429
        %v2576 = vadd.f32 %v2544, %v2432
        %v2577 = vadd.f32 %v2545, %v2437
        %v2578 = vadd.f32 %v2546, %v2440
        %v2579 = vadd.f32 %v2547, %v2445
        %v2580 = vadd.f32 %v2548, %v2448
        %v2581 = vadd.f32 %v2549, %v2453
        %v2582 = vadd.f32 %v2550, %v2456
        %v2583 = vadd.f32 %v2551, %v2461
        %v2584 = vadd.f32 %v2552, %v2464
        %v2585 = vadd.f32 %v2553, %v2469
        %v2586 = vadd.f32 %v2554, %v2472
        %v2587 = vadd.f32 %v2555, %v2477
        %v2588 = vadd.f32 %v2556, %v2480
        %v2589 = vadd.f32 %v2557, %v2485
        %v2590 = vadd.f32 %v2558, %v2488
        %v2591 = vadd.f32 %v2559, %v2493
        %v2592 = vadd.f32 %v2560, %v2496
        %v2593 = vadd.f32 %v2561, %v2501
        %v2594 = vadd.f32 %v2562, %v2504
        %v2595 = vadd.f32 %v2563, %v2509
        %v2596 = vadd.f32 %v2564, %v2512
        %v2597 = vadd.f32 %v2565, %v2517
        %v2598 = vadd.f32 %v2566, %v2520
        %v2599 = vadd.f32 %v2567, %v2525
        %v2600 = vadd.f32 %v2568, %v2528
        %v2601 = vadd.f32 %v2569, %v2533
        %v2602 = vadd.f32 %v2570, %v2536
        %2603 = vst [vmem:[#allocation2] sm:$0xff] %v2571
        %2604 = vst [vmem:[#allocation2 + $0x8] sm:$0xff] %v2572
        %2605 = vst [vmem:[#allocation2 + $0x10] sm:$0xff] %v2573
        %2606 = vst [vmem:[#allocation2 + $0x18] sm:$0xff] %v2574
        %2607 = vst [vmem:[#allocation2 + $0x20] sm:$0xff] %v2575
        %2608 = vst [vmem:[#allocation2 + $0x28] sm:$0xff] %v2576
        %2609 = vst [vmem:[#allocation2 + $0x30] sm:$0xff] %v2577
        %2610 = vst [vmem:[#allocation2 + $0x38] sm:$0xff] %v2578
        %2611 = vst [vmem:[#allocation2 + $0x40] sm:$0xff] %v2579
        %2612 = vst [vmem:[#allocation2 + $0x48] sm:$0xff] %v2580
        %2613 = vst [vmem:[#allocation2 + $0x50] sm:$0xff] %v2581
        %2614 = vst [vmem:[#allocation2 + $0x58] sm:$0xff] %v2582
        %2615 = vst [vmem:[#allocation2 + $0x60] sm:$0xff] %v2583
        %2616 = vst [vmem:[#allocation2 + $0x68] sm:$0xff] %v2584
        %2617 = vst [vmem:[#allocation2 + $0x70] sm:$0xff] %v2585
        %2618 = vst [vmem:[#allocation2 + $0x78] sm:$0xff] %v2586
        %2619 = vst [vmem:[#allocation2 + $0x80] sm:$0xff] %v2587
        %2620 = vst [vmem:[#allocation2 + $0x88] sm:$0xff] %v2588
        %2621 = vst [vmem:[#allocation2 + $0x90] sm:$0xff] %v2589
        %2622 = vst [vmem:[#allocation2 + $0x98] sm:$0xff] %v2590
        %2623 = vst [vmem:[#allocation2 + $0xa0] sm:$0xff] %v2591
        %2624 = vst [vmem:[#allocation2 + $0xa8] sm:$0xff] %v2592
        %2625 = vst [vmem:[#allocation2 + $0xb0] sm:$0xff] %v2593
        %2626 = vst [vmem:[#allocation2 + $0xb8] sm:$0xff] %v2594
        %2627 = vst [vmem:[#allocation2 + $0xc0] sm:$0xff] %v2595
        %2628 = vst [vmem:[#allocation2 + $0xc8] sm:$0xff] %v2596
        %2629 = vst [vmem:[#allocation2 + $0xd0] sm:$0xff] %v2597
        %2630 = vst [vmem:[#allocation2 + $0xd8] sm:$0xff] %v2598
        %2631 = vst [vmem:[#allocation2 + $0xe0] sm:$0xff] %v2599
        %2632 = vst [vmem:[#allocation2 + $0xe8] sm:$0xff] %v2600
        %2633 = vst [vmem:[#allocation2 + $0xf0] sm:$0xff] %v2601
        %2634 = vst [vmem:[#allocation2 + $0xf8] sm:$0xff] %v2602
        %s2635 = scalar_lea.vmem %s1, 12
        %v2636 = vld [vmem:[%s2635] sm:$0x3]
        %v2639 = vunpack.c.l.b16 %v233
        %v2640 = vunpack.c.l.b16 %v234
        %v2641 = vpack.c.b16 %v2640, %v2639
        %v2643 = vsel %vm317, %v2641, 0
        %v2646 = vsel %vm366, %v2636, 0
        %2648 = vmatprep.subr.bf16.mxu0 0
        %2649 = vmatpush1.bf16.msra.mxu0 %v2646
        %2650 = vmatprep.subr.bf16.mxu0 0
        %2651 = vmatpush1.bf16.msra.mxu0 0
        %2652 = vmatprep.subr.bf16.mxu0 0
        %2653 = vmatpush1.bf16.msra.mxu0 0
        %2654 = vmatprep.subr.bf16.mxu0 0
        %2655 = vmatpush1.bf16.msra.mxu0 0
        %2656 = vmatprep.subr.bf16.mxu0 0
        %2657 = vmatpush1.bf16.msra.mxu0 0
        %2658 = vmatprep.subr.bf16.mxu0 0
        %2659 = vmatpush1.bf16.msra.mxu0 0
        %2660 = vmatprep.subr.bf16.mxu0 0
        %2661 = vmatpush1.bf16.msra.mxu0 0
        %2662 = vmatprep.subr.bf16.mxu0 0
        %2663 = vmatpush1.bf16.msra.mxu0 0
        %2664 = vmatprep.subr.bf16.mxu0 0
        %2665 = vmatpush1.bf16.msra.mxu0 0
        %2666 = vmatprep.subr.bf16.mxu0 0
        %2667 = vmatpush1.bf16.msra.mxu0 0
        %2668 = vmatprep.subr.bf16.mxu0 0
        %2669 = vmatpush1.bf16.msra.mxu0 0
        %2670 = vmatprep.subr.bf16.mxu0 0
        %2671 = vmatpush1.bf16.msra.mxu0 0
        %2672 = vmatprep.subr.bf16.mxu0 0
        %2673 = vmatpush1.bf16.msra.mxu0 0
        %2674 = vmatprep.subr.bf16.mxu0 0
        %2675 = vmatpush1.bf16.msra.mxu0 0
        %2676 = vmatprep.subr.bf16.mxu0 0
        %2677 = vmatpush1.bf16.msra.mxu0 0
        %2678 = vmatprep.subr.bf16.mxu0 0
        %2679 = vmatpush1.bf16.msra.mxu0 0
        %2680 = vmatprep.mubr.bf16.mxu0 0
        %2681 = vmatmul.mubr.bf16.gmra.mrb[0].mxu0 %v325
        %v2682 = vpop.f32.mrb[0].mxu0
        %v2683 = vadd.f32 0.0, %v2682
        %v2684 = vpop.f32.mrb[0].mxu0
        %v2685 = vpop.f32.mrb[0].mxu0
        %v2686 = vadd.f32 0.0, %v2685
        %v2687 = vpop.f32.mrb[0].mxu0
        %2688 = vmatprep.mubr.bf16.mxu0 0
        %2689 = vmatmul.mubr.bf16.gmra.mrb[0].mxu0 %v328
        %v2690 = vpop.f32.mrb[0].mxu0
        %v2691 = vadd.f32 0.0, %v2690
        %v2692 = vpop.f32.mrb[0].mxu0
        %v2693 = vpop.f32.mrb[0].mxu0
        %v2694 = vadd.f32 0.0, %v2693
        %v2695 = vpop.f32.mrb[0].mxu0
        %2696 = vmatprep.mubr.bf16.mxu0 0
        %2697 = vmatmul.mubr.bf16.gmra.mrb[0].mxu0 %v331
        %v2698 = vpop.f32.mrb[0].mxu0
        %v2699 = vadd.f32 0.0, %v2698
        %v2700 = vpop.f32.mrb[0].mxu0
        %v2701 = vpop.f32.mrb[0].mxu0
        %v2702 = vadd.f32 0.0, %v2701
        %v2703 = vpop.f32.mrb[0].mxu0
        %2704 = vmatprep.mubr.bf16.mxu0 0
        %2705 = vmatmul.mubr.bf16.gmra.mrb[0].mxu0 %v334
        %v2706 = vpop.f32.mrb[0].mxu0
        %v2707 = vadd.f32 0.0, %v2706
        %v2708 = vpop.f32.mrb[0].mxu0
        %v2709 = vpop.f32.mrb[0].mxu0
        %v2710 = vadd.f32 0.0, %v2709
        %v2711 = vpop.f32.mrb[0].mxu0
        %2712 = vmatprep.mubr.bf16.mxu0 0
        %2713 = vmatmul.mubr.bf16.gmra.mrb[0].mxu0 %v337
        %v2714 = vpop.f32.mrb[0].mxu0
        %v2715 = vadd.f32 0.0, %v2714
        %v2716 = vpop.f32.mrb[0].mxu0
        %v2717 = vpop.f32.mrb[0].mxu0
        %v2718 = vadd.f32 0.0, %v2717
        %v2719 = vpop.f32.mrb[0].mxu0
        %2720 = vmatprep.mubr.bf16.mxu0 0
        %2721 = vmatmul.mubr.bf16.gmra.mrb[0].mxu0 %v340
        %v2722 = vpop.f32.mrb[0].mxu0
        %v2723 = vadd.f32 0.0, %v2722
        %v2724 = vpop.f32.mrb[0].mxu0
        %v2725 = vpop.f32.mrb[0].mxu0
        %v2726 = vadd.f32 0.0, %v2725
        %v2727 = vpop.f32.mrb[0].mxu0
        %2728 = vmatprep.mubr.bf16.mxu0 0
        %2729 = vmatmul.mubr.bf16.gmra.mrb[0].mxu0 %v343
        %v2730 = vpop.f32.mrb[0].mxu0
        %v2731 = vadd.f32 0.0, %v2730
        %v2732 = vpop.f32.mrb[0].mxu0
        %v2733 = vpop.f32.mrb[0].mxu0
        %v2734 = vadd.f32 0.0, %v2733
        %v2735 = vpop.f32.mrb[0].mxu0
        %2736 = vmatprep.mubr.bf16.mxu0 0
        %2737 = vmatmul.mubr.bf16.gmra.mrb[0].mxu0 %v346
        %v2738 = vpop.f32.mrb[0].mxu0
        %v2739 = vadd.f32 0.0, %v2738
        %v2740 = vpop.f32.mrb[0].mxu0
        %v2741 = vpop.f32.mrb[0].mxu0
        %v2742 = vadd.f32 0.0, %v2741
        %v2743 = vpop.f32.mrb[0].mxu0
        %2744 = vmatprep.mubr.bf16.mxu0 0
        %2745 = vmatmul.mubr.bf16.gmra.mrb[0].mxu0 %v349
        %v2746 = vpop.f32.mrb[0].mxu0
        %v2747 = vadd.f32 0.0, %v2746
        %v2748 = vpop.f32.mrb[0].mxu0
        %v2749 = vpop.f32.mrb[0].mxu0
        %v2750 = vadd.f32 0.0, %v2749
        %v2751 = vpop.f32.mrb[0].mxu0
        %2752 = vmatprep.mubr.bf16.mxu0 0
        %2753 = vmatmul.mubr.bf16.gmra.mrb[0].mxu0 %v352
        %v2754 = vpop.f32.mrb[0].mxu0
        %v2755 = vadd.f32 0.0, %v2754
        %v2756 = vpop.f32.mrb[0].mxu0
        %v2757 = vpop.f32.mrb[0].mxu0
        %v2758 = vadd.f32 0.0, %v2757
        %v2759 = vpop.f32.mrb[0].mxu0
        %2760 = vmatprep.mubr.bf16.mxu0 0
        %2761 = vmatmul.mubr.bf16.gmra.mrb[0].mxu0 %v355
        %v2762 = vpop.f32.mrb[0].mxu0
        %v2763 = vadd.f32 0.0, %v2762
        %v2764 = vpop.f32.mrb[0].mxu0
        %v2765 = vpop.f32.mrb[0].mxu0
        %v2766 = vadd.f32 0.0, %v2765
        %v2767 = vpop.f32.mrb[0].mxu0
        %2768 = vmatprep.mubr.bf16.mxu0 0
        %2769 = vmatmul.mubr.bf16.gmra.mrb[0].mxu0 %v358
        %v2770 = vpop.f32.mrb[0].mxu0
        %v2771 = vadd.f32 0.0, %v2770
        %v2772 = vpop.f32.mrb[0].mxu0
        %v2773 = vpop.f32.mrb[0].mxu0
        %v2774 = vadd.f32 0.0, %v2773
        %v2775 = vpop.f32.mrb[0].mxu0
        %2776 = vmatprep.mubr.bf16.mxu0 0
        %2777 = vmatmul.mubr.bf16.gmra.mrb[0].mxu0 %v361
        %v2778 = vpop.f32.mrb[0].mxu0
        %v2779 = vadd.f32 0.0, %v2778
        %v2780 = vpop.f32.mrb[0].mxu0
        %v2781 = vpop.f32.mrb[0].mxu0
        %v2782 = vadd.f32 0.0, %v2781
        %v2783 = vpop.f32.mrb[0].mxu0
        %2784 = vmatprep.mubr.bf16.mxu0 0
        %2785 = vmatmul.mubr.bf16.gmra.mrb[0].mxu0 %v364
        %v2786 = vpop.f32.mrb[0].mxu0
        %v2787 = vadd.f32 0.0, %v2786
        %v2788 = vpop.f32.mrb[0].mxu0
        %v2789 = vpop.f32.mrb[0].mxu0
        %v2790 = vadd.f32 0.0, %v2789
        %v2791 = vpop.f32.mrb[0].mxu0
        %2792 = vmatprep.mubr.bf16.mxu0 0
        %2793 = vmatmul.mubr.bf16.gmra.mrb[0].mxu0 %v1805
        %v2794 = vpop.f32.mrb[0].mxu0
        %v2795 = vadd.f32 0.0, %v2794
        %v2796 = vpop.f32.mrb[0].mxu0
        %v2797 = vpop.f32.mrb[0].mxu0
        %v2798 = vadd.f32 0.0, %v2797
        %v2799 = vpop.f32.mrb[0].mxu0
        %2800 = vmatprep.mubr.bf16.mxu0 0
        %2801 = vmatmul.mubr.bf16.gmra.mrb[0].mxu0 %v2643
        %v2802 = vpop.f32.mrb[0].mxu0
        %v2803 = vadd.f32 0.0, %v2802
        %v2804 = vpop.f32.mrb[0].mxu0
        %v2805 = vpop.f32.mrb[0].mxu0
        %v2806 = vadd.f32 0.0, %v2805
        %v2807 = vpop.f32.mrb[0].mxu0
        %2808 = vdwg.mxu0
        %v2809 = vld [vmem:[#allocation2] sm:$0xff]
        %v2810 = vld [vmem:[#allocation2 + $0x8] sm:$0xff]
        %v2811 = vld [vmem:[#allocation2 + $0x10] sm:$0xff]
        %v2812 = vld [vmem:[#allocation2 + $0x18] sm:$0xff]
        %v2813 = vld [vmem:[#allocation2 + $0x20] sm:$0xff]
        %v2814 = vld [vmem:[#allocation2 + $0x28] sm:$0xff]
        %v2815 = vld [vmem:[#allocation2 + $0x30] sm:$0xff]
        %v2816 = vld [vmem:[#allocation2 + $0x38] sm:$0xff]
        %v2817 = vld [vmem:[#allocation2 + $0x40] sm:$0xff]
        %v2818 = vld [vmem:[#allocation2 + $0x48] sm:$0xff]
        %v2819 = vld [vmem:[#allocation2 + $0x50] sm:$0xff]
        %v2820 = vld [vmem:[#allocation2 + $0x58] sm:$0xff]
        %v2821 = vld [vmem:[#allocation2 + $0x60] sm:$0xff]
        %v2822 = vld [vmem:[#allocation2 + $0x68] sm:$0xff]
        %v2823 = vld [vmem:[#allocation2 + $0x70] sm:$0xff]
        %v2824 = vld [vmem:[#allocation2 + $0x78] sm:$0xff]
        %v2825 = vld [vmem:[#allocation2 + $0x80] sm:$0xff]
        %v2826 = vld [vmem:[#allocation2 + $0x88] sm:$0xff]
        %v2827 = vld [vmem:[#allocation2 + $0x90] sm:$0xff]
        %v2828 = vld [vmem:[#allocation2 + $0x98] sm:$0xff]
        %v2829 = vld [vmem:[#allocation2 + $0xa0] sm:$0xff]
        %v2830 = vld [vmem:[#allocation2 + $0xa8] sm:$0xff]
        %v2831 = vld [vmem:[#allocation2 + $0xb0] sm:$0xff]
        %v2832 = vld [vmem:[#allocation2 + $0xb8] sm:$0xff]
        %v2833 = vld [vmem:[#allocation2 + $0xc0] sm:$0xff]
        %v2834 = vld [vmem:[#allocation2 + $0xc8] sm:$0xff]
        %v2835 = vld [vmem:[#allocation2 + $0xd0] sm:$0xff]
        %v2836 = vld [vmem:[#allocation2 + $0xd8] sm:$0xff]
        %v2837 = vld [vmem:[#allocation2 + $0xe0] sm:$0xff]
        %v2838 = vld [vmem:[#allocation2 + $0xe8] sm:$0xff]
        %v2839 = vld [vmem:[#allocation2 + $0xf0] sm:$0xff]
        %v2840 = vld [vmem:[#allocation2 + $0xf8] sm:$0xff]
        %v2841 = vadd.f32 %v2809, %v2683
        %v2842 = vadd.f32 %v2810, %v2686
        %v2843 = vadd.f32 %v2811, %v2691
        %v2844 = vadd.f32 %v2812, %v2694
        %v2845 = vadd.f32 %v2813, %v2699
        %v2846 = vadd.f32 %v2814, %v2702
        %v2847 = vadd.f32 %v2815, %v2707
        %v2848 = vadd.f32 %v2816, %v2710
        %v2849 = vadd.f32 %v2817, %v2715
        %v2850 = vadd.f32 %v2818, %v2718
        %v2851 = vadd.f32 %v2819, %v2723
        %v2852 = vadd.f32 %v2820, %v2726
        %v2853 = vadd.f32 %v2821, %v2731
        %v2854 = vadd.f32 %v2822, %v2734
        %v2855 = vadd.f32 %v2823, %v2739
        %v2856 = vadd.f32 %v2824, %v2742
        %v2857 = vadd.f32 %v2825, %v2747
        %v2858 = vadd.f32 %v2826, %v2750
        %v2859 = vadd.f32 %v2827, %v2755
        %v2860 = vadd.f32 %v2828, %v2758
        %v2861 = vadd.f32 %v2829, %v2763
        %v2862 = vadd.f32 %v2830, %v2766
        %v2863 = vadd.f32 %v2831, %v2771
        %v2864 = vadd.f32 %v2832, %v2774
        %v2865 = vadd.f32 %v2833, %v2779
        %v2866 = vadd.f32 %v2834, %v2782
        %v2867 = vadd.f32 %v2835, %v2787
        %v2868 = vadd.f32 %v2836, %v2790
        %v2869 = vadd.f32 %v2837, %v2795
        %v2870 = vadd.f32 %v2838, %v2798
        %v2871 = vadd.f32 %v2839, %v2803
        %v2872 = vadd.f32 %v2840, %v2806
        %2873 = vst [vmem:[#allocation2] sm:$0xff] %v2841
        %2874 = vst [vmem:[#allocation2 + $0x8] sm:$0xff] %v2842
        %2875 = vst [vmem:[#allocation2 + $0x10] sm:$0xff] %v2843
        %2876 = vst [vmem:[#allocation2 + $0x18] sm:$0xff] %v2844
        %2877 = vst [vmem:[#allocation2 + $0x20] sm:$0xff] %v2845
        %2878 = vst [vmem:[#allocation2 + $0x28] sm:$0xff] %v2846
        %2879 = vst [vmem:[#allocation2 + $0x30] sm:$0xff] %v2847
        %2880 = vst [vmem:[#allocation2 + $0x38] sm:$0xff] %v2848
        %2881 = vst [vmem:[#allocation2 + $0x40] sm:$0xff] %v2849
        %2882 = vst [vmem:[#allocation2 + $0x48] sm:$0xff] %v2850
        %2883 = vst [vmem:[#allocation2 + $0x50] sm:$0xff] %v2851
        %2884 = vst [vmem:[#allocation2 + $0x58] sm:$0xff] %v2852
        %2885 = vst [vmem:[#allocation2 + $0x60] sm:$0xff] %v2853
        %2886 = vst [vmem:[#allocation2 + $0x68] sm:$0xff] %v2854
        %2887 = vst [vmem:[#allocation2 + $0x70] sm:$0xff] %v2855
        %2888 = vst [vmem:[#allocation2 + $0x78] sm:$0xff] %v2856
        %2889 = vst [vmem:[#allocation2 + $0x80] sm:$0xff] %v2857
        %2890 = vst [vmem:[#allocation2 + $0x88] sm:$0xff] %v2858
        %2891 = vst [vmem:[#allocation2 + $0x90] sm:$0xff] %v2859
        %2892 = vst [vmem:[#allocation2 + $0x98] sm:$0xff] %v2860
        %2893 = vst [vmem:[#allocation2 + $0xa0] sm:$0xff] %v2861
        %2894 = vst [vmem:[#allocation2 + $0xa8] sm:$0xff] %v2862
        %2895 = vst [vmem:[#allocation2 + $0xb0] sm:$0xff] %v2863
        %2896 = vst [vmem:[#allocation2 + $0xb8] sm:$0xff] %v2864
        %2897 = vst [vmem:[#allocation2 + $0xc0] sm:$0xff] %v2865
        %2898 = vst [vmem:[#allocation2 + $0xc8] sm:$0xff] %v2866
        %2899 = vst [vmem:[#allocation2 + $0xd0] sm:$0xff] %v2867
        %2900 = vst [vmem:[#allocation2 + $0xd8] sm:$0xff] %v2868
        %2901 = vst [vmem:[#allocation2 + $0xe0] sm:$0xff] %v2869
        %2902 = vst [vmem:[#allocation2 + $0xe8] sm:$0xff] %v2870
        %2903 = vst [vmem:[#allocation2 + $0xf0] sm:$0xff] %v2871
        %2904 = vst [vmem:[#allocation2 + $0xf8] sm:$0xff] %v2872
        %v2906 = vshrl.u32 %v233, 16
        %v2908 = vrot.slane %v2906, 4
        %v2909 = vshll.u32 %v233, 16
        %v2911 = vrot.slane %v2909, 5
        %v2912 = vor.u32 %v2908, %v2911
        %v2913 = vrot.slane %v2912, 4
        %v2915 = vshll.u32 %v234, 16
        %v2917 = vrot.slane %v2915, 5
        %v2918 = vsel %vm565, %v2913, %v2917
        %v2919 = vshrl.u32 %v234, 16
        %v2921 = vrot.slane %v2919, 4
        %v2922 = vor.u32 %v2921, %v2917
        %v2923 = vrot.slane %v2922, 4
        %v2925 = vshll.u32 %v235, 16
        %v2927 = vrot.slane %v2925, 5
        %v2928 = vsel %vm565, %v2923, %v2927
        %s2929 = scalar_lea.vmem %s1, 14
        %v2930 = vld [vmem:[%s2929] sm:$0x3]
        %v2931 = vunpack.c.l.b16 %v2918
        %v2932 = vunpack.c.l.b16 %v2928
        %v2933 = vpack.c.b16 %v2932, %v2931
        %v2935 = vsel %vm317, %v2933, 0
        %v2938 = vsel %vm366, %v2930, 0
        %2940 = vmatprep.subr.bf16.mxu0 0
        %2941 = vmatpush1.bf16.msra.mxu0 %v2938
        %2942 = vmatprep.subr.bf16.mxu0 0
        %2943 = vmatpush1.bf16.msra.mxu0 0
        %2944 = vmatprep.subr.bf16.mxu0 0
        %2945 = vmatpush1.bf16.msra.mxu0 0
        %2946 = vmatprep.subr.bf16.mxu0 0
        %2947 = vmatpush1.bf16.msra.mxu0 0
        %2948 = vmatprep.subr.bf16.mxu0 0
        %2949 = vmatpush1.bf16.msra.mxu0 0
        %2950 = vmatprep.subr.bf16.mxu0 0
        %2951 = vmatpush1.bf16.msra.mxu0 0
        %2952 = vmatprep.subr.bf16.mxu0 0
        %2953 = vmatpush1.bf16.msra.mxu0 0
        %2954 = vmatprep.subr.bf16.mxu0 0
        %2955 = vmatpush1.bf16.msra.mxu0 0
        %2956 = vmatprep.subr.bf16.mxu0 0
        %2957 = vmatpush1.bf16.msra.mxu0 0
        %2958 = vmatprep.subr.bf16.mxu0 0
        %2959 = vmatpush1.bf16.msra.mxu0 0
        %2960 = vmatprep.subr.bf16.mxu0 0
        %2961 = vmatpush1.bf16.msra.mxu0 0
        %2962 = vmatprep.subr.bf16.mxu0 0
        %2963 = vmatpush1.bf16.msra.mxu0 0
        %2964 = vmatprep.subr.bf16.mxu0 0
        %2965 = vmatpush1.bf16.msra.mxu0 0
        %2966 = vmatprep.subr.bf16.mxu0 0
        %2967 = vmatpush1.bf16.msra.mxu0 0
        %2968 = vmatprep.subr.bf16.mxu0 0
        %2969 = vmatpush1.bf16.msra.mxu0 0
        %2970 = vmatprep.subr.bf16.mxu0 0
        %2971 = vmatpush1.bf16.msra.mxu0 0
        %2972 = vmatprep.mubr.bf16.mxu0 0
        %2973 = vmatmul.mubr.bf16.gmra.mrb[0].mxu0 %v1007
        %v2974 = vpop.f32.mrb[0].mxu0
        %v2975 = vadd.f32 0.0, %v2974
        %v2976 = vpop.f32.mrb[0].mxu0
        %v2977 = vpop.f32.mrb[0].mxu0
        %v2978 = vadd.f32 0.0, %v2977
        %v2979 = vpop.f32.mrb[0].mxu0
        %2980 = vmatprep.mubr.bf16.mxu0 0
        %2981 = vmatmul.mubr.bf16.gmra.mrb[0].mxu0 %v1010
        %v2982 = vpop.f32.mrb[0].mxu0
        %v2983 = vadd.f32 0.0, %v2982
        %v2984 = vpop.f32.mrb[0].mxu0
        %v2985 = vpop.f32.mrb[0].mxu0
        %v2986 = vadd.f32 0.0, %v2985
        %v2987 = vpop.f32.mrb[0].mxu0
        %2988 = vmatprep.mubr.bf16.mxu0 0
        %2989 = vmatmul.mubr.bf16.gmra.mrb[0].mxu0 %v1013
        %v2990 = vpop.f32.mrb[0].mxu0
        %v2991 = vadd.f32 0.0, %v2990
        %v2992 = vpop.f32.mrb[0].mxu0
        %v2993 = vpop.f32.mrb[0].mxu0
        %v2994 = vadd.f32 0.0, %v2993
        %v2995 = vpop.f32.mrb[0].mxu0
        %2996 = vmatprep.mubr.bf16.mxu0 0
        %2997 = vmatmul.mubr.bf16.gmra.mrb[0].mxu0 %v1016
        %v2998 = vpop.f32.mrb[0].mxu0
        %v2999 = vadd.f32 0.0, %v2998
        %v3000 = vpop.f32.mrb[0].mxu0
        %v3001 = vpop.f32.mrb[0].mxu0
        %v3002 = vadd.f32 0.0, %v3001
        %v3003 = vpop.f32.mrb[0].mxu0
        %3004 = vmatprep.mubr.bf16.mxu0 0
        %3005 = vmatmul.mubr.bf16.gmra.mrb[0].mxu0 %v1019
        %v3006 = vpop.f32.mrb[0].mxu0
        %v3007 = vadd.f32 0.0, %v3006
        %v3008 = vpop.f32.mrb[0].mxu0
        %v3009 = vpop.f32.mrb[0].mxu0
        %v3010 = vadd.f32 0.0, %v3009
        %v3011 = vpop.f32.mrb[0].mxu0
        %3012 = vmatprep.mubr.bf16.mxu0 0
        %3013 = vmatmul.mubr.bf16.gmra.mrb[0].mxu0 %v1022
        %v3014 = vpop.f32.mrb[0].mxu0
        %v3015 = vadd.f32 0.0, %v3014
        %v3016 = vpop.f32.mrb[0].mxu0
        %v3017 = vpop.f32.mrb[0].mxu0
        %v3018 = vadd.f32 0.0, %v3017
        %v3019 = vpop.f32.mrb[0].mxu0
        %3020 = vmatprep.mubr.bf16.mxu0 0
        %3021 = vmatmul.mubr.bf16.gmra.mrb[0].mxu0 %v1025
        %v3022 = vpop.f32.mrb[0].mxu0
        %v3023 = vadd.f32 0.0, %v3022
        %v3024 = vpop.f32.mrb[0].mxu0
        %v3025 = vpop.f32.mrb[0].mxu0
        %v3026 = vadd.f32 0.0, %v3025
        %v3027 = vpop.f32.mrb[0].mxu0
        %3028 = vmatprep.mubr.bf16.mxu0 0
        %3029 = vmatmul.mubr.bf16.gmra.mrb[0].mxu0 %v1028
        %v3030 = vpop.f32.mrb[0].mxu0
        %v3031 = vadd.f32 0.0, %v3030
        %v3032 = vpop.f32.mrb[0].mxu0
        %v3033 = vpop.f32.mrb[0].mxu0
        %v3034 = vadd.f32 0.0, %v3033
        %v3035 = vpop.f32.mrb[0].mxu0
        %3036 = vmatprep.mubr.bf16.mxu0 0
        %3037 = vmatmul.mubr.bf16.gmra.mrb[0].mxu0 %v1031
        %v3038 = vpop.f32.mrb[0].mxu0
        %v3039 = vadd.f32 0.0, %v3038
        %v3040 = vpop.f32.mrb[0].mxu0
        %v3041 = vpop.f32.mrb[0].mxu0
        %v3042 = vadd.f32 0.0, %v3041
        %v3043 = vpop.f32.mrb[0].mxu0
        %3044 = vmatprep.mubr.bf16.mxu0 0
        %3045 = vmatmul.mubr.bf16.gmra.mrb[0].mxu0 %v1034
        %v3046 = vpop.f32.mrb[0].mxu0
        %v3047 = vadd.f32 0.0, %v3046
        %v3048 = vpop.f32.mrb[0].mxu0
        %v3049 = vpop.f32.mrb[0].mxu0
        %v3050 = vadd.f32 0.0, %v3049
        %v3051 = vpop.f32.mrb[0].mxu0
        %3052 = vmatprep.mubr.bf16.mxu0 0
        %3053 = vmatmul.mubr.bf16.gmra.mrb[0].mxu0 %v1037
        %v3054 = vpop.f32.mrb[0].mxu0
        %v3055 = vadd.f32 0.0, %v3054
        %v3056 = vpop.f32.mrb[0].mxu0
        %v3057 = vpop.f32.mrb[0].mxu0
        %v3058 = vadd.f32 0.0, %v3057
        %v3059 = vpop.f32.mrb[0].mxu0
        %3060 = vmatprep.mubr.bf16.mxu0 0
        %3061 = vmatmul.mubr.bf16.gmra.mrb[0].mxu0 %v1040
        %v3062 = vpop.f32.mrb[0].mxu0
        %v3063 = vadd.f32 0.0, %v3062
        %v3064 = vpop.f32.mrb[0].mxu0
        %v3065 = vpop.f32.mrb[0].mxu0
        %v3066 = vadd.f32 0.0, %v3065
        %v3067 = vpop.f32.mrb[0].mxu0
        %3068 = vmatprep.mubr.bf16.mxu0 0
        %3069 = vmatmul.mubr.bf16.gmra.mrb[0].mxu0 %v1043
        %v3070 = vpop.f32.mrb[0].mxu0
        %v3071 = vadd.f32 0.0, %v3070
        %v3072 = vpop.f32.mrb[0].mxu0
        %v3073 = vpop.f32.mrb[0].mxu0
        %v3074 = vadd.f32 0.0, %v3073
        %v3075 = vpop.f32.mrb[0].mxu0
        %3076 = vmatprep.mubr.bf16.mxu0 0
        %3077 = vmatmul.mubr.bf16.gmra.mrb[0].mxu0 %v1046
        %v3078 = vpop.f32.mrb[0].mxu0
        %v3079 = vadd.f32 0.0, %v3078
        %v3080 = vpop.f32.mrb[0].mxu0
        %v3081 = vpop.f32.mrb[0].mxu0
        %v3082 = vadd.f32 0.0, %v3081
        %v3083 = vpop.f32.mrb[0].mxu0
        %3084 = vmatprep.mubr.bf16.mxu0 0
        %3085 = vmatmul.mubr.bf16.gmra.mrb[0].mxu0 %v2097
        %v3086 = vpop.f32.mrb[0].mxu0
        %v3087 = vadd.f32 0.0, %v3086
        %v3088 = vpop.f32.mrb[0].mxu0
        %v3089 = vpop.f32.mrb[0].mxu0
        %v3090 = vadd.f32 0.0, %v3089
        %v3091 = vpop.f32.mrb[0].mxu0
        %3092 = vmatprep.mubr.bf16.mxu0 0
        %3093 = vmatmul.mubr.bf16.gmra.mrb[0].mxu0 %v2935
        %v3094 = vpop.f32.mrb[0].mxu0
        %v3095 = vadd.f32 0.0, %v3094
        %v3096 = vpop.f32.mrb[0].mxu0
        %v3097 = vpop.f32.mrb[0].mxu0
        %v3098 = vadd.f32 0.0, %v3097
        %v3099 = vpop.f32.mrb[0].mxu0
        %3100 = vdwg.mxu0
        %v3101 = vld [vmem:[#allocation2] sm:$0xff]
        %v3102 = vld [vmem:[#allocation2 + $0x8] sm:$0xff]
        %v3103 = vld [vmem:[#allocation2 + $0x10] sm:$0xff]
        %v3104 = vld [vmem:[#allocation2 + $0x18] sm:$0xff]
        %v3105 = vld [vmem:[#allocation2 + $0x20] sm:$0xff]
        %v3106 = vld [vmem:[#allocation2 + $0x28] sm:$0xff]
        %v3107 = vld [vmem:[#allocation2 + $0x30] sm:$0xff]
        %v3108 = vld [vmem:[#allocation2 + $0x38] sm:$0xff]
        %v3109 = vld [vmem:[#allocation2 + $0x40] sm:$0xff]
        %v3110 = vld [vmem:[#allocation2 + $0x48] sm:$0xff]
        %v3111 = vld [vmem:[#allocation2 + $0x50] sm:$0xff]
        %v3112 = vld [vmem:[#allocation2 + $0x58] sm:$0xff]
        %v3113 = vld [vmem:[#allocation2 + $0x60] sm:$0xff]
        %v3114 = vld [vmem:[#allocation2 + $0x68] sm:$0xff]
        %v3115 = vld [vmem:[#allocation2 + $0x70] sm:$0xff]
        %v3116 = vld [vmem:[#allocation2 + $0x78] sm:$0xff]
        %v3117 = vld [vmem:[#allocation2 + $0x80] sm:$0xff]
        %v3118 = vld [vmem:[#allocation2 + $0x88] sm:$0xff]
        %v3119 = vld [vmem:[#allocation2 + $0x90] sm:$0xff]
        %v3120 = vld [vmem:[#allocation2 + $0x98] sm:$0xff]
        %v3121 = vld [vmem:[#allocation2 + $0xa0] sm:$0xff]
        %v3122 = vld [vmem:[#allocation2 + $0xa8] sm:$0xff]
        %v3123 = vld [vmem:[#allocation2 + $0xb0] sm:$0xff]
        %v3124 = vld [vmem:[#allocation2 + $0xb8] sm:$0xff]
        %v3125 = vld [vmem:[#allocation2 + $0xc0] sm:$0xff]
        %v3126 = vld [vmem:[#allocation2 + $0xc8] sm:$0xff]
        %v3127 = vld [vmem:[#allocation2 + $0xd0] sm:$0xff]
        %v3128 = vld [vmem:[#allocation2 + $0xd8] sm:$0xff]
        %v3129 = vld [vmem:[#allocation2 + $0xe0] sm:$0xff]
        %v3130 = vld [vmem:[#allocation2 + $0xe8] sm:$0xff]
        %v3131 = vld [vmem:[#allocation2 + $0xf0] sm:$0xff]
        %v3132 = vld [vmem:[#allocation2 + $0xf8] sm:$0xff]
        %v3133 = vadd.f32 %v3101, %v2975
        %v3134 = vadd.f32 %v3102, %v2978
        %v3135 = vadd.f32 %v3103, %v2983
        %v3136 = vadd.f32 %v3104, %v2986
        %v3137 = vadd.f32 %v3105, %v2991
        %v3138 = vadd.f32 %v3106, %v2994
        %v3139 = vadd.f32 %v3107, %v2999
        %v3140 = vadd.f32 %v3108, %v3002
        %v3141 = vadd.f32 %v3109, %v3007
        %v3142 = vadd.f32 %v3110, %v3010
        %v3143 = vadd.f32 %v3111, %v3015
        %v3144 = vadd.f32 %v3112, %v3018
        %v3145 = vadd.f32 %v3113, %v3023
        %v3146 = vadd.f32 %v3114, %v3026
        %v3147 = vadd.f32 %v3115, %v3031
        %v3148 = vadd.f32 %v3116, %v3034
        %v3149 = vadd.f32 %v3117, %v3039
        %v3150 = vadd.f32 %v3118, %v3042
        %v3151 = vadd.f32 %v3119, %v3047
        %v3152 = vadd.f32 %v3120, %v3050
        %v3153 = vadd.f32 %v3121, %v3055
        %v3154 = vadd.f32 %v3122, %v3058
        %v3155 = vadd.f32 %v3123, %v3063
        %v3156 = vadd.f32 %v3124, %v3066
        %v3157 = vadd.f32 %v3125, %v3071
        %v3158 = vadd.f32 %v3126, %v3074
        %v3159 = vadd.f32 %v3127, %v3079
        %v3160 = vadd.f32 %v3128, %v3082
        %v3161 = vadd.f32 %v3129, %v3087
        %v3162 = vadd.f32 %v3130, %v3090
        %v3163 = vadd.f32 %v3131, %v3095
        %v3164 = vadd.f32 %v3132, %v3098
        %3165 = vst [vmem:[#allocation2] sm:$0xff] %v3133
        %3166 = vst [vmem:[#allocation2 + $0x8] sm:$0xff] %v3134
        %3167 = vst [vmem:[#allocation2 + $0x10] sm:$0xff] %v3135
        %3168 = vst [vmem:[#allocation2 + $0x18] sm:$0xff] %v3136
        %3169 = vst [vmem:[#allocation2 + $0x20] sm:$0xff] %v3137
        %3170 = vst [vmem:[#allocation2 + $0x28] sm:$0xff] %v3138
        %3171 = vst [vmem:[#allocation2 + $0x30] sm:$0xff] %v3139
        %3172 = vst [vmem:[#allocation2 + $0x38] sm:$0xff] %v3140
        %3173 = vst [vmem:[#allocation2 + $0x40] sm:$0xff] %v3141
        %3174 = vst [vmem:[#allocation2 + $0x48] sm:$0xff] %v3142
        %3175 = vst [vmem:[#allocation2 + $0x50] sm:$0xff] %v3143
        %3176 = vst [vmem:[#allocation2 + $0x58] sm:$0xff] %v3144
        %3177 = vst [vmem:[#allocation2 + $0x60] sm:$0xff] %v3145
        %3178 = vst [vmem:[#allocation2 + $0x68] sm:$0xff] %v3146
        %3179 = vst [vmem:[#allocation2 + $0x70] sm:$0xff] %v3147
        %3180 = vst [vmem:[#allocation2 + $0x78] sm:$0xff] %v3148
        %3181 = vst [vmem:[#allocation2 + $0x80] sm:$0xff] %v3149
        %3182 = vst [vmem:[#allocation2 + $0x88] sm:$0xff] %v3150
        %3183 = vst [vmem:[#allocation2 + $0x90] sm:$0xff] %v3151
        %3184 = vst [vmem:[#allocation2 + $0x98] sm:$0xff] %v3152
        %3185 = vst [vmem:[#allocation2 + $0xa0] sm:$0xff] %v3153
        %3186 = vst [vmem:[#allocation2 + $0xa8] sm:$0xff] %v3154
        %3187 = vst [vmem:[#allocation2 + $0xb0] sm:$0xff] %v3155
        %3188 = vst [vmem:[#allocation2 + $0xb8] sm:$0xff] %v3156
        %3189 = vst [vmem:[#allocation2 + $0xc0] sm:$0xff] %v3157
        %3190 = vst [vmem:[#allocation2 + $0xc8] sm:$0xff] %v3158
        %3191 = vst [vmem:[#allocation2 + $0xd0] sm:$0xff] %v3159
        %3192 = vst [vmem:[#allocation2 + $0xd8] sm:$0xff] %v3160
        %3193 = vst [vmem:[#allocation2 + $0xe0] sm:$0xff] %v3161
        %3194 = vst [vmem:[#allocation2 + $0xe8] sm:$0xff] %v3162
        %3195 = vst [vmem:[#allocation2 + $0xf0] sm:$0xff] %v3163
        %3196 = vst [vmem:[#allocation2 + $0xf8] sm:$0xff] %v3164
        %v3198 = vrot.slane %v233, 5
        %v3199 = vrot.slane %v3198, 4
        %v3200 = vrot.slane %v234, 5
        %v3201 = vsel %vm1326, %v3199, %v3200
        %v3202 = vrot.slane %v3200, 4
        %v3203 = vrot.slane %v235, 5
        %v3204 = vsel %vm1326, %v3202, %v3203
        %s3205 = scalar_lea.vmem %s1, 16
        %v3206 = vld [vmem:[%s3205] sm:$0x3]
        %v3207 = vunpack.c.l.b16 %v3201
        %v3208 = vunpack.c.l.b16 %v3204
        %v3209 = vpack.c.b16 %v3208, %v3207
        %v3211 = vsel %vm317, %v3209, 0
        %v3214 = vsel %vm366, %v3206, 0
        %3216 = vmatprep.subr.bf16.mxu0 0
        %3217 = vmatpush1.bf16.msra.mxu0 %v3214
        %3218 = vmatprep.subr.bf16.mxu0 0
        %3219 = vmatpush1.bf16.msra.mxu0 0
        %3220 = vmatprep.subr.bf16.mxu0 0
        %3221 = vmatpush1.bf16.msra.mxu0 0
        %3222 = vmatprep.subr.bf16.mxu0 0
        %3223 = vmatpush1.bf16.msra.mxu0 0
        %3224 = vmatprep.subr.bf16.mxu0 0
        %3225 = vmatpush1.bf16.msra.mxu0 0
        %3226 = vmatprep.subr.bf16.mxu0 0
        %3227 = vmatpush1.bf16.msra.mxu0 0
        %3228 = vmatprep.subr.bf16.mxu0 0
        %3229 = vmatpush1.bf16.msra.mxu0 0
        %3230 = vmatprep.subr.bf16.mxu0 0
        %3231 = vmatpush1.bf16.msra.mxu0 0
        %3232 = vmatprep.subr.bf16.mxu0 0
        %3233 = vmatpush1.bf16.msra.mxu0 0
        %3234 = vmatprep.subr.bf16.mxu0 0
        %3235 = vmatpush1.bf16.msra.mxu0 0
        %3236 = vmatprep.subr.bf16.mxu0 0
        %3237 = vmatpush1.bf16.msra.mxu0 0
        %3238 = vmatprep.subr.bf16.mxu0 0
        %3239 = vmatpush1.bf16.msra.mxu0 0
        %3240 = vmatprep.subr.bf16.mxu0 0
        %3241 = vmatpush1.bf16.msra.mxu0 0
        %3242 = vmatprep.subr.bf16.mxu0 0
        %3243 = vmatpush1.bf16.msra.mxu0 0
        %3244 = vmatprep.subr.bf16.mxu0 0
        %3245 = vmatpush1.bf16.msra.mxu0 0
        %3246 = vmatprep.subr.bf16.mxu0 0
        %3247 = vmatpush1.bf16.msra.mxu0 0
        %3248 = vmatprep.mubr.bf16.mxu0 0
        %3249 = vmatmul.mubr.bf16.gmra.mrb[0].mxu0 %v1496
        %v3250 = vpop.f32.mrb[0].mxu0
        %v3251 = vadd.f32 0.0, %v3250
        %v3252 = vpop.f32.mrb[0].mxu0
        %v3253 = vpop.f32.mrb[0].mxu0
        %v3254 = vadd.f32 0.0, %v3253
        %v3255 = vpop.f32.mrb[0].mxu0
        %3256 = vmatprep.mubr.bf16.mxu0 0
        %3257 = vmatmul.mubr.bf16.gmra.mrb[0].mxu0 %v1499
        %v3258 = vpop.f32.mrb[0].mxu0
        %v3259 = vadd.f32 0.0, %v3258
        %v3260 = vpop.f32.mrb[0].mxu0
        %v3261 = vpop.f32.mrb[0].mxu0
        %v3262 = vadd.f32 0.0, %v3261
        %v3263 = vpop.f32.mrb[0].mxu0
        %3264 = vmatprep.mubr.bf16.mxu0 0
        %3265 = vmatmul.mubr.bf16.gmra.mrb[0].mxu0 %v1502
        %v3266 = vpop.f32.mrb[0].mxu0
        %v3267 = vadd.f32 0.0, %v3266
        %v3268 = vpop.f32.mrb[0].mxu0
        %v3269 = vpop.f32.mrb[0].mxu0
        %v3270 = vadd.f32 0.0, %v3269
        %v3271 = vpop.f32.mrb[0].mxu0
        %3272 = vmatprep.mubr.bf16.mxu0 0
        %3273 = vmatmul.mubr.bf16.gmra.mrb[0].mxu0 %v1505
        %v3274 = vpop.f32.mrb[0].mxu0
        %v3275 = vadd.f32 0.0, %v3274
        %v3276 = vpop.f32.mrb[0].mxu0
        %v3277 = vpop.f32.mrb[0].mxu0
        %v3278 = vadd.f32 0.0, %v3277
        %v3279 = vpop.f32.mrb[0].mxu0
        %3280 = vmatprep.mubr.bf16.mxu0 0
        %3281 = vmatmul.mubr.bf16.gmra.mrb[0].mxu0 %v1508
        %v3282 = vpop.f32.mrb[0].mxu0
        %v3283 = vadd.f32 0.0, %v3282
        %v3284 = vpop.f32.mrb[0].mxu0
        %v3285 = vpop.f32.mrb[0].mxu0
        %v3286 = vadd.f32 0.0, %v3285
        %v3287 = vpop.f32.mrb[0].mxu0
        %3288 = vmatprep.mubr.bf16.mxu0 0
        %3289 = vmatmul.mubr.bf16.gmra.mrb[0].mxu0 %v1511
        %v3290 = vpop.f32.mrb[0].mxu0
        %v3291 = vadd.f32 0.0, %v3290
        %v3292 = vpop.f32.mrb[0].mxu0
        %v3293 = vpop.f32.mrb[0].mxu0
        %v3294 = vadd.f32 0.0, %v3293
        %v3295 = vpop.f32.mrb[0].mxu0
        %3296 = vmatprep.mubr.bf16.mxu0 0
        %3297 = vmatmul.mubr.bf16.gmra.mrb[0].mxu0 %v1514
        %v3298 = vpop.f32.mrb[0].mxu0
        %v3299 = vadd.f32 0.0, %v3298
        %v3300 = vpop.f32.mrb[0].mxu0
        %v3301 = vpop.f32.mrb[0].mxu0
        %v3302 = vadd.f32 0.0, %v3301
        %v3303 = vpop.f32.mrb[0].mxu0
        %3304 = vmatprep.mubr.bf16.mxu0 0
        %3305 = vmatmul.mubr.bf16.gmra.mrb[0].mxu0 %v1517
        %v3306 = vpop.f32.mrb[0].mxu0
        %v3307 = vadd.f32 0.0, %v3306
        %v3308 = vpop.f32.mrb[0].mxu0
        %v3309 = vpop.f32.mrb[0].mxu0
        %v3310 = vadd.f32 0.0, %v3309
        %v3311 = vpop.f32.mrb[0].mxu0
        %3312 = vmatprep.mubr.bf16.mxu0 0
        %3313 = vmatmul.mubr.bf16.gmra.mrb[0].mxu0 %v1520
        %v3314 = vpop.f32.mrb[0].mxu0
        %v3315 = vadd.f32 0.0, %v3314
        %v3316 = vpop.f32.mrb[0].mxu0
        %v3317 = vpop.f32.mrb[0].mxu0
        %v3318 = vadd.f32 0.0, %v3317
        %v3319 = vpop.f32.mrb[0].mxu0
        %3320 = vmatprep.mubr.bf16.mxu0 0
        %3321 = vmatmul.mubr.bf16.gmra.mrb[0].mxu0 %v1523
        %v3322 = vpop.f32.mrb[0].mxu0
        %v3323 = vadd.f32 0.0, %v3322
        %v3324 = vpop.f32.mrb[0].mxu0
        %v3325 = vpop.f32.mrb[0].mxu0
        %v3326 = vadd.f32 0.0, %v3325
        %v3327 = vpop.f32.mrb[0].mxu0
        %3328 = vmatprep.mubr.bf16.mxu0 0
        %3329 = vmatmul.mubr.bf16.gmra.mrb[0].mxu0 %v1526
        %v3330 = vpop.f32.mrb[0].mxu0
        %v3331 = vadd.f32 0.0, %v3330
        %v3332 = vpop.f32.mrb[0].mxu0
        %v3333 = vpop.f32.mrb[0].mxu0
        %v3334 = vadd.f32 0.0, %v3333
        %v3335 = vpop.f32.mrb[0].mxu0
        %3336 = vmatprep.mubr.bf16.mxu0 0
        %3337 = vmatmul.mubr.bf16.gmra.mrb[0].mxu0 %v1529
        %v3338 = vpop.f32.mrb[0].mxu0
        %v3339 = vadd.f32 0.0, %v3338
        %v3340 = vpop.f32.mrb[0].mxu0
        %v3341 = vpop.f32.mrb[0].mxu0
        %v3342 = vadd.f32 0.0, %v3341
        %v3343 = vpop.f32.mrb[0].mxu0
        %3344 = vmatprep.mubr.bf16.mxu0 0
        %3345 = vmatmul.mubr.bf16.gmra.mrb[0].mxu0 %v1532
        %v3346 = vpop.f32.mrb[0].mxu0
        %v3347 = vadd.f32 0.0, %v3346
        %v3348 = vpop.f32.mrb[0].mxu0
        %v3349 = vpop.f32.mrb[0].mxu0
        %v3350 = vadd.f32 0.0, %v3349
        %v3351 = vpop.f32.mrb[0].mxu0
        %3352 = vmatprep.mubr.bf16.mxu0 0
        %3353 = vmatmul.mubr.bf16.gmra.mrb[0].mxu0 %v1535
        %v3354 = vpop.f32.mrb[0].mxu0
        %v3355 = vadd.f32 0.0, %v3354
        %v3356 = vpop.f32.mrb[0].mxu0
        %v3357 = vpop.f32.mrb[0].mxu0
        %v3358 = vadd.f32 0.0, %v3357
        %v3359 = vpop.f32.mrb[0].mxu0
        %3360 = vmatprep.mubr.bf16.mxu0 0
        %3361 = vmatmul.mubr.bf16.gmra.mrb[0].mxu0 %v2373
        %v3362 = vpop.f32.mrb[0].mxu0
        %v3363 = vadd.f32 0.0, %v3362
        %v3364 = vpop.f32.mrb[0].mxu0
        %v3365 = vpop.f32.mrb[0].mxu0
        %v3366 = vadd.f32 0.0, %v3365
        %v3367 = vpop.f32.mrb[0].mxu0
        %3368 = vmatprep.mubr.bf16.mxu0 0
        %3369 = vmatmul.mubr.bf16.gmra.mrb[0].mxu0 %v3211
        %v3370 = vpop.f32.mrb[0].mxu0
        %v3371 = vadd.f32 0.0, %v3370
        %v3372 = vpop.f32.mrb[0].mxu0
        %v3373 = vpop.f32.mrb[0].mxu0
        %v3374 = vadd.f32 0.0, %v3373
        %v3375 = vpop.f32.mrb[0].mxu0
        %3376 = vdwg.mxu0
        %v3377 = vld [vmem:[#allocation2] sm:$0xff]
        %v3378 = vld [vmem:[#allocation2 + $0x8] sm:$0xff]
        %v3379 = vld [vmem:[#allocation2 + $0x10] sm:$0xff]
        %v3380 = vld [vmem:[#allocation2 + $0x18] sm:$0xff]
        %v3381 = vld [vmem:[#allocation2 + $0x20] sm:$0xff]
        %v3382 = vld [vmem:[#allocation2 + $0x28] sm:$0xff]
        %v3383 = vld [vmem:[#allocation2 + $0x30] sm:$0xff]
        %v3384 = vld [vmem:[#allocation2 + $0x38] sm:$0xff]
        %v3385 = vld [vmem:[#allocation2 + $0x40] sm:$0xff]
        %v3386 = vld [vmem:[#allocation2 + $0x48] sm:$0xff]
        %v3387 = vld [vmem:[#allocation2 + $0x50] sm:$0xff]
        %v3388 = vld [vmem:[#allocation2 + $0x58] sm:$0xff]
        %v3389 = vld [vmem:[#allocation2 + $0x60] sm:$0xff]
        %v3390 = vld [vmem:[#allocation2 + $0x68] sm:$0xff]
        %v3391 = vld [vmem:[#allocation2 + $0x70] sm:$0xff]
        %v3392 = vld [vmem:[#allocation2 + $0x78] sm:$0xff]
        %v3393 = vld [vmem:[#allocation2 + $0x80] sm:$0xff]
        %v3394 = vld [vmem:[#allocation2 + $0x88] sm:$0xff]
        %v3395 = vld [vmem:[#allocation2 + $0x90] sm:$0xff]
        %v3396 = vld [vmem:[#allocation2 + $0x98] sm:$0xff]
        %v3397 = vld [vmem:[#allocation2 + $0xa0] sm:$0xff]
        %v3398 = vld [vmem:[#allocation2 + $0xa8] sm:$0xff]
        %v3399 = vld [vmem:[#allocation2 + $0xb0] sm:$0xff]
        %v3400 = vld [vmem:[#allocation2 + $0xb8] sm:$0xff]
        %v3401 = vld [vmem:[#allocation2 + $0xc0] sm:$0xff]
        %v3402 = vld [vmem:[#allocation2 + $0xc8] sm:$0xff]
        %v3403 = vld [vmem:[#allocation2 + $0xd0] sm:$0xff]
        %v3404 = vld [vmem:[#allocation2 + $0xd8] sm:$0xff]
        %v3405 = vld [vmem:[#allocation2 + $0xe0] sm:$0xff]
        %v3406 = vld [vmem:[#allocation2 + $0xe8] sm:$0xff]
        %v3407 = vld [vmem:[#allocation2 + $0xf0] sm:$0xff]
        %v3408 = vld [vmem:[#allocation2 + $0xf8] sm:$0xff]
        %v3409 = vadd.f32 %v3377, %v3251
        %v3410 = vadd.f32 %v3378, %v3254
        %v3411 = vadd.f32 %v3379, %v3259
        %v3412 = vadd.f32 %v3380, %v3262
        %v3413 = vadd.f32 %v3381, %v3267
        %v3414 = vadd.f32 %v3382, %v3270
        %v3415 = vadd.f32 %v3383, %v3275
        %v3416 = vadd.f32 %v3384, %v3278
        %v3417 = vadd.f32 %v3385, %v3283
        %v3418 = vadd.f32 %v3386, %v3286
        %v3419 = vadd.f32 %v3387, %v3291
        %v3420 = vadd.f32 %v3388, %v3294
        %v3421 = vadd.f32 %v3389, %v3299
        %v3422 = vadd.f32 %v3390, %v3302
        %v3423 = vadd.f32 %v3391, %v3307
        %v3424 = vadd.f32 %v3392, %v3310
        %v3425 = vadd.f32 %v3393, %v3315
        %v3426 = vadd.f32 %v3394, %v3318
        %v3427 = vadd.f32 %v3395, %v3323
        %v3428 = vadd.f32 %v3396, %v3326
        %v3429 = vadd.f32 %v3397, %v3331
        %v3430 = vadd.f32 %v3398, %v3334
        %v3431 = vadd.f32 %v3399, %v3339
        %v3432 = vadd.f32 %v3400, %v3342
        %v3433 = vadd.f32 %v3401, %v3347
        %v3434 = vadd.f32 %v3402, %v3350
        %v3435 = vadd.f32 %v3403, %v3355
        %v3436 = vadd.f32 %v3404, %v3358
        %v3437 = vadd.f32 %v3405, %v3363
        %v3438 = vadd.f32 %v3406, %v3366
        %v3439 = vadd.f32 %v3407, %v3371
        %v3440 = vadd.f32 %v3408, %v3374
        %3441 = vst [vmem:[#allocation2] sm:$0xff] %v3409
        %3442 = vst [vmem:[#allocation2 + $0x8] sm:$0xff] %v3410
        %3443 = vst [vmem:[#allocation2 + $0x10] sm:$0xff] %v3411
        %3444 = vst [vmem:[#allocation2 + $0x18] sm:$0xff] %v3412
        %3445 = vst [vmem:[#allocation2 + $0x20] sm:$0xff] %v3413
        %3446 = vst [vmem:[#allocation2 + $0x28] sm:$0xff] %v3414
        %3447 = vst [vmem:[#allocation2 + $0x30] sm:$0xff] %v3415
        %3448 = vst [vmem:[#allocation2 + $0x38] sm:$0xff] %v3416
        %3449 = vst [vmem:[#allocation2 + $0x40] sm:$0xff] %v3417
        %3450 = vst [vmem:[#allocation2 + $0x48] sm:$0xff] %v3418
        %3451 = vst [vmem:[#allocation2 + $0x50] sm:$0xff] %v3419
        %3452 = vst [vmem:[#allocation2 + $0x58] sm:$0xff] %v3420
        %3453 = vst [vmem:[#allocation2 + $0x60] sm:$0xff] %v3421
        %3454 = vst [vmem:[#allocation2 + $0x68] sm:$0xff] %v3422
        %3455 = vst [vmem:[#allocation2 + $0x70] sm:$0xff] %v3423
        %3456 = vst [vmem:[#allocation2 + $0x78] sm:$0xff] %v3424
        %3457 = vst [vmem:[#allocation2 + $0x80] sm:$0xff] %v3425
        %3458 = vst [vmem:[#allocation2 + $0x88] sm:$0xff] %v3426
        %3459 = vst [vmem:[#allocation2 + $0x90] sm:$0xff] %v3427
        %3460 = vst [vmem:[#allocation2 + $0x98] sm:$0xff] %v3428
        %3461 = vst [vmem:[#allocation2 + $0xa0] sm:$0xff] %v3429
        %3462 = vst [vmem:[#allocation2 + $0xa8] sm:$0xff] %v3430
        %3463 = vst [vmem:[#allocation2 + $0xb0] sm:$0xff] %v3431
        %3464 = vst [vmem:[#allocation2 + $0xb8] sm:$0xff] %v3432
        %3465 = vst [vmem:[#allocation2 + $0xc0] sm:$0xff] %v3433
        %3466 = vst [vmem:[#allocation2 + $0xc8] sm:$0xff] %v3434
        %3467 = vst [vmem:[#allocation2 + $0xd0] sm:$0xff] %v3435
        %3468 = vst [vmem:[#allocation2 + $0xd8] sm:$0xff] %v3436
        %3469 = vst [vmem:[#allocation2 + $0xe0] sm:$0xff] %v3437
        %3470 = vst [vmem:[#allocation2 + $0xe8] sm:$0xff] %v3438
        %3471 = vst [vmem:[#allocation2 + $0xf0] sm:$0xff] %v3439
        %3472 = vst [vmem:[#allocation2 + $0xf8] sm:$0xff] %v3440
        %v3473 = vld [vmem:[#allocation2] sm:$0xff]
        %v3474 = vld [vmem:[#allocation2 + $0x8] sm:$0xff]
        %v3475 = vld [vmem:[#allocation2 + $0x10] sm:$0xff]
        %v3476 = vld [vmem:[#allocation2 + $0x18] sm:$0xff]
        %v3477 = vld [vmem:[#allocation2 + $0x20] sm:$0xff]
        %v3478 = vld [vmem:[#allocation2 + $0x28] sm:$0xff]
        %v3479 = vld [vmem:[#allocation2 + $0x30] sm:$0xff]
        %v3480 = vld [vmem:[#allocation2 + $0x38] sm:$0xff]
        %v3481 = vld [vmem:[#allocation2 + $0x40] sm:$0xff]
        %v3482 = vld [vmem:[#allocation2 + $0x48] sm:$0xff]
        %v3483 = vld [vmem:[#allocation2 + $0x50] sm:$0xff]
        %v3484 = vld [vmem:[#allocation2 + $0x58] sm:$0xff]
        %v3485 = vld [vmem:[#allocation2 + $0x60] sm:$0xff]
        %v3486 = vld [vmem:[#allocation2 + $0x68] sm:$0xff]
        %v3487 = vld [vmem:[#allocation2 + $0x70] sm:$0xff]
        %v3488 = vld [vmem:[#allocation2 + $0x78] sm:$0xff]
        %v3489 = vld [vmem:[#allocation2 + $0x80] sm:$0xff]
        %v3490 = vld [vmem:[#allocation2 + $0x88] sm:$0xff]
        %v3491 = vld [vmem:[#allocation2 + $0x90] sm:$0xff]
        %v3492 = vld [vmem:[#allocation2 + $0x98] sm:$0xff]
        %v3493 = vld [vmem:[#allocation2 + $0xa0] sm:$0xff]
        %v3494 = vld [vmem:[#allocation2 + $0xa8] sm:$0xff]
        %v3495 = vld [vmem:[#allocation2 + $0xb0] sm:$0xff]
        %v3496 = vld [vmem:[#allocation2 + $0xb8] sm:$0xff]
        %v3497 = vld [vmem:[#allocation2 + $0xc0] sm:$0xff]
        %v3498 = vld [vmem:[#allocation2 + $0xc8] sm:$0xff]
        %v3499 = vld [vmem:[#allocation2 + $0xd0] sm:$0xff]
        %v3500 = vld [vmem:[#allocation2 + $0xd8] sm:$0xff]
        %v3501 = vld [vmem:[#allocation2 + $0xe0] sm:$0xff]
        %v3502 = vld [vmem:[#allocation2 + $0xe8] sm:$0xff]
        %v3503 = vld [vmem:[#allocation2 + $0xf0] sm:$0xff]
        %v3504 = vld [vmem:[#allocation2 + $0xf8] sm:$0xff]
        %v3505 = vpack.c.bf16 %v3474, %v3473
        %v3506 = vpack.c.bf16 %v3476, %v3475
        %v3507 = vpack.c.bf16 %v3478, %v3477
        %v3508 = vpack.c.bf16 %v3480, %v3479
        %v3509 = vpack.c.bf16 %v3482, %v3481
        %v3510 = vpack.c.bf16 %v3484, %v3483
        %v3511 = vpack.c.bf16 %v3486, %v3485
        %v3512 = vpack.c.bf16 %v3488, %v3487
        %v3513 = vpack.c.bf16 %v3490, %v3489
        %v3514 = vpack.c.bf16 %v3492, %v3491
        %v3515 = vpack.c.bf16 %v3494, %v3493
        %v3516 = vpack.c.bf16 %v3496, %v3495
        %v3517 = vpack.c.bf16 %v3498, %v3497
        %v3518 = vpack.c.bf16 %v3500, %v3499
        %v3519 = vpack.c.bf16 %v3502, %v3501
        %v3520 = vpack.c.bf16 %v3504, %v3503
        %v3537 = vunpack.c.l.b16 %v3505
        %v3538 = vunpack.c.h.b16 %v3505
        %v3539 = vunpack.c.l.b16 %v3506
        %v3540 = vunpack.c.h.b16 %v3506
        %v3541 = vunpack.c.l.b16 %v3507
        %v3542 = vunpack.c.h.b16 %v3507
        %v3543 = vunpack.c.l.b16 %v3508
        %v3544 = vunpack.c.h.b16 %v3508
        %v3545 = vunpack.c.l.b16 %v3509
        %v3546 = vunpack.c.h.b16 %v3509
        %v3547 = vunpack.c.l.b16 %v3510
        %v3548 = vunpack.c.h.b16 %v3510
        %v3549 = vunpack.c.l.b16 %v3511
        %v3550 = vunpack.c.h.b16 %v3511
        %v3551 = vunpack.c.l.b16 %v3512
        %v3552 = vunpack.c.h.b16 %v3512
        %v3553 = vunpack.c.l.b16 %v3513
        %v3554 = vunpack.c.h.b16 %v3513
        %v3555 = vunpack.c.l.b16 %v3514
        %v3556 = vunpack.c.h.b16 %v3514
        %v3557 = vunpack.c.l.b16 %v3515
        %v3558 = vunpack.c.h.b16 %v3515
        %v3559 = vunpack.c.l.b16 %v3516
        %v3560 = vunpack.c.h.b16 %v3516
        %v3561 = vunpack.c.l.b16 %v3517
        %v3562 = vunpack.c.h.b16 %v3517
        %v3563 = vunpack.c.l.b16 %v3518
        %v3564 = vunpack.c.h.b16 %v3518
        %v3565 = vunpack.c.l.b16 %v3519
        %v3566 = vunpack.c.h.b16 %v3519
        %v3567 = vunpack.c.l.b16 %v3520
        %v3568 = vunpack.c.h.b16 %v3520
        %v3569 = vpack.c.b16 %v3537, %v3537
        %v3570 = vpack.c.b16 %v3538, %v3538
        %v3571 = vpack.c.b16 %v3539, %v3539
        %v3572 = vpack.c.b16 %v3540, %v3540
        %v3573 = vpack.c.b16 %v3541, %v3541
        %v3574 = vpack.c.b16 %v3542, %v3542
        %v3575 = vpack.c.b16 %v3543, %v3543
        %v3576 = vpack.c.b16 %v3544, %v3544
        %v3577 = vpack.c.b16 %v3545, %v3545
        %v3578 = vpack.c.b16 %v3546, %v3546
        %v3579 = vpack.c.b16 %v3547, %v3547
        %v3580 = vpack.c.b16 %v3548, %v3548
        %v3581 = vpack.c.b16 %v3549, %v3549
        %v3582 = vpack.c.b16 %v3550, %v3550
        %v3583 = vpack.c.b16 %v3551, %v3551
        %v3584 = vpack.c.b16 %v3552, %v3552
        %v3585 = vpack.c.b16 %v3553, %v3553
        %v3586 = vpack.c.b16 %v3554, %v3554
        %v3587 = vpack.c.b16 %v3555, %v3555
        %v3588 = vpack.c.b16 %v3556, %v3556
        %v3589 = vpack.c.b16 %v3557, %v3557
        %v3590 = vpack.c.b16 %v3558, %v3558
        %v3591 = vpack.c.b16 %v3559, %v3559
        %v3592 = vpack.c.b16 %v3560, %v3560
        %v3593 = vpack.c.b16 %v3561, %v3561
        %v3594 = vpack.c.b16 %v3562, %v3562
        %v3595 = vpack.c.b16 %v3563, %v3563
        %v3596 = vpack.c.b16 %v3564, %v3564
        %v3597 = vpack.c.b16 %v3565, %v3565
        %v3598 = vpack.c.b16 %v3566, %v3566
        %v3599 = vpack.c.b16 %v3567, %v3567
        %v3600 = vpack.c.b16 %v3568, %v3568
        %3633 = vst [vmem:[%s167] sm:$0xf] %v3569
        %3634 = vst [vmem:[%s167 + $0x4] sm:$0xf] %v3570
        %3635 = vst [vmem:[%s167 + $0x8] sm:$0xf] %v3571
        %3636 = vst [vmem:[%s167 + $0xc] sm:$0xf] %v3572
        %3637 = vst [vmem:[%s167 + $0x10] sm:$0xf] %v3573
        %3638 = vst [vmem:[%s167 + $0x14] sm:$0xf] %v3574
        %3639 = vst [vmem:[%s167 + $0x18] sm:$0xf] %v3575
        %3640 = vst [vmem:[%s167 + $0x1c] sm:$0xf] %v3576
        %3641 = vst [vmem:[%s167 + $0x20] sm:$0xf] %v3577
        %3642 = vst [vmem:[%s167 + $0x24] sm:$0xf] %v3578
        %3643 = vst [vmem:[%s167 + $0x28] sm:$0xf] %v3579
        %3644 = vst [vmem:[%s167 + $0x2c] sm:$0xf] %v3580
        %3645 = vst [vmem:[%s167 + $0x30] sm:$0xf] %v3581
        %3646 = vst [vmem:[%s167 + $0x34] sm:$0xf] %v3582
        %3647 = vst [vmem:[%s167 + $0x38] sm:$0xf] %v3583
        %3648 = vst [vmem:[%s167 + $0x3c] sm:$0xf] %v3584
        %3649 = vst [vmem:[%s167 + $0x40] sm:$0xf] %v3585
        %3650 = vst [vmem:[%s167 + $0x44] sm:$0xf] %v3586
        %3651 = vst [vmem:[%s167 + $0x48] sm:$0xf] %v3587
        %3652 = vst [vmem:[%s167 + $0x4c] sm:$0xf] %v3588
        %3653 = vst [vmem:[%s167 + $0x50] sm:$0xf] %v3589
        %3654 = vst [vmem:[%s167 + $0x54] sm:$0xf] %v3590
        %3655 = vst [vmem:[%s167 + $0x58] sm:$0xf] %v3591
        %3656 = vst [vmem:[%s167 + $0x5c] sm:$0xf] %v3592
        %3657 = vst [vmem:[%s167 + $0x60] sm:$0xf] %v3593
        %3658 = vst [vmem:[%s167 + $0x64] sm:$0xf] %v3594
        %3659 = vst [vmem:[%s167 + $0x68] sm:$0xf] %v3595
        %3660 = vst [vmem:[%s167 + $0x6c] sm:$0xf] %v3596
        %3661 = vst [vmem:[%s167 + $0x70] sm:$0xf] %v3597
        %3662 = vst [vmem:[%s167 + $0x74] sm:$0xf] %v3598
        %3663 = vst [vmem:[%s167 + $0x78] sm:$0xf] %v3599
        %3664 = vst [vmem:[%s167 + $0x7c] sm:$0xf] %v3600
        %v3665 = vadd.f32 %v3473, %v3474
        %v3666 = vadd.f32 %v3665, %v3475
        %v3667 = vadd.f32 %v3666, %v3476
        %v3668 = vadd.f32 %v3667, %v3477
        %v3669 = vadd.f32 %v3668, %v3478
        %v3670 = vadd.f32 %v3669, %v3479
        %v3671 = vadd.f32 %v3670, %v3480
        %v3672 = vadd.f32 %v3671, %v3481
        %v3673 = vadd.f32 %v3672, %v3482
        %v3674 = vadd.f32 %v3673, %v3483
        %v3675 = vadd.f32 %v3674, %v3484
        %v3676 = vadd.f32 %v3675, %v3485
        %v3677 = vadd.f32 %v3676, %v3486
        %v3678 = vadd.f32 %v3677, %v3487
        %v3679 = vadd.f32 %v3678, %v3488
        %v3680 = vadd.f32 %v3679, %v3489
        %v3681 = vadd.f32 %v3680, %v3490
        %v3682 = vadd.f32 %v3681, %v3491
        %v3683 = vadd.f32 %v3682, %v3492
        %v3684 = vadd.f32 %v3683, %v3493
        %v3685 = vadd.f32 %v3684, %v3494
        %v3686 = vadd.f32 %v3685, %v3495
        %v3687 = vadd.f32 %v3686, %v3496
        %v3688 = vadd.f32 %v3687, %v3497
        %v3689 = vadd.f32 %v3688, %v3498
        %v3690 = vadd.f32 %v3689, %v3499
        %v3691 = vadd.f32 %v3690, %v3500
        %v3692 = vadd.f32 %v3691, %v3501
        %v3693 = vadd.f32 %v3692, %v3502
        %v3694 = vadd.f32 %v3693, %v3503
        %v3695 = vadd.f32 %v3694, %v3504
        %v3696 = vrot.slane %v3695, 4
        %v3697 = vadd.f32 %v3695, %v3696
        %v3698 = vrot.slane %v3697, 2
        %v3699 = vadd.f32 %v3697, %v3698
        %v3700 = vrot.slane %v3699, 1
        %v3701 = vadd.f32 %v3699, %v3700
        %v3702 = vmul.f32 %v3473, %v3473
        %v3703 = vmul.f32 %v3474, %v3474
        %v3704 = vmul.f32 %v3475, %v3475
        %v3705 = vmul.f32 %v3476, %v3476
        %v3706 = vmul.f32 %v3477, %v3477
        %v3707 = vmul.f32 %v3478, %v3478
        %v3708 = vmul.f32 %v3479, %v3479
        %v3709 = vmul.f32 %v3480, %v3480
        %v3710 = vmul.f32 %v3481, %v3481
        %v3711 = vmul.f32 %v3482, %v3482
        %v3712 = vmul.f32 %v3483, %v3483
        %v3713 = vmul.f32 %v3484, %v3484
        %v3714 = vmul.f32 %v3485, %v3485
        %v3715 = vmul.f32 %v3486, %v3486
        %v3716 = vmul.f32 %v3487, %v3487
        %v3717 = vmul.f32 %v3488, %v3488
        %v3718 = vmul.f32 %v3489, %v3489
        %v3719 = vmul.f32 %v3490, %v3490
        %v3720 = vmul.f32 %v3491, %v3491
        %v3721 = vmul.f32 %v3492, %v3492
        %v3722 = vmul.f32 %v3493, %v3493
        %v3723 = vmul.f32 %v3494, %v3494
        %v3724 = vmul.f32 %v3495, %v3495
        %v3725 = vmul.f32 %v3496, %v3496
        %v3726 = vmul.f32 %v3497, %v3497
        %v3727 = vmul.f32 %v3498, %v3498
        %v3728 = vmul.f32 %v3499, %v3499
        %v3729 = vmul.f32 %v3500, %v3500
        %v3730 = vmul.f32 %v3501, %v3501
        %v3731 = vmul.f32 %v3502, %v3502
        %v3732 = vmul.f32 %v3503, %v3503
        %v3733 = vmul.f32 %v3504, %v3504
        %v3734 = vadd.f32 %v3702, %v3703
        %v3735 = vadd.f32 %v3734, %v3704
        %v3736 = vadd.f32 %v3735, %v3705
        %v3737 = vadd.f32 %v3736, %v3706
        %v3738 = vadd.f32 %v3737, %v3707
        %v3739 = vadd.f32 %v3738, %v3708
        %v3740 = vadd.f32 %v3739, %v3709
        %v3741 = vadd.f32 %v3740, %v3710
        %v3742 = vadd.f32 %v3741, %v3711
        %v3743 = vadd.f32 %v3742, %v3712
        %v3744 = vadd.f32 %v3743, %v3713
        %v3745 = vadd.f32 %v3744, %v3714
        %v3746 = vadd.f32 %v3745, %v3715
        %v3747 = vadd.f32 %v3746, %v3716
        %v3748 = vadd.f32 %v3747, %v3717
        %v3749 = vadd.f32 %v3748, %v3718
        %v3750 = vadd.f32 %v3749, %v3719
        %v3751 = vadd.f32 %v3750, %v3720
        %v3752 = vadd.f32 %v3751, %v3721
        %v3753 = vadd.f32 %v3752, %v3722
        %v3754 = vadd.f32 %v3753, %v3723
        %v3755 = vadd.f32 %v3754, %v3724
        %v3756 = vadd.f32 %v3755, %v3725
        %v3757 = vadd.f32 %v3756, %v3726
        %v3758 = vadd.f32 %v3757, %v3727
        %v3759 = vadd.f32 %v3758, %v3728
        %v3760 = vadd.f32 %v3759, %v3729
        %v3761 = vadd.f32 %v3760, %v3730
        %v3762 = vadd.f32 %v3761, %v3731
        %v3763 = vadd.f32 %v3762, %v3732
        %v3764 = vadd.f32 %v3763, %v3733
        %v3765 = vrot.slane %v3764, 4
        %v3766 = vadd.f32 %v3764, %v3765
        %v3767 = vrot.slane %v3766, 2
        %v3768 = vadd.f32 %v3766, %v3767
        %v3769 = vrot.slane %v3768, 1
        %v3770 = vadd.f32 %v3768, %v3769
        %vm3771 = vcmask 1040384
        %v3772 = vsel %vm3771, %v3701, %v3770
        %3773 = vst [vmem:[%s174] sm:$0x3] %v3772
        %s3774 = sand.u32 %s76, 1
        %s3775 = scalar_lea.sflag [#allocation4], %s3774
        %s3776 = sand.u32 %s76, 1
        %s3777 = smul.addr %s3776, 128
        %s3778 = scalar_lea.vmem [#allocation3], %s3777
        %s3779 = sand.u32 %s102, 1
        %s3780 = scalar_lea.sflag [#allocation6], %s3779
        %s3781 = sand.u32 %s102, 1
        %s3782 = smul.addr %s3781, 2
        %s3783 = scalar_lea.vmem [#allocation5], %s3782
        // Predicated region
        $region29: #{tpu_custom_call.1} parent=27 // pred_check
          %p3784 = pneg %p86
        $region30: #{tpu_custom_call.1} parent=27 // pred_check_branch
          %3786 = sbr.rel (%p3784) target = $region32
        $region31: #{tpu_custom_call.1} parent=27 // pred_region
          %s3787 = smul.u32 32, %s21
          %s3789 = ssub.s32 2048, 2048
          %3790 = vsyncadd %s3775, %s3789
          %s3791 = smul.addr %s3787, 64
          %s3792 = scalar_lea.hbm %s2, %s3791
          %s3793 = sshll.u32 %s3778, 4
          %s3794 = int_to_ptr.vmem [resolvable:$true] %s3793
          %3799 = dma.vmem_to_hbm [thread:$0]  %s3794, 2048, %s3792, %s3775, 64, 64, 4
        $region32: #{tpu_custom_call.1} parent=27 // pred_fallthru
          _
        // Predicated region
        $region33: #{tpu_custom_call.1} parent=27 // pred_check
          %p3800 = pneg %p112
        $region34: #{tpu_custom_call.1} parent=27 // pred_check_branch
          %3802 = sbr.rel (%p3800) target = $region36
        $region35: #{tpu_custom_call.1} parent=27 // pred_region
          %s3804 = ssub.s32 32, 32
          %3805 = vsyncadd %s3780, %s3804
          %s3806 = smul.addr %s21, 32
          %s3807 = scalar_lea.hbm %s3, %s3806
          %s3809 = sshll.u32 %s3783, 4
          %s3810 = int_to_ptr.vmem [resolvable:$true] %s3809
          %3812 = dma.vmem_to_hbm [thread:$0]  %s3810, 32, %s3807, %s3780
        $region36: #{tpu_custom_call.1} parent=27 // pred_fallthru
          _
      $region28: #{tpu_custom_call.1} parent=5 // pred_fallthru
        _
      %p3813 = scmp.le.s32.totalorder 2, %s16
      // Predicated region
      $region37: #{tpu_custom_call.1} parent=5 // pred_check
        %p3814 = pneg %p3813
      $region38: #{tpu_custom_call.1} parent=5 // pred_check_branch
        %3816 = sbr.rel (%p3814) target = $region40
      $region39: #{tpu_custom_call.1} parent=5 // pred_region
        %s3817 = ssub.s32 %s16, 2
        // Predicated region
        $region41: #{tpu_custom_call.1} parent=39 // pred_check
          %p3818 = pneg %p92
        $region42: #{tpu_custom_call.1} parent=39 // pred_check_branch
          %3820 = sbr.rel (%p3818) target = $region44
        $region43: #{tpu_custom_call.1} parent=39 // pred_region
          %s3821 = sand.u32 %s77, 1
          %s3822 = scalar_lea.sflag [#allocation4], %s3821
          %s3823 = sand.u32 %s77, 1
          %s3824 = smul.addr %s3823, 128
          %s3825 = scalar_lea.vmem [#allocation3], %s3824
          %3826 = dma.done %s3822, 2048
        $region44: #{tpu_custom_call.1} parent=39 // pred_fallthru
          _
        // Predicated region
        $region45: #{tpu_custom_call.1} parent=39 // pred_check
          %p3827 = pneg %p118
        $region46: #{tpu_custom_call.1} parent=39 // pred_check_branch
          %3829 = sbr.rel (%p3827) target = $region48
        $region47: #{tpu_custom_call.1} parent=39 // pred_region
          %s3830 = sand.u32 %s103, 1
          %s3831 = scalar_lea.sflag [#allocation6], %s3830
          %s3832 = sand.u32 %s103, 1
          %s3833 = smul.addr %s3832, 2
          %s3834 = scalar_lea.vmem [#allocation5], %s3833
          %3835 = dma.done %s3831, 32
        $region48: #{tpu_custom_call.1} parent=39 // pred_fallthru
          _
      $region40: #{tpu_custom_call.1} parent=5 // pred_fallthru
        _
    $region6: #{tpu_custom_call.1} parent=1 // loop_footer
      %s20 = sadd.s32 1, %s16
    $region7: #{tpu_custom_call.1} parent=1 // loop_footer_branch
      %15 = sbr.rel target = $region3
    $region8: #{tpu_custom_call.1} parent=1 // loop_exit
      _
    %3836 = vsyncpa [#allocation4], 1
    %s3837 = scalar_lea.sflag [#allocation4], 1
    %3838 = vsyncpa %s3837, 1
    %3839 = vsyncpa [#allocation6], 1
    %s3840 = scalar_lea.sflag [#allocation6], 1
    %3841 = vsyncpa %s3840, 1

</llo_original>
